<compile_context>
chip_gen: v7x
topology: tpu7x:2x2x1
jax: 0.10.0
libtpu: 0.0.40
codegen_flags: <defaults>
</compile_context>

<pallas_src>
import functools

import jax
import jax.numpy as jnp
from jax import lax
from jax.experimental import pallas as pl
from jax.experimental.pallas import tpu as pltpu

_LANE = 128


def _round_up(x, m):
    return (x + m - 1) // m * m


# ----------------------------------------------------------------------------
# Fused Pallas kernel: DownSample conv + Residual0 + Residual1 for one image.
# ----------------------------------------------------------------------------
def _down_block_kernel(xpar_ref, wd_ref, bd_ref, w0_ref, b0_ref, w1_ref, b1_ref,
                       y0_ref, y1_ref, pad_ref):
    # xpar_ref: (1, 4, OH+1, OW+1, Cpi)  parity-decomposed, zero-padded input
    # wd_ref:   (9, Cpi, Cpo)            downsample weights (k = kh*3+kw)
    # w0/w1:    (9, Cpo, Cpo)            residual conv weights
    # bd/b0/b1: (1, Cpo)                 biases (f32)
    # y0/y1:    (1, OH, OW, Cpo)         res0 output (skip0), res1 output (out/skip1)
    # pad_ref:  (OH+2, OW+2, Cpo)        VMEM scratch, zero-padded ELU activations
    _, _, ohp1, owp1, cpi = xpar_ref.shape
    OH, OW = ohp1 - 1, owp1 - 1
    cpo = y0_ref.shape[-1]
    M = OH * OW

    # Zero the scratch once per image (only its 1-pixel border needs to stay zero;
    # the interior is overwritten before every use).
    pad_ref[...] = jnp.zeros_like(pad_ref)

    # ---------------- DownSample: 3x3 / stride 2 / pad 1 conv -----------------
    # out[i,j] = sum_{kh,kw} xpad[2i+kh, 2j+kw] @ W[kh,kw]
    # xpad[2i+kh, 2j+kw] == parity-grid[(kh%2, kw%2)][i + kh//2, j + kw//2]
    acc = jnp.zeros((M, cpo), jnp.float32)
    for kh in range(3):
        for kw in range(3):
            p = (kh % 2) * 2 + (kw % 2)
            r0, c0 = kh // 2, kw // 2
            win = xpar_ref[0, p, r0:r0 + OH, c0:c0 + OW, :]          # (OH, OW, Cpi)
            acc = acc + jnp.dot(win.reshape(M, cpi), wd_ref[kh * 3 + kw],
                                preferred_element_type=jnp.float32)
    h = acc + bd_ref[...]                                            # (M, Cpo) f32

    # ---------------- Residual: x + conv3x3_pad1(ELU(x)) + b ------------------
    def residual(x_f32, w_ref, b_ref):
        # ELU once per element, in f32 (alpha = 1); min() keeps exp() finite.
        a = jnp.where(x_f32 > 0, x_f32, jnp.exp(jnp.minimum(x_f32, 0.0)) - 1.0)
        pad_ref[1:OH + 1, 1:OW + 1, :] = a.reshape(OH, OW, cpo).astype(pad_ref.dtype)
        r = jnp.zeros((M, cpo), jnp.float32)
        for kh in range(3):
            for kw in range(3):
                win = pad_ref[kh:kh + OH, kw:kw + OW, :]             # (OH, OW, Cpo)
                r = r + jnp.dot(win.reshape(M, cpo), w_ref[kh * 3 + kw],
                                preferred_element_type=jnp.float32)
        return x_f32 + r + b_ref[...]

    h0 = residual(h, w0_ref, b0_ref)                                 # skip0
    y0_ref[0] = h0.reshape(OH, OW, cpo).astype(y0_ref.dtype)
    h1 = residual(h0, w1_ref, b1_ref)                                # out / skip1
    y1_ref[0] = h1.reshape(OH, OW, cpo).astype(y1_ref.dtype)


# ----------------------------------------------------------------------------
# Parameters (deterministic synthetic init; weight-norm reparameterization)
# ----------------------------------------------------------------------------
def make_conv_params(key, c_in, c_out, cpi, cpo, w_norm):
    k1, k2 = jax.random.split(key)
    v = jax.random.normal(k1, (c_out, c_in, 3, 3), jnp.float32) * 0.1   # OIHW, like torch
    b = jax.random.normal(k2, (c_out,), jnp.float32) * 0.1
    if w_norm:
        # weight_norm (dim=0): w = g * v / ||v||, norm over (in, kh, kw) per out-channel.
        norm = jnp.sqrt(jnp.sum(v * v, axis=(1, 2, 3), keepdims=True))
        g = norm[:, 0, 0, 0]
        w = g[:, None, None, None] * v / norm
    else:
        w = v
    w_hwio = jnp.transpose(w, (2, 3, 1, 0))                             # (3,3,Cin,Cout)
    w9 = jnp.zeros((9, cpi, cpo), jnp.float32)
    w9 = w9.at[:, :c_in, :c_out].set(w_hwio.reshape(9, c_in, c_out))    # channel-padded
    b_pad = jnp.zeros((1, cpo), jnp.float32).at[0, :c_out].set(b)
    return {"w9": w9, "b": b_pad, "w_hwio": w_hwio, "b_raw": b}


def init_down_block(key, c_in, c_out, w_norm=True):
    cpi = _round_up(c_in, _LANE)
    cpo = _round_up(c_out, _LANE)
    k0, k1, k2 = jax.random.split(key, 3)
    return {
        "down": make_conv_params(k0, c_in, c_out, cpi, cpo, w_norm),
        "res0": make_conv_params(k1, c_out, c_out, cpo, cpo, w_norm),
        "res1": make_conv_params(k2, c_out, c_out, cpo, cpo, w_norm),
    }


# ----------------------------------------------------------------------------
# DownBlock forward
# ----------------------------------------------------------------------------
@functools.partial(jax.jit, static_argnames=("c_out", "compute_dtype"))
def down_block_forward(x_nchw, params, *, c_out, compute_dtype=jnp.bfloat16):
    N, c_in, H, W = x_nchw.shape
    assert H % 2 == 0 and W % 2 == 0, "even spatial dims expected for stride-2 downsample"
    OH, OW = H // 2, W // 2
    cpi = params["down"]["w9"].shape[1]
    cpo = params["down"]["w9"].shape[2]

    # --- layout plumbing in plain JAX (1x copies, no patch blow-up) -----------
    x = jnp.transpose(x_nchw, (0, 2, 3, 1))                          # NCHW -> NHWC
    xp = jnp.pad(x, ((0, 0), (1, 1), (1, 1), (0, cpi - c_in)))       # spatial+channel pad
    # Parity decomposition for the stride-2 conv: x_par[:, pr*2+pc, a, b] = xp[:, 2a+pr, 2b+pc]
    x_par = jnp.stack([xp[:, pr::2, pc::2, :] for pr in (0, 1) for pc in (0, 1)],
                      axis=1).astype(compute_dtype)                  # (N,4,OH+1,OW+1,Cpi)

    wd = params["down"]["w9"].astype(compute_dtype)
    w0 = params["res0"]["w9"].astype(compute_dtype)
    w1 = params["res1"]["w9"].astype(compute_dtype)
    bd, b0, b1 = params["down"]["b"], params["res0"]["b"], params["res1"]["b"]

    m_tot = N * OH * OW
    flops = 2 * m_tot * 9 * cpi * cpo + 2 * (2 * m_tot * 9 * cpo * cpo)
    bytes_acc = int(x_par.size) * x_par.dtype.itemsize \
        + sum(int(a.size) * a.dtype.itemsize for a in (wd, bd, w0, b0, w1, b1)) \
        + 2 * N * OH * OW * cpo * 4

    y0, y1 = pl.pallas_call(
        _down_block_kernel,
        out_shape=(jax.ShapeDtypeStruct((N, OH, OW, cpo), jnp.float32),
                   jax.ShapeDtypeStruct((N, OH, OW, cpo), jnp.float32)),
        grid=(N,),
        in_specs=[
            pl.BlockSpec((1, 4, OH + 1, OW + 1, cpi), lambda n: (n, 0, 0, 0, 0)),
            pl.BlockSpec((9, cpi, cpo), lambda n: (0, 0, 0)),
            pl.BlockSpec((1, cpo), lambda n: (0, 0)),
            pl.BlockSpec((9, cpo, cpo), lambda n: (0, 0, 0)),
            pl.BlockSpec((1, cpo), lambda n: (0, 0)),
            pl.BlockSpec((9, cpo, cpo), lambda n: (0, 0, 0)),
            pl.BlockSpec((1, cpo), lambda n: (0, 0)),
        ],
        out_specs=(
            pl.BlockSpec((1, OH, OW, cpo), lambda n: (n, 0, 0, 0)),
            pl.BlockSpec((1, OH, OW, cpo), lambda n: (n, 0, 0, 0)),
        ),
        scratch_shapes=[pltpu.VMEM((OH + 2, OW + 2, cpo), compute_dtype)],
        compiler_params=pltpu.CompilerParams(dimension_semantics=("parallel",)),
        cost_estimate=pl.CostEstimate(flops=flops, transcendentals=2 * m_tot * cpo,
                                      bytes_accessed=bytes_acc),
    )(x_par, wd, bd, w0, b0, w1, b1)

    def to_nchw(y):
        return jnp.transpose(y[..., :c_out], (0, 3, 1, 2))

    out = to_nchw(y1)
    return out, [to_nchw(y0), out]


# ----------------------------------------------------------------------------
# Pure-JAX reference (lax.conv) for correctness check
# ----------------------------------------------------------------------------
def ref_forward(x_nchw, params):
    x = jnp.transpose(x_nchw, (0, 2, 3, 1))

    def conv(z, prm, stride):
        y = lax.conv_general_dilated(
            z, prm["w_hwio"], (stride, stride), ((1, 1), (1, 1)),
            dimension_numbers=("NHWC", "HWIO", "NHWC"),
            precision=lax.Precision.HIGHEST)
        return y + prm["b_raw"]

    h = conv(x, params["down"], 2)
    h = h + conv(jax.nn.elu(h), params["res0"], 1)
    s0 = h
    h = h + conv(jax.nn.elu(h), params["res1"], 1)

    def to_nchw(f):
        return jnp.transpose(f, (0, 3, 1, 2))

    return to_nchw(h), [to_nchw(s0), to_nchw(h)]


# ----------------------------------------------------------------------------
if __name__ == "__main__":
    key = jax.random.PRNGKey(0)
    k_x, k_p = jax.random.split(key)

    N, C_IN, C_OUT, H, W = 2, 4, 8, 16, 16
    x = jax.random.normal(k_x, (N, C_IN, H, W), jnp.float32)          # NCHW, like PyTorch
    params = init_down_block(k_p, C_IN, C_OUT, w_norm=True)

    ref_out, ref_skips = ref_forward(x, params)

    # 1) f32 compute path: strict check of the fused-kernel structure.
    out32, skips32 = down_block_forward(x, params, c_out=C_OUT, compute_dtype=jnp.float32)
    out32 = jax.block_until_ready(out32)
    assert out32.shape == (N, C_OUT, H // 2, W // 2), out32.shape
    assert skips32[0].shape == out32.shape and skips32[1].shape == out32.shape
    assert jnp.allclose(out32, ref_out, atol=1e-4, rtol=1e-4)
    assert jnp.allclose(skips32[0], ref_skips[0], atol=1e-4, rtol=1e-4)
    assert jnp.allclose(skips32[1], ref_skips[1], atol=1e-4, rtol=1e-4)

    # 2) bf16 MXU-operand path (production default on v6e/v7x): looser tolerance.
    out, skips = down_block_forward(x, params, c_out=C_OUT, compute_dtype=jnp.bfloat16)
    out = jax.block_until_ready(out)
    skips = [jax.block_until_ready(s) for s in skips]
    assert out.shape == (N, C_OUT, H // 2, W // 2), out.shape
    assert jnp.allclose(out, ref_out, atol=1e-1, rtol=5e-2)
    assert jnp.allclose(skips[0], ref_skips[0], atol=1e-1, rtol=5e-2)
    assert jnp.allclose(skips[1], ref_skips[1], atol=1e-1, rtol=5e-2)

    print("KERNEL_OK")
</pallas_src>

<mosaic_0001>
module attributes {stable_mosaic.version = 11 : i64} {
  func.func @_down_block_kernel(%arg0: i32, %arg1: memref<1x4x9x9x128xf32, #tpu.memory_space<vmem>>, %arg2: memref<9x128x128xf32, #tpu.memory_space<vmem>>, %arg3: memref<1x128xf32, #tpu.memory_space<vmem>>, %arg4: memref<9x128x128xf32, #tpu.memory_space<vmem>>, %arg5: memref<1x128xf32, #tpu.memory_space<vmem>>, %arg6: memref<9x128x128xf32, #tpu.memory_space<vmem>>, %arg7: memref<1x128xf32, #tpu.memory_space<vmem>>, %arg8: memref<1x8x8x128xf32, #tpu.memory_space<vmem>>, %arg9: memref<1x8x8x128xf32, #tpu.memory_space<vmem>>, %arg10: memref<10x10x128xf32, #tpu.memory_space<vmem>>) attributes {dimension_semantics = [#tpu.dimension_semantics<parallel>], iteration_bounds = array<i64: 2>, scalar_prefetch = 0 : i64, scratch_operands = 1 : i64, tpu.core_type = #tpu.core_type<tc>, window_params = [{transform_indices = @transform_0, window_bounds = array<i64: 1, 4, 9, 9, 128>}, {pipeline_mode = #tpu.pipeline_mode<synchronous>, transform_indices = @transform_1, window_bounds = array<i64: 9, 128, 128>}, {pipeline_mode = #tpu.pipeline_mode<synchronous>, transform_indices = @transform_2, window_bounds = array<i64: 1, 128>}, {pipeline_mode = #tpu.pipeline_mode<synchronous>, transform_indices = @transform_3, window_bounds = array<i64: 9, 128, 128>}, {pipeline_mode = #tpu.pipeline_mode<synchronous>, transform_indices = @transform_4, window_bounds = array<i64: 1, 128>}, {pipeline_mode = #tpu.pipeline_mode<synchronous>, transform_indices = @transform_5, window_bounds = array<i64: 9, 128, 128>}, {pipeline_mode = #tpu.pipeline_mode<synchronous>, transform_indices = @transform_6, window_bounds = array<i64: 1, 128>}, {transform_indices = @transform_7, window_bounds = array<i64: 1, 8, 8, 128>}, {transform_indices = @transform_8, window_bounds = array<i64: 1, 8, 8, 128>}]} {
    %cst = arith.constant 0.000000e+00 : f32
    %0 = vector.broadcast %cst : f32 to vector<10x10x128xf32>
    %c0 = arith.constant 0 : index
    %c0_0 = arith.constant 0 : index
    %c0_1 = arith.constant 0 : index
    %1 = vector.load %arg10[%c0, %c0_0, %c0_1] : memref<10x10x128xf32, #tpu.memory_space<vmem>>, vector<10x10x128xf32>
    tpu.vector_store %arg10[%c0, %c0_0, %c0_1], %0 {strides = array<i32>} : memref<10x10x128xf32, #tpu.memory_space<vmem>>, vector<10x10x128xf32>,
    %cst_2 = arith.constant 0.000000e+00 : f32
    %2 = vector.broadcast %cst_2 : f32 to vector<64x128xf32>
    %c0_3 = arith.constant 0 : index
    %c0_4 = arith.constant 0 : index
    %c0_5 = arith.constant 0 : index
    %c0_6 = arith.constant 0 : index
    %c0_7 = arith.constant 0 : index
    %3 = vector.load %arg1[%c0_3, %c0_4, %c0_5, %c0_6, %c0_7] : memref<1x4x9x9x128xf32, #tpu.memory_space<vmem>>, vector<1x1x8x8x128xf32>
    %4 = vector.shape_cast %3 : vector<1x1x8x8x128xf32> to vector<8x8x128xf32>
    %5 = vector.shape_cast %4 : vector<8x8x128xf32> to vector<64x128xf32>
    %c0_8 = arith.constant 0 : index
    %c0_9 = arith.constant 0 : index
    %c0_10 = arith.constant 0 : index
    %6 = vector.load %arg2[%c0_8, %c0_9, %c0_10] : memref<9x128x128xf32, #tpu.memory_space<vmem>>, vector<1x128x128xf32>
    %7 = vector.shape_cast %6 : vector<1x128x128xf32> to vector<128x128xf32>
    %cst_11 = arith.constant dense<0.000000e+00> : vector<64x128xf32>
    %8 = tpu.matmul %5, %7, %cst_11 {dimension_numbers = #tpu.dot_dimension_numbers<[1], [0], [0], [1], [0, 0, 1, 1], [], []>} : vector<64x128xf32>, vector<128x128xf32>, vector<64x128xf32> -> vector<64x128xf32>
    %9 = arith.addf %2, %8 : vector<64x128xf32>
    %c0_12 = arith.constant 0 : index
    %c1 = arith.constant 1 : index
    %c0_13 = arith.constant 0 : index
    %c0_14 = arith.constant 0 : index
    %c0_15 = arith.constant 0 : index
    %10 = vector.load %arg1[%c0_12, %c1, %c0_13, %c0_14, %c0_15] : memref<1x4x9x9x128xf32, #tpu.memory_space<vmem>>, vector<1x1x8x8x128xf32>
    %11 = vector.shape_cast %10 : vector<1x1x8x8x128xf32> to vector<8x8x128xf32>
    %12 = vector.shape_cast %11 : vector<8x8x128xf32> to vector<64x128xf32>
    %c1_16 = arith.constant 1 : index
    %c0_17 = arith.constant 0 : index
    %c0_18 = arith.constant 0 : index
    %13 = vector.load %arg2[%c1_16, %c0_17, %c0_18] : memref<9x128x128xf32, #tpu.memory_space<vmem>>, vector<1x128x128xf32>
    %14 = vector.shape_cast %13 : vector<1x128x128xf32> to vector<128x128xf32>
    %cst_19 = arith.constant dense<0.000000e+00> : vector<64x128xf32>
    %15 = tpu.matmul %12, %14, %cst_19 {dimension_numbers = #tpu.dot_dimension_numbers<[1], [0], [0], [1], [0, 0, 1, 1], [], []>} : vector<64x128xf32>, vector<128x128xf32>, vector<64x128xf32> -> vector<64x128xf32>
    %16 = arith.addf %9, %15 : vector<64x128xf32>
    %c0_20 = arith.constant 0 : index
    %c0_21 = arith.constant 0 : index
    %c0_22 = arith.constant 0 : index
    %c1_23 = arith.constant 1 : index
    %c0_24 = arith.constant 0 : index
    %17 = vector.load %arg1[%c0_20, %c0_21, %c0_22, %c1_23, %c0_24] : memref<1x4x9x9x128xf32, #tpu.memory_space<vmem>>, vector<1x1x8x8x128xf32>
    %18 = vector.shape_cast %17 : vector<1x1x8x8x128xf32> to vector<8x8x128xf32>
    %19 = vector.shape_cast %18 : vector<8x8x128xf32> to vector<64x128xf32>
    %c2 = arith.constant 2 : index
    %c0_25 = arith.constant 0 : index
    %c0_26 = arith.constant 0 : index
    %20 = vector.load %arg2[%c2, %c0_25, %c0_26] : memref<9x128x128xf32, #tpu.memory_space<vmem>>, vector<1x128x128xf32>
    %21 = vector.shape_cast %20 : vector<1x128x128xf32> to vector<128x128xf32>
    %cst_27 = arith.constant dense<0.000000e+00> : vector<64x128xf32>
    %22 = tpu.matmul %19, %21, %cst_27 {dimension_numbers = #tpu.dot_dimension_numbers<[1], [0], [0], [1], [0, 0, 1, 1], [], []>} : vector<64x128xf32>, vector<128x128xf32>, vector<64x128xf32> -> vector<64x128xf32>
    %23 = arith.addf %16, %22 : vector<64x128xf32>
    %c0_28 = arith.constant 0 : index
    %c2_29 = arith.constant 2 : index
    %c0_30 = arith.constant 0 : index
    %c0_31 = arith.constant 0 : index
    %c0_32 = arith.constant 0 : index
    %24 = vector.load %arg1[%c0_28, %c2_29, %c0_30, %c0_31, %c0_32] : memref<1x4x9x9x128xf32, #tpu.memory_space<vmem>>, vector<1x1x8x8x128xf32>
    %25 = vector.shape_cast %24 : vector<1x1x8x8x128xf32> to vector<8x8x128xf32>
    %26 = vector.shape_cast %25 : vector<8x8x128xf32> to vector<64x128xf32>
    %c3 = arith.constant 3 : index
    %c0_33 = arith.constant 0 : index
    %c0_34 = arith.constant 0 : index
    %27 = vector.load %arg2[%c3, %c0_33, %c0_34] : memref<9x128x128xf32, #tpu.memory_space<vmem>>, vector<1x128x128xf32>
    %28 = vector.shape_cast %27 : vector<1x128x128xf32> to vector<128x128xf32>
    %cst_35 = arith.constant dense<0.000000e+00> : vector<64x128xf32>
    %29 = tpu.matmul %26, %28, %cst_35 {dimension_numbers = #tpu.dot_dimension_numbers<[1], [0], [0], [1], [0, 0, 1, 1], [], []>} : vector<64x128xf32>, vector<128x128xf32>, vector<64x128xf32> -> vector<64x128xf32>
    %30 = arith.addf %23, %29 : vector<64x128xf32>
    %c0_36 = arith.constant 0 : index
    %c3_37 = arith.constant 3 : index
    %c0_38 = arith.constant 0 : index
    %c0_39 = arith.constant 0 : index
    %c0_40 = arith.constant 0 : index
    %31 = vector.load %arg1[%c0_36, %c3_37, %c0_38, %c0_39, %c0_40] : memref<1x4x9x9x128xf32, #tpu.memory_space<vmem>>, vector<1x1x8x8x128xf32>
    %32 = vector.shape_cast %31 : vector<1x1x8x8x128xf32> to vector<8x8x128xf32>
    %33 = vector.shape_cast %32 : vector<8x8x128xf32> to vector<64x128xf32>
    %c4 = arith.constant 4 : index
    %c0_41 = arith.constant 0 : index
    %c0_42 = arith.constant 0 : index
    %34 = vector.load %arg2[%c4, %c0_41, %c0_42] : memref<9x128x128xf32, #tpu.memory_space<vmem>>, vector<1x128x128xf32>
    %35 = vector.shape_cast %34 : vector<1x128x128xf32> to vector<128x128xf32>
    %cst_43 = arith.constant dense<0.000000e+00> : vector<64x128xf32>
    %36 = tpu.matmul %33, %35, %cst_43 {dimension_numbers = #tpu.dot_dimension_numbers<[1], [0], [0], [1], [0, 0, 1, 1], [], []>} : vector<64x128xf32>, vector<128x128xf32>, vector<64x128xf32> -> vector<64x128xf32>
    %37 = arith.addf %30, %36 : vector<64x128xf32>
    %c0_44 = arith.constant 0 : index
    %c2_45 = arith.constant 2 : index
    %c0_46 = arith.constant 0 : index
    %c1_47 = arith.constant 1 : index
    %c0_48 = arith.constant 0 : index
    %38 = vector.load %arg1[%c0_44, %c2_45, %c0_46, %c1_47, %c0_48] : memref<1x4x9x9x128xf32, #tpu.memory_space<vmem>>, vector<1x1x8x8x128xf32>
    %39 = vector.shape_cast %38 : vector<1x1x8x8x128xf32> to vector<8x8x128xf32>
    %40 = vector.shape_cast %39 : vector<8x8x128xf32> to vector<64x128xf32>
    %c5 = arith.constant 5 : index
    %c0_49 = arith.constant 0 : index
    %c0_50 = arith.constant 0 : index
    %41 = vector.load %arg2[%c5, %c0_49, %c0_50] : memref<9x128x128xf32, #tpu.memory_space<vmem>>, vector<1x128x128xf32>
    %42 = vector.shape_cast %41 : vector<1x128x128xf32> to vector<128x128xf32>
    %cst_51 = arith.constant dense<0.000000e+00> : vector<64x128xf32>
    %43 = tpu.matmul %40, %42, %cst_51 {dimension_numbers = #tpu.dot_dimension_numbers<[1], [0], [0], [1], [0, 0, 1, 1], [], []>} : vector<64x128xf32>, vector<128x128xf32>, vector<64x128xf32> -> vector<64x128xf32>
    %44 = arith.addf %37, %43 : vector<64x128xf32>
    %c0_52 = arith.constant 0 : index
    %c0_53 = arith.constant 0 : index
    %c1_54 = arith.constant 1 : index
    %c0_55 = arith.constant 0 : index
    %c0_56 = arith.constant 0 : index
    %45 = vector.load %arg1[%c0_52, %c0_53, %c1_54, %c0_55, %c0_56] : memref<1x4x9x9x128xf32, #tpu.memory_space<vmem>>, vector<1x1x8x8x128xf32>
    %46 = vector.shape_cast %45 : vector<1x1x8x8x128xf32> to vector<8x8x128xf32>
    %47 = vector.shape_cast %46 : vector<8x8x128xf32> to vector<64x128xf32>
    %c6 = arith.constant 6 : index
    %c0_57 = arith.constant 0 : index
    %c0_58 = arith.constant 0 : index
    %48 = vector.load %arg2[%c6, %c0_57, %c0_58] : memref<9x128x128xf32, #tpu.memory_space<vmem>>, vector<1x128x128xf32>
    %49 = vector.shape_cast %48 : vector<1x128x128xf32> to vector<128x128xf32>
    %cst_59 = arith.constant dense<0.000000e+00> : vector<64x128xf32>
    %50 = tpu.matmul %47, %49, %cst_59 {dimension_numbers = #tpu.dot_dimension_numbers<[1], [0], [0], [1], [0, 0, 1, 1], [], []>} : vector<64x128xf32>, vector<128x128xf32>, vector<64x128xf32> -> vector<64x128xf32>
    %51 = arith.addf %44, %50 : vector<64x128xf32>
    %c0_60 = arith.constant 0 : index
    %c1_61 = arith.constant 1 : index
    %c1_62 = arith.constant 1 : index
    %c0_63 = arith.constant 0 : index
    %c0_64 = arith.constant 0 : index
    %52 = vector.load %arg1[%c0_60, %c1_61, %c1_62, %c0_63, %c0_64] : memref<1x4x9x9x128xf32, #tpu.memory_space<vmem>>, vector<1x1x8x8x128xf32>
    %53 = vector.shape_cast %52 : vector<1x1x8x8x128xf32> to vector<8x8x128xf32>
    %54 = vector.shape_cast %53 : vector<8x8x128xf32> to vector<64x128xf32>
    %c7 = arith.constant 7 : index
    %c0_65 = arith.constant 0 : index
    %c0_66 = arith.constant 0 : index
    %55 = vector.load %arg2[%c7, %c0_65, %c0_66] : memref<9x128x128xf32, #tpu.memory_space<vmem>>, vector<1x128x128xf32>
    %56 = vector.shape_cast %55 : vector<1x128x128xf32> to vector<128x128xf32>
    %cst_67 = arith.constant dense<0.000000e+00> : vector<64x128xf32>
    %57 = tpu.matmul %54, %56, %cst_67 {dimension_numbers = #tpu.dot_dimension_numbers<[1], [0], [0], [1], [0, 0, 1, 1], [], []>} : vector<64x128xf32>, vector<128x128xf32>, vector<64x128xf32> -> vector<64x128xf32>
    %58 = arith.addf %51, %57 : vector<64x128xf32>
    %c0_68 = arith.constant 0 : index
    %c0_69 = arith.constant 0 : index
    %c1_70 = arith.constant 1 : index
    %c1_71 = arith.constant 1 : index
    %c0_72 = arith.constant 0 : index
    %59 = vector.load %arg1[%c0_68, %c0_69, %c1_70, %c1_71, %c0_72] : memref<1x4x9x9x128xf32, #tpu.memory_space<vmem>>, vector<1x1x8x8x128xf32>
    %60 = vector.shape_cast %59 : vector<1x1x8x8x128xf32> to vector<8x8x128xf32>
    %61 = vector.shape_cast %60 : vector<8x8x128xf32> to vector<64x128xf32>
    %c8 = arith.constant 8 : index
    %c0_73 = arith.constant 0 : index
    %c0_74 = arith.constant 0 : index
    %62 = vector.load %arg2[%c8, %c0_73, %c0_74] : memref<9x128x128xf32, #tpu.memory_space<vmem>>, vector<1x128x128xf32>
    %63 = vector.shape_cast %62 : vector<1x128x128xf32> to vector<128x128xf32>
    %cst_75 = arith.constant dense<0.000000e+00> : vector<64x128xf32>
    %64 = tpu.matmul %61, %63, %cst_75 {dimension_numbers = #tpu.dot_dimension_numbers<[1], [0], [0], [1], [0, 0, 1, 1], [], []>} : vector<64x128xf32>, vector<128x128xf32>, vector<64x128xf32> -> vector<64x128xf32>
    %65 = arith.addf %58, %64 : vector<64x128xf32>
    %c0_76 = arith.constant 0 : index
    %c0_77 = arith.constant 0 : index
    %66 = vector.load %arg3[%c0_76, %c0_77] : memref<1x128xf32, #tpu.memory_space<vmem>>, vector<1x128xf32>
    %67 = vector.broadcast %66 : vector<1x128xf32> to vector<64x128xf32>
    %68 = arith.addf %65, %67 : vector<64x128xf32>
    %cst_78 = arith.constant 0.000000e+00 : f32
    %69 = vector.broadcast %cst_78 : f32 to vector<64x128xf32>
    %70 = arith.cmpf ogt, %68, %69 : vector<64x128xf32>
    %cst_79 = arith.constant 0.000000e+00 : f32
    %71 = vector.broadcast %cst_79 : f32 to vector<64x128xf32>
    %72 = arith.minimumf %68, %71 : vector<64x128xf32>
    %73 = math.exp %72 : vector<64x128xf32>
    %cst_80 = arith.constant 1.000000e+00 : f32
    %74 = vector.broadcast %cst_80 : f32 to vector<64x128xf32>
    %75 = arith.subf %73, %74 : vector<64x128xf32>
    %76 = arith.select %70, %68, %75 : vector<64x128xi1>, vector<64x128xf32>
    %77 = vector.shape_cast %76 : vector<64x128xf32> to vector<8x8x128xf32>
    %c1_81 = arith.constant 1 : index
    %c1_82 = arith.constant 1 : index
    %c0_83 = arith.constant 0 : index
    %78 = vector.load %arg10[%c1_81, %c1_82, %c0_83] : memref<10x10x128xf32, #tpu.memory_space<vmem>>, vector<8x8x128xf32>
    tpu.vector_store %arg10[%c1_81, %c1_82, %c0_83], %77 {strides = array<i32>} : memref<10x10x128xf32, #tpu.memory_space<vmem>>, vector<8x8x128xf32>,
    %cst_84 = arith.constant 0.000000e+00 : f32
    %79 = vector.broadcast %cst_84 : f32 to vector<64x128xf32>
    %c0_85 = arith.constant 0 : index
    %c0_86 = arith.constant 0 : index
    %c0_87 = arith.constant 0 : index
    %80 = vector.load %arg10[%c0_85, %c0_86, %c0_87] : memref<10x10x128xf32, #tpu.memory_space<vmem>>, vector<8x8x128xf32>
    %81 = vector.shape_cast %80 : vector<8x8x128xf32> to vector<64x128xf32>
    %c0_88 = arith.constant 0 : index
    %c0_89 = arith.constant 0 : index
    %c0_90 = arith.constant 0 : index
    %82 = vector.load %arg4[%c0_88, %c0_89, %c0_90] : memref<9x128x128xf32, #tpu.memory_space<vmem>>, vector<1x128x128xf32>
    %83 = vector.shape_cast %82 : vector<1x128x128xf32> to vector<128x128xf32>
    %cst_91 = arith.constant dense<0.000000e+00> : vector<64x128xf32>
    %84 = tpu.matmul %81, %83, %cst_91 {dimension_numbers = #tpu.dot_dimension_numbers<[1], [0], [0], [1], [0, 0, 1, 1], [], []>} : vector<64x128xf32>, vector<128x128xf32>, vector<64x128xf32> -> vector<64x128xf32>
    %85 = arith.addf %79, %84 : vector<64x128xf32>
    %c0_92 = arith.constant 0 : index
    %c1_93 = arith.constant 1 : index
    %c0_94 = arith.constant 0 : index
    %86 = vector.load %arg10[%c0_92, %c1_93, %c0_94] : memref<10x10x128xf32, #tpu.memory_space<vmem>>, vector<8x8x128xf32>
    %87 = vector.shape_cast %86 : vector<8x8x128xf32> to vector<64x128xf32>
    %c1_95 = arith.constant 1 : index
    %c0_96 = arith.constant 0 : index
    %c0_97 = arith.constant 0 : index
    %88 = vector.load %arg4[%c1_95, %c0_96, %c0_97] : memref<9x128x128xf32, #tpu.memory_space<vmem>>, vector<1x128x128xf32>
    %89 = vector.shape_cast %88 : vector<1x128x128xf32> to vector<128x128xf32>
    %cst_98 = arith.constant dense<0.000000e+00> : vector<64x128xf32>
    %90 = tpu.matmul %87, %89, %cst_98 {dimension_numbers = #tpu.dot_dimension_numbers<[1], [0], [0], [1], [0, 0, 1, 1], [], []>} : vector<64x128xf32>, vector<128x128xf32>, vector<64x128xf32> -> vector<64x128xf32>
    %91 = arith.addf %85, %90 : vector<64x128xf32>
    %c0_99 = arith.constant 0 : index
    %c2_100 = arith.constant 2 : index
    %c0_101 = arith.constant 0 : index
    %92 = vector.load %arg10[%c0_99, %c2_100, %c0_101] : memref<10x10x128xf32, #tpu.memory_space<vmem>>, vector<8x8x128xf32>
    %93 = vector.shape_cast %92 : vector<8x8x128xf32> to vector<64x128xf32>
    %c2_102 = arith.constant 2 : index
    %c0_103 = arith.constant 0 : index
    %c0_104 = arith.constant 0 : index
    %94 = vector.load %arg4[%c2_102, %c0_103, %c0_104] : memref<9x128x128xf32, #tpu.memory_space<vmem>>, vector<1x128x128xf32>
    %95 = vector.shape_cast %94 : vector<1x128x128xf32> to vector<128x128xf32>
    %cst_105 = arith.constant dense<0.000000e+00> : vector<64x128xf32>
    %96 = tpu.matmul %93, %95, %cst_105 {dimension_numbers = #tpu.dot_dimension_numbers<[1], [0], [0], [1], [0, 0, 1, 1], [], []>} : vector<64x128xf32>, vector<128x128xf32>, vector<64x128xf32> -> vector<64x128xf32>
    %97 = arith.addf %91, %96 : vector<64x128xf32>
    %c1_106 = arith.constant 1 : index
    %c0_107 = arith.constant 0 : index
    %c0_108 = arith.constant 0 : index
    %98 = vector.load %arg10[%c1_106, %c0_107, %c0_108] : memref<10x10x128xf32, #tpu.memory_space<vmem>>, vector<8x8x128xf32>
    %99 = vector.shape_cast %98 : vector<8x8x128xf32> to vector<64x128xf32>
    %c3_109 = arith.constant 3 : index
    %c0_110 = arith.constant 0 : index
    %c0_111 = arith.constant 0 : index
    %100 = vector.load %arg4[%c3_109, %c0_110, %c0_111] : memref<9x128x128xf32, #tpu.memory_space<vmem>>, vector<1x128x128xf32>
    %101 = vector.shape_cast %100 : vector<1x128x128xf32> to vector<128x128xf32>
    %cst_112 = arith.constant dense<0.000000e+00> : vector<64x128xf32>
    %102 = tpu.matmul %99, %101, %cst_112 {dimension_numbers = #tpu.dot_dimension_numbers<[1], [0], [0], [1], [0, 0, 1, 1], [], []>} : vector<64x128xf32>, vector<128x128xf32>, vector<64x128xf32> -> vector<64x128xf32>
    %103 = arith.addf %97, %102 : vector<64x128xf32>
    %c1_113 = arith.constant 1 : index
    %c1_114 = arith.constant 1 : index
    %c0_115 = arith.constant 0 : index
    %104 = vector.load %arg10[%c1_113, %c1_114, %c0_115] : memref<10x10x128xf32, #tpu.memory_space<vmem>>, vector<8x8x128xf32>
    %105 = vector.shape_cast %104 : vector<8x8x128xf32> to vector<64x128xf32>
    %c4_116 = arith.constant 4 : index
    %c0_117 = arith.constant 0 : index
    %c0_118 = arith.constant 0 : index
    %106 = vector.load %arg4[%c4_116, %c0_117, %c0_118] : memref<9x128x128xf32, #tpu.memory_space<vmem>>, vector<1x128x128xf32>
    %107 = vector.shape_cast %106 : vector<1x128x128xf32> to vector<128x128xf32>
    %cst_119 = arith.constant dense<0.000000e+00> : vector<64x128xf32>
    %108 = tpu.matmul %105, %107, %cst_119 {dimension_numbers = #tpu.dot_dimension_numbers<[1], [0], [0], [1], [0, 0, 1, 1], [], []>} : vector<64x128xf32>, vector<128x128xf32>, vector<64x128xf32> -> vector<64x128xf32>
    %109 = arith.addf %103, %108 : vector<64x128xf32>
    %c1_120 = arith.constant 1 : index
    %c2_121 = arith.constant 2 : index
    %c0_122 = arith.constant 0 : index
    %110 = vector.load %arg10[%c1_120, %c2_121, %c0_122] : memref<10x10x128xf32, #tpu.memory_space<vmem>>, vector<8x8x128xf32>
    %111 = vector.shape_cast %110 : vector<8x8x128xf32> to vector<64x128xf32>
    %c5_123 = arith.constant 5 : index
    %c0_124 = arith.constant 0 : index
    %c0_125 = arith.constant 0 : index
    %112 = vector.load %arg4[%c5_123, %c0_124, %c0_125] : memref<9x128x128xf32, #tpu.memory_space<vmem>>, vector<1x128x128xf32>
    %113 = vector.shape_cast %112 : vector<1x128x128xf32> to vector<128x128xf32>
    %cst_126 = arith.constant dense<0.000000e+00> : vector<64x128xf32>
    %114 = tpu.matmul %111, %113, %cst_126 {dimension_numbers = #tpu.dot_dimension_numbers<[1], [0], [0], [1], [0, 0, 1, 1], [], []>} : vector<64x128xf32>, vector<128x128xf32>, vector<64x128xf32> -> vector<64x128xf32>
    %115 = arith.addf %109, %114 : vector<64x128xf32>
    %c2_127 = arith.constant 2 : index
    %c0_128 = arith.constant 0 : index
    %c0_129 = arith.constant 0 : index
    %116 = vector.load %arg10[%c2_127, %c0_128, %c0_129] : memref<10x10x128xf32, #tpu.memory_space<vmem>>, vector<8x8x128xf32>
    %117 = vector.shape_cast %116 : vector<8x8x128xf32> to vector<64x128xf32>
    %c6_130 = arith.constant 6 : index
    %c0_131 = arith.constant 0 : index
    %c0_132 = arith.constant 0 : index
    %118 = vector.load %arg4[%c6_130, %c0_131, %c0_132] : memref<9x128x128xf32, #tpu.memory_space<vmem>>, vector<1x128x128xf32>
    %119 = vector.shape_cast %118 : vector<1x128x128xf32> to vector<128x128xf32>
    %cst_133 = arith.constant dense<0.000000e+00> : vector<64x128xf32>
    %120 = tpu.matmul %117, %119, %cst_133 {dimension_numbers = #tpu.dot_dimension_numbers<[1], [0], [0], [1], [0, 0, 1, 1], [], []>} : vector<64x128xf32>, vector<128x128xf32>, vector<64x128xf32> -> vector<64x128xf32>
    %121 = arith.addf %115, %120 : vector<64x128xf32>
    %c2_134 = arith.constant 2 : index
    %c1_135 = arith.constant 1 : index
    %c0_136 = arith.constant 0 : index
    %122 = vector.load %arg10[%c2_134, %c1_135, %c0_136] : memref<10x10x128xf32, #tpu.memory_space<vmem>>, vector<8x8x128xf32>
    %123 = vector.shape_cast %122 : vector<8x8x128xf32> to vector<64x128xf32>
    %c7_137 = arith.constant 7 : index
    %c0_138 = arith.constant 0 : index
    %c0_139 = arith.constant 0 : index
    %124 = vector.load %arg4[%c7_137, %c0_138, %c0_139] : memref<9x128x128xf32, #tpu.memory_space<vmem>>, vector<1x128x128xf32>
    %125 = vector.shape_cast %124 : vector<1x128x128xf32> to vector<128x128xf32>
    %cst_140 = arith.constant dense<0.000000e+00> : vector<64x128xf32>
    %126 = tpu.matmul %123, %125, %cst_140 {dimension_numbers = #tpu.dot_dimension_numbers<[1], [0], [0], [1], [0, 0, 1, 1], [], []>} : vector<64x128xf32>, vector<128x128xf32>, vector<64x128xf32> -> vector<64x128xf32>
    %127 = arith.addf %121, %126 : vector<64x128xf32>
    %c2_141 = arith.constant 2 : index
    %c2_142 = arith.constant 2 : index
    %c0_143 = arith.constant 0 : index
    %128 = vector.load %arg10[%c2_141, %c2_142, %c0_143] : memref<10x10x128xf32, #tpu.memory_space<vmem>>, vector<8x8x128xf32>
    %129 = vector.shape_cast %128 : vector<8x8x128xf32> to vector<64x128xf32>
    %c8_144 = arith.constant 8 : index
    %c0_145 = arith.constant 0 : index
    %c0_146 = arith.constant 0 : index
    %130 = vector.load %arg4[%c8_144, %c0_145, %c0_146] : memref<9x128x128xf32, #tpu.memory_space<vmem>>, vector<1x128x128xf32>
    %131 = vector.shape_cast %130 : vector<1x128x128xf32> to vector<128x128xf32>
    %cst_147 = arith.constant dense<0.000000e+00> : vector<64x128xf32>
    %132 = tpu.matmul %129, %131, %cst_147 {dimension_numbers = #tpu.dot_dimension_numbers<[1], [0], [0], [1], [0, 0, 1, 1], [], []>} : vector<64x128xf32>, vector<128x128xf32>, vector<64x128xf32> -> vector<64x128xf32>
    %133 = arith.addf %127, %132 : vector<64x128xf32>
    %134 = arith.addf %68, %133 : vector<64x128xf32>
    %c0_148 = arith.constant 0 : index
    %c0_149 = arith.constant 0 : index
    %135 = vector.load %arg5[%c0_148, %c0_149] : memref<1x128xf32, #tpu.memory_space<vmem>>, vector<1x128xf32>
    %136 = vector.broadcast %135 : vector<1x128xf32> to vector<64x128xf32>
    %137 = arith.addf %134, %136 : vector<64x128xf32>
    %138 = vector.shape_cast %137 : vector<64x128xf32> to vector<8x8x128xf32>
    %c0_150 = arith.constant 0 : index
    %c0_151 = arith.constant 0 : index
    %c0_152 = arith.constant 0 : index
    %c0_153 = arith.constant 0 : index
    %139 = vector.load %arg8[%c0_150, %c0_151, %c0_152, %c0_153] : memref<1x8x8x128xf32, #tpu.memory_space<vmem>>, vector<1x8x8x128xf32>
    %140 = vector.shape_cast %139 : vector<1x8x8x128xf32> to vector<8x8x128xf32>
    %141 = vector.shape_cast %138 : vector<8x8x128xf32> to vector<1x8x8x128xf32>
    tpu.vector_store %arg8[%c0_150, %c0_151, %c0_152, %c0_153], %141 {strides = array<i32>} : memref<1x8x8x128xf32, #tpu.memory_space<vmem>>, vector<1x8x8x128xf32>,
    %cst_154 = arith.constant 0.000000e+00 : f32
    %142 = vector.broadcast %cst_154 : f32 to vector<64x128xf32>
    %143 = arith.cmpf ogt, %137, %142 : vector<64x128xf32>
    %cst_155 = arith.constant 0.000000e+00 : f32
    %144 = vector.broadcast %cst_155 : f32 to vector<64x128xf32>
    %145 = arith.minimumf %137, %144 : vector<64x128xf32>
    %146 = math.exp %145 : vector<64x128xf32>
    %cst_156 = arith.constant 1.000000e+00 : f32
    %147 = vector.broadcast %cst_156 : f32 to vector<64x128xf32>
    %148 = arith.subf %146, %147 : vector<64x128xf32>
    %149 = arith.select %143, %137, %148 : vector<64x128xi1>, vector<64x128xf32>
    %150 = vector.shape_cast %149 : vector<64x128xf32> to vector<8x8x128xf32>
    %c1_157 = arith.constant 1 : index
    %c1_158 = arith.constant 1 : index
    %c0_159 = arith.constant 0 : index
    %151 = vector.load %arg10[%c1_157, %c1_158, %c0_159] : memref<10x10x128xf32, #tpu.memory_space<vmem>>, vector<8x8x128xf32>
    tpu.vector_store %arg10[%c1_157, %c1_158, %c0_159], %150 {strides = array<i32>} : memref<10x10x128xf32, #tpu.memory_space<vmem>>, vector<8x8x128xf32>,
    %cst_160 = arith.constant 0.000000e+00 : f32
    %152 = vector.broadcast %cst_160 : f32 to vector<64x128xf32>
    %c0_161 = arith.constant 0 : index
    %c0_162 = arith.constant 0 : index
    %c0_163 = arith.constant 0 : index
    %153 = vector.load %arg10[%c0_161, %c0_162, %c0_163] : memref<10x10x128xf32, #tpu.memory_space<vmem>>, vector<8x8x128xf32>
    %154 = vector.shape_cast %153 : vector<8x8x128xf32> to vector<64x128xf32>
    %c0_164 = arith.constant 0 : index
    %c0_165 = arith.constant 0 : index
    %c0_166 = arith.constant 0 : index
    %155 = vector.load %arg6[%c0_164, %c0_165, %c0_166] : memref<9x128x128xf32, #tpu.memory_space<vmem>>, vector<1x128x128xf32>
    %156 = vector.shape_cast %155 : vector<1x128x128xf32> to vector<128x128xf32>
    %cst_167 = arith.constant dense<0.000000e+00> : vector<64x128xf32>
    %157 = tpu.matmul %154, %156, %cst_167 {dimension_numbers = #tpu.dot_dimension_numbers<[1], [0], [0], [1], [0, 0, 1, 1], [], []>} : vector<64x128xf32>, vector<128x128xf32>, vector<64x128xf32> -> vector<64x128xf32>
    %158 = arith.addf %152, %157 : vector<64x128xf32>
    %c0_168 = arith.constant 0 : index
    %c1_169 = arith.constant 1 : index
    %c0_170 = arith.constant 0 : index
    %159 = vector.load %arg10[%c0_168, %c1_169, %c0_170] : memref<10x10x128xf32, #tpu.memory_space<vmem>>, vector<8x8x128xf32>
    %160 = vector.shape_cast %159 : vector<8x8x128xf32> to vector<64x128xf32>
    %c1_171 = arith.constant 1 : index
    %c0_172 = arith.constant 0 : index
    %c0_173 = arith.constant 0 : index
    %161 = vector.load %arg6[%c1_171, %c0_172, %c0_173] : memref<9x128x128xf32, #tpu.memory_space<vmem>>, vector<1x128x128xf32>
    %162 = vector.shape_cast %161 : vector<1x128x128xf32> to vector<128x128xf32>
    %cst_174 = arith.constant dense<0.000000e+00> : vector<64x128xf32>
    %163 = tpu.matmul %160, %162, %cst_174 {dimension_numbers = #tpu.dot_dimension_numbers<[1], [0], [0], [1], [0, 0, 1, 1], [], []>} : vector<64x128xf32>, vector<128x128xf32>, vector<64x128xf32> -> vector<64x128xf32>
    %164 = arith.addf %158, %163 : vector<64x128xf32>
    %c0_175 = arith.constant 0 : index
    %c2_176 = arith.constant 2 : index
    %c0_177 = arith.constant 0 : index
    %165 = vector.load %arg10[%c0_175, %c2_176, %c0_177] : memref<10x10x128xf32, #tpu.memory_space<vmem>>, vector<8x8x128xf32>
    %166 = vector.shape_cast %165 : vector<8x8x128xf32> to vector<64x128xf32>
    %c2_178 = arith.constant 2 : index
    %c0_179 = arith.constant 0 : index
    %c0_180 = arith.constant 0 : index
    %167 = vector.load %arg6[%c2_178, %c0_179, %c0_180] : memref<9x128x128xf32, #tpu.memory_space<vmem>>, vector<1x128x128xf32>
    %168 = vector.shape_cast %167 : vector<1x128x128xf32> to vector<128x128xf32>
    %cst_181 = arith.constant dense<0.000000e+00> : vector<64x128xf32>
    %169 = tpu.matmul %166, %168, %cst_181 {dimension_numbers = #tpu.dot_dimension_numbers<[1], [0], [0], [1], [0, 0, 1, 1], [], []>} : vector<64x128xf32>, vector<128x128xf32>, vector<64x128xf32> -> vector<64x128xf32>
    %170 = arith.addf %164, %169 : vector<64x128xf32>
    %c1_182 = arith.constant 1 : index
    %c0_183 = arith.constant 0 : index
    %c0_184 = arith.constant 0 : index
    %171 = vector.load %arg10[%c1_182, %c0_183, %c0_184] : memref<10x10x128xf32, #tpu.memory_space<vmem>>, vector<8x8x128xf32>
    %172 = vector.shape_cast %171 : vector<8x8x128xf32> to vector<64x128xf32>
    %c3_185 = arith.constant 3 : index
    %c0_186 = arith.constant 0 : index
    %c0_187 = arith.constant 0 : index
    %173 = vector.load %arg6[%c3_185, %c0_186, %c0_187] : memref<9x128x128xf32, #tpu.memory_space<vmem>>, vector<1x128x128xf32>
    %174 = vector.shape_cast %173 : vector<1x128x128xf32> to vector<128x128xf32>
    %cst_188 = arith.constant dense<0.000000e+00> : vector<64x128xf32>
    %175 = tpu.matmul %172, %174, %cst_188 {dimension_numbers = #tpu.dot_dimension_numbers<[1], [0], [0], [1], [0, 0, 1, 1], [], []>} : vector<64x128xf32>, vector<128x128xf32>, vector<64x128xf32> -> vector<64x128xf32>
    %176 = arith.addf %170, %175 : vector<64x128xf32>
    %c1_189 = arith.constant 1 : index
    %c1_190 = arith.constant 1 : index
    %c0_191 = arith.constant 0 : index
    %177 = vector.load %arg10[%c1_189, %c1_190, %c0_191] : memref<10x10x128xf32, #tpu.memory_space<vmem>>, vector<8x8x128xf32>
    %178 = vector.shape_cast %177 : vector<8x8x128xf32> to vector<64x128xf32>
    %c4_192 = arith.constant 4 : index
    %c0_193 = arith.constant 0 : index
    %c0_194 = arith.constant 0 : index
    %179 = vector.load %arg6[%c4_192, %c0_193, %c0_194] : memref<9x128x128xf32, #tpu.memory_space<vmem>>, vector<1x128x128xf32>
    %180 = vector.shape_cast %179 : vector<1x128x128xf32> to vector<128x128xf32>
    %cst_195 = arith.constant dense<0.000000e+00> : vector<64x128xf32>
    %181 = tpu.matmul %178, %180, %cst_195 {dimension_numbers = #tpu.dot_dimension_numbers<[1], [0], [0], [1], [0, 0, 1, 1], [], []>} : vector<64x128xf32>, vector<128x128xf32>, vector<64x128xf32> -> vector<64x128xf32>
    %182 = arith.addf %176, %181 : vector<64x128xf32>
    %c1_196 = arith.constant 1 : index
    %c2_197 = arith.constant 2 : index
    %c0_198 = arith.constant 0 : index
    %183 = vector.load %arg10[%c1_196, %c2_197, %c0_198] : memref<10x10x128xf32, #tpu.memory_space<vmem>>, vector<8x8x128xf32>
    %184 = vector.shape_cast %183 : vector<8x8x128xf32> to vector<64x128xf32>
    %c5_199 = arith.constant 5 : index
    %c0_200 = arith.constant 0 : index
    %c0_201 = arith.constant 0 : index
    %185 = vector.load %arg6[%c5_199, %c0_200, %c0_201] : memref<9x128x128xf32, #tpu.memory_space<vmem>>, vector<1x128x128xf32>
    %186 = vector.shape_cast %185 : vector<1x128x128xf32> to vector<128x128xf32>
    %cst_202 = arith.constant dense<0.000000e+00> : vector<64x128xf32>
    %187 = tpu.matmul %184, %186, %cst_202 {dimension_numbers = #tpu.dot_dimension_numbers<[1], [0], [0], [1], [0, 0, 1, 1], [], []>} : vector<64x128xf32>, vector<128x128xf32>, vector<64x128xf32> -> vector<64x128xf32>
    %188 = arith.addf %182, %187 : vector<64x128xf32>
    %c2_203 = arith.constant 2 : index
    %c0_204 = arith.constant 0 : index
    %c0_205 = arith.constant 0 : index
    %189 = vector.load %arg10[%c2_203, %c0_204, %c0_205] : memref<10x10x128xf32, #tpu.memory_space<vmem>>, vector<8x8x128xf32>
    %190 = vector.shape_cast %189 : vector<8x8x128xf32> to vector<64x128xf32>
    %c6_206 = arith.constant 6 : index
    %c0_207 = arith.constant 0 : index
    %c0_208 = arith.constant 0 : index
    %191 = vector.load %arg6[%c6_206, %c0_207, %c0_208] : memref<9x128x128xf32, #tpu.memory_space<vmem>>, vector<1x128x128xf32>
    %192 = vector.shape_cast %191 : vector<1x128x128xf32> to vector<128x128xf32>
    %cst_209 = arith.constant dense<0.000000e+00> : vector<64x128xf32>
    %193 = tpu.matmul %190, %192, %cst_209 {dimension_numbers = #tpu.dot_dimension_numbers<[1], [0], [0], [1], [0, 0, 1, 1], [], []>} : vector<64x128xf32>, vector<128x128xf32>, vector<64x128xf32> -> vector<64x128xf32>
    %194 = arith.addf %188, %193 : vector<64x128xf32>
    %c2_210 = arith.constant 2 : index
    %c1_211 = arith.constant 1 : index
    %c0_212 = arith.constant 0 : index
    %195 = vector.load %arg10[%c2_210, %c1_211, %c0_212] : memref<10x10x128xf32, #tpu.memory_space<vmem>>, vector<8x8x128xf32>
    %196 = vector.shape_cast %195 : vector<8x8x128xf32> to vector<64x128xf32>
    %c7_213 = arith.constant 7 : index
    %c0_214 = arith.constant 0 : index
    %c0_215 = arith.constant 0 : index
    %197 = vector.load %arg6[%c7_213, %c0_214, %c0_215] : memref<9x128x128xf32, #tpu.memory_space<vmem>>, vector<1x128x128xf32>
    %198 = vector.shape_cast %197 : vector<1x128x128xf32> to vector<128x128xf32>
    %cst_216 = arith.constant dense<0.000000e+00> : vector<64x128xf32>
    %199 = tpu.matmul %196, %198, %cst_216 {dimension_numbers = #tpu.dot_dimension_numbers<[1], [0], [0], [1], [0, 0, 1, 1], [], []>} : vector<64x128xf32>, vector<128x128xf32>, vector<64x128xf32> -> vector<64x128xf32>
    %200 = arith.addf %194, %199 : vector<64x128xf32>
    %c2_217 = arith.constant 2 : index
    %c2_218 = arith.constant 2 : index
    %c0_219 = arith.constant 0 : index
    %201 = vector.load %arg10[%c2_217, %c2_218, %c0_219] : memref<10x10x128xf32, #tpu.memory_space<vmem>>, vector<8x8x128xf32>
    %202 = vector.shape_cast %201 : vector<8x8x128xf32> to vector<64x128xf32>
    %c8_220 = arith.constant 8 : index
    %c0_221 = arith.constant 0 : index
    %c0_222 = arith.constant 0 : index
    %203 = vector.load %arg6[%c8_220, %c0_221, %c0_222] : memref<9x128x128xf32, #tpu.memory_space<vmem>>, vector<1x128x128xf32>
    %204 = vector.shape_cast %203 : vector<1x128x128xf32> to vector<128x128xf32>
    %cst_223 = arith.constant dense<0.000000e+00> : vector<64x128xf32>
    %205 = tpu.matmul %202, %204, %cst_223 {dimension_numbers = #tpu.dot_dimension_numbers<[1], [0], [0], [1], [0, 0, 1, 1], [], []>} : vector<64x128xf32>, vector<128x128xf32>, vector<64x128xf32> -> vector<64x128xf32>
    %206 = arith.addf %200, %205 : vector<64x128xf32>
    %207 = arith.addf %137, %206 : vector<64x128xf32>
    %c0_224 = arith.constant 0 : index
    %c0_225 = arith.constant 0 : index
    %208 = vector.load %arg7[%c0_224, %c0_225] : memref<1x128xf32, #tpu.memory_space<vmem>>, vector<1x128xf32>
    %209 = vector.broadcast %208 : vector<1x128xf32> to vector<64x128xf32>
    %210 = arith.addf %207, %209 : vector<64x128xf32>
    %211 = vector.shape_cast %210 : vector<64x128xf32> to vector<8x8x128xf32>
    %c0_226 = arith.constant 0 : index
    %c0_227 = arith.constant 0 : index
    %c0_228 = arith.constant 0 : index
    %c0_229 = arith.constant 0 : index
    %212 = vector.load %arg9[%c0_226, %c0_227, %c0_228, %c0_229] : memref<1x8x8x128xf32, #tpu.memory_space<vmem>>, vector<1x8x8x128xf32>
    %213 = vector.shape_cast %212 : vector<1x8x8x128xf32> to vector<8x8x128xf32>
    %214 = vector.shape_cast %211 : vector<8x8x128xf32> to vector<1x8x8x128xf32>
    tpu.vector_store %arg9[%c0_226, %c0_227, %c0_228, %c0_229], %214 {strides = array<i32>} : memref<1x8x8x128xf32, #tpu.memory_space<vmem>>, vector<1x8x8x128xf32>,
    return
  }
  func.func @transform_0(%arg0: i32) -> (i32, i32, i32, i32, i32) {
    %c0_i32 = arith.constant 0 : i32
    %c0_i32_0 = arith.constant 0 : i32
    %c0_i32_1 = arith.constant 0 : i32
    %c0_i32_2 = arith.constant 0 : i32
    %c0_i32_3 = arith.constant 0 : i32
    return %arg0, %c0_i32, %c0_i32_0, %c0_i32_1, %c0_i32_2 : i32, i32, i32, i32, i32
  }
  func.func @transform_1(%arg0: i32) -> (i32, i32, i32) {
    %c0_i32 = arith.constant 0 : i32
    %c0_i32_0 = arith.constant 0 : i32
    %c0_i32_1 = arith.constant 0 : i32
    %c0_i32_2 = arith.constant 0 : i32
    return %c0_i32, %c0_i32_0, %c0_i32_1 : i32, i32, i32
  }
  func.func @transform_2(%arg0: i32) -> (i32, i32) {
    %c0_i32 = arith.constant 0 : i32
    %c0_i32_0 = arith.constant 0 : i32
    %c0_i32_1 = arith.constant 0 : i32
    return %c0_i32, %c0_i32_0 : i32, i32
  }
  func.func @transform_3(%arg0: i32) -> (i32, i32, i32) {
    %c0_i32 = arith.constant 0 : i32
    %c0_i32_0 = arith.constant 0 : i32
    %c0_i32_1 = arith.constant 0 : i32
    %c0_i32_2 = arith.constant 0 : i32
    return %c0_i32, %c0_i32_0, %c0_i32_1 : i32, i32, i32
  }
  func.func @transform_4(%arg0: i32) -> (i32, i32) {
    %c0_i32 = arith.constant 0 : i32
    %c0_i32_0 = arith.constant 0 : i32
    %c0_i32_1 = arith.constant 0 : i32
    return %c0_i32, %c0_i32_0 : i32, i32
  }
  func.func @transform_5(%arg0: i32) -> (i32, i32, i32) {
    %c0_i32 = arith.constant 0 : i32
    %c0_i32_0 = arith.constant 0 : i32
    %c0_i32_1 = arith.constant 0 : i32
    %c0_i32_2 = arith.constant 0 : i32
    return %c0_i32, %c0_i32_0, %c0_i32_1 : i32, i32, i32
  }
  func.func @transform_6(%arg0: i32) -> (i32, i32) {
    %c0_i32 = arith.constant 0 : i32
    %c0_i32_0 = arith.constant 0 : i32
    %c0_i32_1 = arith.constant 0 : i32
    return %c0_i32, %c0_i32_0 : i32, i32
  }
  func.func @transform_7(%arg0: i32) -> (i32, i32, i32, i32) {
    %c0_i32 = arith.constant 0 : i32
    %c0_i32_0 = arith.constant 0 : i32
    %c0_i32_1 = arith.constant 0 : i32
    %c0_i32_2 = arith.constant 0 : i32
    return %arg0, %c0_i32, %c0_i32_0, %c0_i32_1 : i32, i32, i32, i32
  }
  func.func @transform_8(%arg0: i32) -> (i32, i32, i32, i32) {
    %c0_i32 = arith.constant 0 : i32
    %c0_i32_0 = arith.constant 0 : i32
    %c0_i32_1 = arith.constant 0 : i32
    %c0_i32_2 = arith.constant 0 : i32
    return %arg0, %c0_i32, %c0_i32_0, %c0_i32_1 : i32, i32, i32, i32
  }
}

</mosaic_0001>

<llo_original>
// kernel: down_block_forward.1
$region0: #{down_block_forward.1}
  #allocation0 [shape = 'u32[]', space=smem, size = 0x4, offset = 0x4, fixed_abs, tag = 'smem constant byte address 0x4 - core index']
  #allocation1 [shape = 'u32[144,128]{1,0:T(1,128)}', space=vmem, size = 0x12000, scoped, tag = 'internal scratch']
  #allocation2 [shape = 'f32[10,10,128]{2,1,0:T(8,128)}', space=vmem, size = 0x14000, scoped, tag = 'scratch operand']
  %s0 = inlined_call_operand.vmem [shape: f32[2,4,9,9,128], index: 0, kind: input, shape index: {}]
  %s1 = inlined_call_operand.vmem [shape: f32[9,128,128], index: 1, kind: input, shape index: {}]
  %s2 = inlined_call_operand.vmem [shape: f32[1,128], index: 2, kind: input, shape index: {}]
  %s3 = inlined_call_operand.vmem [shape: f32[9,128,128], index: 3, kind: input, shape index: {}]
  %s4 = inlined_call_operand.vmem [shape: f32[1,128], index: 4, kind: input, shape index: {}]
  %s5 = inlined_call_operand.vmem [shape: f32[9,128,128], index: 5, kind: input, shape index: {}]
  %s6 = inlined_call_operand.vmem [shape: f32[1,128], index: 6, kind: input, shape index: {}]
  %s7 = inlined_call_operand.vmem [shape: f32[2,8,8,128], index: 7, kind: output, shape index: {0}]
  %s8 = inlined_call_operand.vmem [shape: f32[2,8,8,128], index: 8, kind: output, shape index: {1}]
  %9 = xla_tuple %s7, %s8
  %s10 = sld [smem:[#allocation0]]
  $region69: #{down_block_forward.1} parent=0
    _
  %s12 = ssub.s32 1, %s10
  %s13 = scalar_select 0, %s12, %s10
  loop: start=0, step=1, limit=4
  $region2: #{down_block_forward.1} parent=0 // loop_pre_header
    _
  $region3: #{down_block_forward.1} parent=0 // loop_header
    %s15 = sphi 0, %s19
    %p16 = scmp.ge.s32.totalorder %s15, 4
    %s25 = sphi 0, %s27
    %s28 = sphi 0, %s25
    %s29 = sphi 0, %s28
    %s45 = sphi 0, %s29
    %s49 = sphi 0, %s49
    %s51 = sphi 0, %s49
    %s52 = sphi 0, %s51
    %s66 = sphi 0, %s52
    %s70 = sphi 0, %s70
    %s72 = sphi 0, %s70
    %s73 = sphi 0, %s72
    %s87 = sphi 0, %s73
    %s91 = sphi 0, %s91
    %s93 = sphi 0, %s91
    %s94 = sphi 0, %s93
    %s108 = sphi 0, %s94
    %s112 = sphi 0, %s112
    %s114 = sphi 0, %s112
    %s115 = sphi 0, %s114
    %s129 = sphi 0, %s115
    %s133 = sphi 0, %s133
    %s135 = sphi 0, %s133
    %s136 = sphi 0, %s135
    %s150 = sphi 0, %s136
    %s154 = sphi 0, %s154
    %s156 = sphi 0, %s154
    %s157 = sphi 0, %s156
    %s171 = sphi 0, %s157
    %s177 = sphi 0, %s179
    %s180 = sphi 0, %s177
    %s181 = sphi 0, %s180
    %s197 = sphi 0, %s181
    %s203 = sphi 0, %s205
    %s206 = sphi 0, %s203
    %s207 = sphi 0, %s206
    %s223 = sphi 0, %s207
  $region4: #{down_block_forward.1} parent=0 // loop_header_branch
    %18 = sbr.rel (%p16) target = $region8
  $region5: #{down_block_forward.1} parent=0 // loop_body
    %s20 = ssub.s32 %s15, 1
    %s21 = ssub.s32 %s15, 2
    %s22 = sadd.s32 %s15, 1
    %s23 = ssub.s32 %s15, %s22
    %p24 = scmp.eq.s32.totalorder %s23, 0
    %s26 = sadd.s32 %s25, 1
    %s27 = scalar_select %p24, %s25, %s26
    %p30 = pneg %p24
    %p31 = scmp.eq.s32.totalorder %s15, 1
    %p32 = por %p30, %p31
    %p33 = scmp.ne.s32.totalorder %s25, %s28
    %p34 = scmp.eq.s32.totalorder %s15, 0
    %p35 = por %p33, %p34
    %p36 = scmp.ne.s32.totalorder %s25, %s28
    %p37 = scmp.eq.s32.totalorder %s20, 1
    %p38 = por %p36, %p37
    %p39 = scmp.ne.s32.totalorder %s28, %s29
    %p40 = scmp.eq.s32.totalorder %s20, 0
    %p41 = por %p39, %p40
    %p42 = scmp.ne.s32.totalorder %s28, %s29
    %p43 = scmp.eq.s32.totalorder %s21, 1
    %p44 = por %p42, %p43
    %p46 = scmp.ne.s32.totalorder %s29, %s45
    %p47 = scmp.eq.s32.totalorder %s21, 0
    %p48 = por %p46, %p47
    %s50 = sadd.s32 %s49, 1
    %p53 = scmp.eq.s32.totalorder %s15, 1
    %p54 = scmp.ne.s32.totalorder %s49, %s51
    %p55 = scmp.eq.s32.totalorder %s15, 0
    %p56 = por %p54, %p55
    %p57 = scmp.ne.s32.totalorder %s49, %s51
    %p58 = scmp.eq.s32.totalorder %s20, 1
    %p59 = por %p57, %p58
    %p60 = scmp.ne.s32.totalorder %s51, %s52
    %p61 = scmp.eq.s32.totalorder %s20, 0
    %p62 = por %p60, %p61
    %p63 = scmp.ne.s32.totalorder %s51, %s52
    %p64 = scmp.eq.s32.totalorder %s21, 1
    %p65 = por %p63, %p64
    %p67 = scmp.ne.s32.totalorder %s52, %s66
    %p68 = scmp.eq.s32.totalorder %s21, 0
    %p69 = por %p67, %p68
    %s71 = sadd.s32 %s70, 1
    %p74 = scmp.eq.s32.totalorder %s15, 1
    %p75 = scmp.ne.s32.totalorder %s70, %s72
    %p76 = scmp.eq.s32.totalorder %s15, 0
    %p77 = por %p75, %p76
    %p78 = scmp.ne.s32.totalorder %s70, %s72
    %p79 = scmp.eq.s32.totalorder %s20, 1
    %p80 = por %p78, %p79
    %p81 = scmp.ne.s32.totalorder %s72, %s73
    %p82 = scmp.eq.s32.totalorder %s20, 0
    %p83 = por %p81, %p82
    %p84 = scmp.ne.s32.totalorder %s72, %s73
    %p85 = scmp.eq.s32.totalorder %s21, 1
    %p86 = por %p84, %p85
    %p88 = scmp.ne.s32.totalorder %s73, %s87
    %p89 = scmp.eq.s32.totalorder %s21, 0
    %p90 = por %p88, %p89
    %s92 = sadd.s32 %s91, 1
    %p95 = scmp.eq.s32.totalorder %s15, 1
    %p96 = scmp.ne.s32.totalorder %s91, %s93
    %p97 = scmp.eq.s32.totalorder %s15, 0
    %p98 = por %p96, %p97
    %p99 = scmp.ne.s32.totalorder %s91, %s93
    %p100 = scmp.eq.s32.totalorder %s20, 1
    %p101 = por %p99, %p100
    %p102 = scmp.ne.s32.totalorder %s93, %s94
    %p103 = scmp.eq.s32.totalorder %s20, 0
    %p104 = por %p102, %p103
    %p105 = scmp.ne.s32.totalorder %s93, %s94
    %p106 = scmp.eq.s32.totalorder %s21, 1
    %p107 = por %p105, %p106
    %p109 = scmp.ne.s32.totalorder %s94, %s108
    %p110 = scmp.eq.s32.totalorder %s21, 0
    %p111 = por %p109, %p110
    %s113 = sadd.s32 %s112, 1
    %p116 = scmp.eq.s32.totalorder %s15, 1
    %p117 = scmp.ne.s32.totalorder %s112, %s114
    %p118 = scmp.eq.s32.totalorder %s15, 0
    %p119 = por %p117, %p118
    %p120 = scmp.ne.s32.totalorder %s112, %s114
    %p121 = scmp.eq.s32.totalorder %s20, 1
    %p122 = por %p120, %p121
    %p123 = scmp.ne.s32.totalorder %s114, %s115
    %p124 = scmp.eq.s32.totalorder %s20, 0
    %p125 = por %p123, %p124
    %p126 = scmp.ne.s32.totalorder %s114, %s115
    %p127 = scmp.eq.s32.totalorder %s21, 1
    %p128 = por %p126, %p127
    %p130 = scmp.ne.s32.totalorder %s115, %s129
    %p131 = scmp.eq.s32.totalorder %s21, 0
    %p132 = por %p130, %p131
    %s134 = sadd.s32 %s133, 1
    %p137 = scmp.eq.s32.totalorder %s15, 1
    %p138 = scmp.ne.s32.totalorder %s133, %s135
    %p139 = scmp.eq.s32.totalorder %s15, 0
    %p140 = por %p138, %p139
    %p141 = scmp.ne.s32.totalorder %s133, %s135
    %p142 = scmp.eq.s32.totalorder %s20, 1
    %p143 = por %p141, %p142
    %p144 = scmp.ne.s32.totalorder %s135, %s136
    %p145 = scmp.eq.s32.totalorder %s20, 0
    %p146 = por %p144, %p145
    %p147 = scmp.ne.s32.totalorder %s135, %s136
    %p148 = scmp.eq.s32.totalorder %s21, 1
    %p149 = por %p147, %p148
    %p151 = scmp.ne.s32.totalorder %s136, %s150
    %p152 = scmp.eq.s32.totalorder %s21, 0
    %p153 = por %p151, %p152
    %s155 = sadd.s32 %s154, 1
    %p158 = scmp.eq.s32.totalorder %s15, 1
    %p159 = scmp.ne.s32.totalorder %s154, %s156
    %p160 = scmp.eq.s32.totalorder %s15, 0
    %p161 = por %p159, %p160
    %p162 = scmp.ne.s32.totalorder %s154, %s156
    %p163 = scmp.eq.s32.totalorder %s20, 1
    %p164 = por %p162, %p163
    %p165 = scmp.ne.s32.totalorder %s156, %s157
    %p166 = scmp.eq.s32.totalorder %s20, 0
    %p167 = por %p165, %p166
    %p168 = scmp.ne.s32.totalorder %s156, %s157
    %p169 = scmp.eq.s32.totalorder %s21, 1
    %p170 = por %p168, %p169
    %p172 = scmp.ne.s32.totalorder %s157, %s171
    %p173 = scmp.eq.s32.totalorder %s21, 0
    %p174 = por %p172, %p173
    %s175 = ssub.s32 %s15, %s22
    %p176 = scmp.eq.s32.totalorder %s175, 0
    %s178 = sadd.s32 %s177, 1
    %s179 = scalar_select %p176, %s177, %s178
    %p182 = pneg %p176
    %p183 = scmp.eq.s32.totalorder %s15, 1
    %p184 = por %p182, %p183
    %p185 = scmp.ne.s32.totalorder %s177, %s180
    %p186 = scmp.eq.s32.totalorder %s15, 0
    %p187 = por %p185, %p186
    %p188 = scmp.ne.s32.totalorder %s177, %s180
    %p189 = scmp.eq.s32.totalorder %s20, 1
    %p190 = por %p188, %p189
    %p191 = scmp.ne.s32.totalorder %s180, %s181
    %p192 = scmp.eq.s32.totalorder %s20, 0
    %p193 = por %p191, %p192
    %p194 = scmp.ne.s32.totalorder %s180, %s181
    %p195 = scmp.eq.s32.totalorder %s21, 1
    %p196 = por %p194, %p195
    %p198 = scmp.ne.s32.totalorder %s181, %s197
    %p199 = scmp.eq.s32.totalorder %s21, 0
    %p200 = por %p198, %p199
    %s201 = ssub.s32 %s15, %s22
    %p202 = scmp.eq.s32.totalorder %s201, 0
    %s204 = sadd.s32 %s203, 1
    %s205 = scalar_select %p202, %s203, %s204
    %p208 = pneg %p202
    %p209 = scmp.eq.s32.totalorder %s15, 1
    %p210 = por %p208, %p209
    %p211 = scmp.ne.s32.totalorder %s203, %s206
    %p212 = scmp.eq.s32.totalorder %s15, 0
    %p213 = por %p211, %p212
    %p214 = scmp.ne.s32.totalorder %s203, %s206
    %p215 = scmp.eq.s32.totalorder %s20, 1
    %p216 = por %p214, %p215
    %p217 = scmp.ne.s32.totalorder %s206, %s207
    %p218 = scmp.eq.s32.totalorder %s20, 0
    %p219 = por %p217, %p218
    %p220 = scmp.ne.s32.totalorder %s206, %s207
    %p221 = scmp.eq.s32.totalorder %s21, 1
    %p222 = por %p220, %p221
    %p224 = scmp.ne.s32.totalorder %s207, %s223
    %p225 = scmp.eq.s32.totalorder %s21, 0
    %p226 = por %p224, %p225
    %p227 = scmp.le.s32.totalorder 1, %s15
    %p228 = scmp.lt.s32.totalorder %s15, 3
    %p229 = pnand %p227, %p228
    %p230 = pneg %p229
    // Predicated region
    $region9: #{down_block_forward.1} parent=5 // pred_check
      _
    $region10: #{down_block_forward.1} parent=5 // pred_check_branch
      %232 = sbr.rel (%p229) target = $region12
    $region11: #{down_block_forward.1} parent=5 // pred_region
      %s233 = ssub.s32 %s15, 1
      // Predicated region
      $region13: #{down_block_forward.1} parent=11 // pred_check
        %p234 = pneg %p62
      $region14: #{down_block_forward.1} parent=11 // pred_check_branch
        %236 = sbr.rel (%p234) target = $region16
      $region15: #{down_block_forward.1} parent=11 // pred_region
        _
      $region16: #{down_block_forward.1} parent=11 // pred_fallthru
        _
      // Predicated region
      $region17: #{down_block_forward.1} parent=11 // pred_check
        %p237 = pneg %p83
      $region18: #{down_block_forward.1} parent=11 // pred_check_branch
        %239 = sbr.rel (%p237) target = $region20
      $region19: #{down_block_forward.1} parent=11 // pred_region
        _
      $region20: #{down_block_forward.1} parent=11 // pred_fallthru
        _
      // Predicated region
      $region21: #{down_block_forward.1} parent=11 // pred_check
        %p240 = pneg %p104
      $region22: #{down_block_forward.1} parent=11 // pred_check_branch
        %242 = sbr.rel (%p240) target = $region24
      $region23: #{down_block_forward.1} parent=11 // pred_region
        _
      $region24: #{down_block_forward.1} parent=11 // pred_fallthru
        _
      // Predicated region
      $region25: #{down_block_forward.1} parent=11 // pred_check
        %p243 = pneg %p125
      $region26: #{down_block_forward.1} parent=11 // pred_check_branch
        %245 = sbr.rel (%p243) target = $region28
      $region27: #{down_block_forward.1} parent=11 // pred_region
        _
      $region28: #{down_block_forward.1} parent=11 // pred_fallthru
        _
      // Predicated region
      $region29: #{down_block_forward.1} parent=11 // pred_check
        %p246 = pneg %p146
      $region30: #{down_block_forward.1} parent=11 // pred_check_branch
        %248 = sbr.rel (%p246) target = $region32
      $region31: #{down_block_forward.1} parent=11 // pred_region
        _
      $region32: #{down_block_forward.1} parent=11 // pred_fallthru
        _
      // Predicated region
      $region33: #{down_block_forward.1} parent=11 // pred_check
        %p249 = pneg %p167
      $region34: #{down_block_forward.1} parent=11 // pred_check_branch
        %251 = sbr.rel (%p249) target = $region36
      $region35: #{down_block_forward.1} parent=11 // pred_region
        _
      $region36: #{down_block_forward.1} parent=11 // pred_fallthru
        _
    $region12: #{down_block_forward.1} parent=5 // pred_fallthru
      _
    %p252 = scmp.lt.s32.totalorder %s15, 2
    // Predicated region
    $region37: #{down_block_forward.1} parent=5 // pred_check
      %p253 = pneg %p252
    $region38: #{down_block_forward.1} parent=5 // pred_check_branch
      %255 = sbr.rel (%p253) target = $region40
    $region39: #{down_block_forward.1} parent=5 // pred_region
      // Predicated region
      $region41: #{down_block_forward.1} parent=39 // pred_check
        %p256 = pneg %p35
      $region42: #{down_block_forward.1} parent=39 // pred_check_branch
        %258 = sbr.rel (%p256) target = $region44
      $region43: #{down_block_forward.1} parent=39 // pred_region
        %p259 = scmp.lt.s32.totalorder %s15, 1
        %s260 = scalar_select %p259, %s15, 1
        %s261 = smul.addr %s260, 72
        %s262 = smul.addr %s261, 8
        %s263 = scalar_lea.vmem %s0, %s262
      $region44: #{down_block_forward.1} parent=39 // pred_fallthru
        _
    $region40: #{down_block_forward.1} parent=5 // pred_fallthru
      _
    %p264 = scmp.le.s32.totalorder 1, %s15
    %p265 = scmp.lt.s32.totalorder %s15, 3
    %p266 = pnand %p264, %p265
    %p267 = pneg %p266
    // Predicated region
    $region45: #{down_block_forward.1} parent=5 // pred_check
      _
    $region46: #{down_block_forward.1} parent=5 // pred_check_branch
      %269 = sbr.rel (%p266) target = $region48
    $region47: #{down_block_forward.1} parent=5 // pred_region
      %s270 = ssub.s32 %s15, 1
      %p271 = scmp.lt.s32.totalorder %s20, 1
      %s272 = scalar_select %p271, %s20, 1
      %s273 = smul.addr %s272, 72
      %s274 = smul.addr %s273, 8
      %s275 = scalar_lea.vmem %s0, %s274
      %p276 = pneg %p41
      %p277 = pneg %p38
      %p278 = pneg %p62
      %p279 = pneg %p59
      %p280 = pneg %p83
      %p281 = pneg %p80
      %p282 = pneg %p104
      %p283 = pneg %p101
      %p284 = pneg %p125
      %p285 = pneg %p122
      %p286 = pneg %p146
      %p287 = pneg %p143
      %p288 = pneg %p167
      %p289 = pneg %p164
      %p290 = pneg %p193
      %p291 = pneg %p190
      %p292 = scmp.lt.s32.totalorder %s20, 1
      %s293 = scalar_select %p292, %s20, 1
      %s294 = smul.addr %s293, 8
      %s295 = smul.addr %s294, 8
      %s296 = scalar_lea.vmem %s7, %s295
      %p297 = pneg %p219
      %p298 = pneg %p216
      %p299 = scmp.lt.s32.totalorder %s20, 1
      %s300 = scalar_select %p299, %s20, 1
      %s301 = smul.addr %s300, 8
      %s302 = smul.addr %s301, 8
      %s303 = scalar_lea.vmem %s8, %s302
      %p304 = scmp.lt.s32.totalorder %s20, 1
      %s305 = scalar_select %p304, %s20, 1
      %s306 = smul.addr %s305, 72
      %s307 = smul.addr %s306, 8
      %s308 = scalar_lea.vmem %s0, %s307
      %p309 = scmp.lt.s32.totalorder %s20, 1
      %s310 = scalar_select %p309, %s20, 1
      %s311 = smul.addr %s310, 8
      %s312 = smul.addr %s311, 8
      %s313 = scalar_lea.vmem %s7, %s312
      %p314 = scmp.lt.s32.totalorder %s20, 1
      %s315 = scalar_select %p314, %s20, 1
      %s316 = smul.addr %s315, 8
      %s317 = smul.addr %s316, 8
      %s318 = scalar_lea.vmem %s8, %s317
      %319 = vst [vmem:[#allocation2] sm:$0xff] 0.0
      %320 = vst [vmem:[#allocation2 + $0x8] sm:$0x3] 0.0
      %321 = vst [vmem:[#allocation2 + $0x10] sm:$0xff] 0.0
      %322 = vst [vmem:[#allocation2 + $0x18] sm:$0x3] 0.0
      %323 = vst [vmem:[#allocation2 + $0x20] sm:$0xff] 0.0
      %324 = vst [vmem:[#allocation2 + $0x28] sm:$0x3] 0.0
      %325 = vst [vmem:[#allocation2 + $0x30] sm:$0xff] 0.0
      %326 = vst [vmem:[#allocation2 + $0x38] sm:$0x3] 0.0
      %327 = vst [vmem:[#allocation2 + $0x40] sm:$0xff] 0.0
      %328 = vst [vmem:[#allocation2 + $0x48] sm:$0x3] 0.0
      %329 = vst [vmem:[#allocation2 + $0x50] sm:$0xff] 0.0
      %330 = vst [vmem:[#allocation2 + $0x58] sm:$0x3] 0.0
      %331 = vst [vmem:[#allocation2 + $0x60] sm:$0xff] 0.0
      %332 = vst [vmem:[#allocation2 + $0x68] sm:$0x3] 0.0
      %333 = vst [vmem:[#allocation2 + $0x70] sm:$0xff] 0.0
      %334 = vst [vmem:[#allocation2 + $0x78] sm:$0x3] 0.0
      %335 = vst [vmem:[#allocation2 + $0x80] sm:$0xff] 0.0
      %336 = vst [vmem:[#allocation2 + $0x88] sm:$0x3] 0.0
      %337 = vst [vmem:[#allocation2 + $0x90] sm:$0xff] 0.0
      %338 = vst [vmem:[#allocation2 + $0x98] sm:$0x3] 0.0
      %v339 = vld [vmem:[%s308] sm:$0xff]
      %v340 = vld [vmem:[%s308 + $0x10] sm:$0xff]
      %v341 = vld [vmem:[%s308 + $0x20] sm:$0xff]
      %v342 = vld [vmem:[%s308 + $0x30] sm:$0xff]
      %v343 = vld [vmem:[%s308 + $0x40] sm:$0xff]
      %v344 = vld [vmem:[%s308 + $0x50] sm:$0xff]
      %v345 = vld [vmem:[%s308 + $0x60] sm:$0xff]
      %v346 = vld [vmem:[%s308 + $0x70] sm:$0xff]
      %v347 = vld [vmem:[%s1] sm:$0xff]
      %v348 = vld [vmem:[%s1 + $0x8] sm:$0xff]
      %v349 = vld [vmem:[%s1 + $0x10] sm:$0xff]
      %v350 = vld [vmem:[%s1 + $0x18] sm:$0xff]
      %v351 = vld [vmem:[%s1 + $0x20] sm:$0xff]
      %v352 = vld [vmem:[%s1 + $0x28] sm:$0xff]
      %v353 = vld [vmem:[%s1 + $0x30] sm:$0xff]
      %v354 = vld [vmem:[%s1 + $0x38] sm:$0xff]
      %v355 = vld [vmem:[%s1 + $0x40] sm:$0xff]
      %v356 = vld [vmem:[%s1 + $0x48] sm:$0xff]
      %v357 = vld [vmem:[%s1 + $0x50] sm:$0xff]
      %v358 = vld [vmem:[%s1 + $0x58] sm:$0xff]
      %v359 = vld [vmem:[%s1 + $0x60] sm:$0xff]
      %v360 = vld [vmem:[%s1 + $0x68] sm:$0xff]
      %v361 = vld [vmem:[%s1 + $0x70] sm:$0xff]
      %v362 = vld [vmem:[%s1 + $0x78] sm:$0xff]
      %s363 = scalar_lea.vmem %s308, 144
      %v364 = vld [vmem:[%s363] sm:$0xff]
      %v365 = vld [vmem:[%s363 + $0x10] sm:$0xff]
      %v366 = vld [vmem:[%s363 + $0x20] sm:$0xff]
      %v367 = vld [vmem:[%s363 + $0x30] sm:$0xff]
      %v368 = vld [vmem:[%s363 + $0x40] sm:$0xff]
      %v369 = vld [vmem:[%s363 + $0x50] sm:$0xff]
      %v370 = vld [vmem:[%s363 + $0x60] sm:$0xff]
      %v371 = vld [vmem:[%s363 + $0x70] sm:$0xff]
      %s372 = scalar_lea.vmem %s1, 128
      %v373 = vld [vmem:[%s372] sm:$0xff]
      %v374 = vld [vmem:[%s372 + $0x8] sm:$0xff]
      %v375 = vld [vmem:[%s372 + $0x10] sm:$0xff]
      %v376 = vld [vmem:[%s372 + $0x18] sm:$0xff]
      %v377 = vld [vmem:[%s372 + $0x20] sm:$0xff]
      %v378 = vld [vmem:[%s372 + $0x28] sm:$0xff]
      %v379 = vld [vmem:[%s372 + $0x30] sm:$0xff]
      %v380 = vld [vmem:[%s372 + $0x38] sm:$0xff]
      %v381 = vld [vmem:[%s372 + $0x40] sm:$0xff]
      %v382 = vld [vmem:[%s372 + $0x48] sm:$0xff]
      %v383 = vld [vmem:[%s372 + $0x50] sm:$0xff]
      %v384 = vld [vmem:[%s372 + $0x58] sm:$0xff]
      %v385 = vld [vmem:[%s372 + $0x60] sm:$0xff]
      %v386 = vld [vmem:[%s372 + $0x68] sm:$0xff]
      %v387 = vld [vmem:[%s372 + $0x70] sm:$0xff]
      %v388 = vld [vmem:[%s372 + $0x78] sm:$0xff]
      %389 = vmatprep.subr.mxu0 0.0
      %390 = vmatpush1.msra.mxu0 %v373
      %391 = vmatprep.subr.mxu0 0.0
      %392 = vmatpush1.msra.mxu0 %v374
      %393 = vmatprep.subr.mxu0 0.0
      %394 = vmatpush1.msra.mxu0 %v375
      %395 = vmatprep.subr.mxu0 0.0
      %396 = vmatpush1.msra.mxu0 %v376
      %397 = vmatprep.subr.mxu0 0.0
      %398 = vmatpush1.msra.mxu0 %v377
      %399 = vmatprep.subr.mxu0 0.0
      %400 = vmatpush1.msra.mxu0 %v378
      %401 = vmatprep.subr.mxu0 0.0
      %402 = vmatpush1.msra.mxu0 %v379
      %403 = vmatprep.subr.mxu0 0.0
      %404 = vmatpush1.msra.mxu0 %v380
      %405 = vmatprep.subr.mxu0 0.0
      %406 = vmatpush1.msra.mxu0 %v381
      %407 = vmatprep.subr.mxu0 0.0
      %408 = vmatpush1.msra.mxu0 %v382
      %409 = vmatprep.subr.mxu0 0.0
      %410 = vmatpush1.msra.mxu0 %v383
      %411 = vmatprep.subr.mxu0 0.0
      %412 = vmatpush1.msra.mxu0 %v384
      %413 = vmatprep.subr.mxu0 0.0
      %414 = vmatpush1.msra.mxu0 %v385
      %415 = vmatprep.subr.mxu0 0.0
      %416 = vmatpush1.msra.mxu0 %v386
      %417 = vmatprep.subr.mxu0 0.0
      %418 = vmatpush1.msra.mxu0 %v387
      %419 = vmatprep.subr.mxu0 0.0
      %420 = vmatpush1.msra.mxu0 %v388
      %421 = vmatprep.subr.mxu0 0.0
      %422 = vmatpush1.msra.mxu0 0.0
      %423 = vmatprep.subr.mxu0 0.0
      %424 = vmatpush1.msra.mxu0 0.0
      %425 = vmatprep.subr.mxu0 0.0
      %426 = vmatpush1.msra.mxu0 0.0
      %427 = vmatprep.subr.mxu0 0.0
      %428 = vmatpush1.msra.mxu0 0.0
      %429 = vmatprep.subr.mxu0 0.0
      %430 = vmatpush1.msra.mxu0 0.0
      %431 = vmatprep.subr.mxu0 0.0
      %432 = vmatpush1.msra.mxu0 0.0
      %433 = vmatprep.subr.mxu0 0.0
      %434 = vmatpush1.msra.mxu0 0.0
      %435 = vmatprep.subr.mxu0 0.0
      %436 = vmatpush1.msra.mxu0 0.0
      %437 = vmatprep.subr.mxu0 0.0
      %438 = vmatpush1.msra.mxu0 0.0
      %439 = vmatprep.subr.mxu0 0.0
      %440 = vmatpush1.msra.mxu0 0.0
      %441 = vmatprep.subr.mxu0 0.0
      %442 = vmatpush1.msra.mxu0 0.0
      %443 = vmatprep.subr.mxu0 0.0
      %444 = vmatpush1.msra.mxu0 0.0
      %445 = vmatprep.subr.mxu0 0.0
      %446 = vmatpush1.msra.mxu0 0.0
      %447 = vmatprep.subr.mxu0 0.0
      %448 = vmatpush1.msra.mxu0 0.0
      %449 = vmatprep.subr.mxu0 0.0
      %450 = vmatpush1.msra.mxu0 0.0
      %451 = vmatprep.subr.mxu0 0.0
      %452 = vmatpush1.msra.mxu0 0.0
      %453 = vmatprep.mubr.f32.mxu0 0.0
      %454 = vmatmul.mubr.f32.gmra.mrb[0].mxu0 %v364
      %v455 = vpop.f32.mrb[0].mxu0
      %v456 = vadd.f32 0.0, %v455
      %v457 = vpop.f32.mrb[0].mxu0
      %458 = vmatprep.mubr.f32.mxu0 0.0
      %459 = vmatmul.mubr.f32.gmra.mrb[0].mxu0 %v365
      %v460 = vpop.f32.mrb[0].mxu0
      %v461 = vadd.f32 0.0, %v460
      %v462 = vpop.f32.mrb[0].mxu0
      %463 = vmatprep.mubr.f32.mxu0 0.0
      %464 = vmatmul.mubr.f32.gmra.mrb[0].mxu0 %v366
      %v465 = vpop.f32.mrb[0].mxu0
      %v466 = vadd.f32 0.0, %v465
      %v467 = vpop.f32.mrb[0].mxu0
      %468 = vmatprep.mubr.f32.mxu0 0.0
      %469 = vmatmul.mubr.f32.gmra.mrb[0].mxu0 %v367
      %v470 = vpop.f32.mrb[0].mxu0
      %v471 = vadd.f32 0.0, %v470
      %v472 = vpop.f32.mrb[0].mxu0
      %473 = vmatprep.mubr.f32.mxu0 0.0
      %474 = vmatmul.mubr.f32.gmra.mrb[0].mxu0 %v368
      %v475 = vpop.f32.mrb[0].mxu0
      %v476 = vadd.f32 0.0, %v475
      %v477 = vpop.f32.mrb[0].mxu0
      %478 = vmatprep.mubr.f32.mxu0 0.0
      %479 = vmatmul.mubr.f32.gmra.mrb[0].mxu0 %v369
      %v480 = vpop.f32.mrb[0].mxu0
      %v481 = vadd.f32 0.0, %v480
      %v482 = vpop.f32.mrb[0].mxu0
      %483 = vmatprep.mubr.f32.mxu0 0.0
      %484 = vmatmul.mubr.f32.gmra.mrb[0].mxu0 %v370
      %v485 = vpop.f32.mrb[0].mxu0
      %v486 = vadd.f32 0.0, %v485
      %v487 = vpop.f32.mrb[0].mxu0
      %488 = vmatprep.mubr.f32.mxu0 0.0
      %489 = vmatmul.mubr.f32.gmra.mrb[0].mxu0 %v371
      %v490 = vpop.f32.mrb[0].mxu0
      %v491 = vadd.f32 0.0, %v490
      %v492 = vpop.f32.mrb[0].mxu0
      %493 = vdwg.mxu0
      %494 = vmatprep.subr.mxu0 0.0
      %495 = vmatpush1.msra.mxu0 %v347
      %496 = vmatprep.subr.mxu0 0.0
      %497 = vmatpush1.msra.mxu0 %v348
      %498 = vmatprep.subr.mxu0 0.0
      %499 = vmatpush1.msra.mxu0 %v349
      %500 = vmatprep.subr.mxu0 0.0
      %501 = vmatpush1.msra.mxu0 %v350
      %502 = vmatprep.subr.mxu0 0.0
      %503 = vmatpush1.msra.mxu0 %v351
      %504 = vmatprep.subr.mxu0 0.0
      %505 = vmatpush1.msra.mxu0 %v352
      %506 = vmatprep.subr.mxu0 0.0
      %507 = vmatpush1.msra.mxu0 %v353
      %508 = vmatprep.subr.mxu0 0.0
      %509 = vmatpush1.msra.mxu0 %v354
      %510 = vmatprep.subr.mxu0 0.0
      %511 = vmatpush1.msra.mxu0 %v355
      %512 = vmatprep.subr.mxu0 0.0
      %513 = vmatpush1.msra.mxu0 %v356
      %514 = vmatprep.subr.mxu0 0.0
      %515 = vmatpush1.msra.mxu0 %v357
      %516 = vmatprep.subr.mxu0 0.0
      %517 = vmatpush1.msra.mxu0 %v358
      %518 = vmatprep.subr.mxu0 0.0
      %519 = vmatpush1.msra.mxu0 %v359
      %520 = vmatprep.subr.mxu0 0.0
      %521 = vmatpush1.msra.mxu0 %v360
      %522 = vmatprep.subr.mxu0 0.0
      %523 = vmatpush1.msra.mxu0 %v361
      %524 = vmatprep.subr.mxu0 0.0
      %525 = vmatpush1.msra.mxu0 %v362
      %526 = vmatprep.subr.mxu0 0.0
      %527 = vmatpush1.msra.mxu0 0.0
      %528 = vmatprep.subr.mxu0 0.0
      %529 = vmatpush1.msra.mxu0 0.0
      %530 = vmatprep.subr.mxu0 0.0
      %531 = vmatpush1.msra.mxu0 0.0
      %532 = vmatprep.subr.mxu0 0.0
      %533 = vmatpush1.msra.mxu0 0.0
      %534 = vmatprep.subr.mxu0 0.0
      %535 = vmatpush1.msra.mxu0 0.0
      %536 = vmatprep.subr.mxu0 0.0
      %537 = vmatpush1.msra.mxu0 0.0
      %538 = vmatprep.subr.mxu0 0.0
      %539 = vmatpush1.msra.mxu0 0.0
      %540 = vmatprep.subr.mxu0 0.0
      %541 = vmatpush1.msra.mxu0 0.0
      %542 = vmatprep.subr.mxu0 0.0
      %543 = vmatpush1.msra.mxu0 0.0
      %544 = vmatprep.subr.mxu0 0.0
      %545 = vmatpush1.msra.mxu0 0.0
      %546 = vmatprep.subr.mxu0 0.0
      %547 = vmatpush1.msra.mxu0 0.0
      %548 = vmatprep.subr.mxu0 0.0
      %549 = vmatpush1.msra.mxu0 0.0
      %550 = vmatprep.subr.mxu0 0.0
      %551 = vmatpush1.msra.mxu0 0.0
      %552 = vmatprep.subr.mxu0 0.0
      %553 = vmatpush1.msra.mxu0 0.0
      %554 = vmatprep.subr.mxu0 0.0
      %555 = vmatpush1.msra.mxu0 0.0
      %556 = vmatprep.subr.mxu0 0.0
      %557 = vmatpush1.msra.mxu0 0.0
      %558 = vmatprep.mubr.f32.mxu0 0.0
      %559 = vmatmul.mubr.f32.gmra.mrb[0].mxu0 %v339
      %v560 = vpop.f32.mrb[0].mxu0
      %v561 = vadd.f32 %v456, %v560
      %v562 = vpop.f32.mrb[0].mxu0
      %563 = vmatprep.mubr.f32.mxu0 0.0
      %564 = vmatmul.mubr.f32.gmra.mrb[0].mxu0 %v340
      %v565 = vpop.f32.mrb[0].mxu0
      %v566 = vadd.f32 %v461, %v565
      %v567 = vpop.f32.mrb[0].mxu0
      %568 = vmatprep.mubr.f32.mxu0 0.0
      %569 = vmatmul.mubr.f32.gmra.mrb[0].mxu0 %v341
      %v570 = vpop.f32.mrb[0].mxu0
      %v571 = vadd.f32 %v466, %v570
      %v572 = vpop.f32.mrb[0].mxu0
      %573 = vmatprep.mubr.f32.mxu0 0.0
      %574 = vmatmul.mubr.f32.gmra.mrb[0].mxu0 %v342
      %v575 = vpop.f32.mrb[0].mxu0
      %v576 = vadd.f32 %v471, %v575
      %v577 = vpop.f32.mrb[0].mxu0
      %578 = vmatprep.mubr.f32.mxu0 0.0
      %579 = vmatmul.mubr.f32.gmra.mrb[0].mxu0 %v343
      %v580 = vpop.f32.mrb[0].mxu0
      %v581 = vadd.f32 %v476, %v580
      %v582 = vpop.f32.mrb[0].mxu0
      %583 = vmatprep.mubr.f32.mxu0 0.0
      %584 = vmatmul.mubr.f32.gmra.mrb[0].mxu0 %v344
      %v585 = vpop.f32.mrb[0].mxu0
      %v586 = vadd.f32 %v481, %v585
      %v587 = vpop.f32.mrb[0].mxu0
      %588 = vmatprep.mubr.f32.mxu0 0.0
      %589 = vmatmul.mubr.f32.gmra.mrb[0].mxu0 %v345
      %v590 = vpop.f32.mrb[0].mxu0
      %v591 = vadd.f32 %v486, %v590
      %v592 = vpop.f32.mrb[0].mxu0
      %593 = vmatprep.mubr.f32.mxu0 0.0
      %594 = vmatmul.mubr.f32.gmra.mrb[0].mxu0 %v346
      %v595 = vpop.f32.mrb[0].mxu0
      %v596 = vadd.f32 %v491, %v595
      %v597 = vpop.f32.mrb[0].mxu0
      %598 = vdwg.mxu0
      %v599 = vld [vmem:[%s308 + $0x1] sm:$0xff]
      %v600 = vld [vmem:[%s308 + $0x11] sm:$0xff]
      %v601 = vld [vmem:[%s308 + $0x21] sm:$0xff]
      %v602 = vld [vmem:[%s308 + $0x31] sm:$0xff]
      %v603 = vld [vmem:[%s308 + $0x41] sm:$0xff]
      %v604 = vld [vmem:[%s308 + $0x51] sm:$0xff]
      %v605 = vld [vmem:[%s308 + $0x61] sm:$0xff]
      %v606 = vld [vmem:[%s308 + $0x71] sm:$0xff]
      %s607 = scalar_lea.vmem %s1, 256
      %v608 = vld [vmem:[%s607] sm:$0xff]
      %v609 = vld [vmem:[%s607 + $0x8] sm:$0xff]
      %v610 = vld [vmem:[%s607 + $0x10] sm:$0xff]
      %v611 = vld [vmem:[%s607 + $0x18] sm:$0xff]
      %v612 = vld [vmem:[%s607 + $0x20] sm:$0xff]
      %v613 = vld [vmem:[%s607 + $0x28] sm:$0xff]
      %v614 = vld [vmem:[%s607 + $0x30] sm:$0xff]
      %v615 = vld [vmem:[%s607 + $0x38] sm:$0xff]
      %v616 = vld [vmem:[%s607 + $0x40] sm:$0xff]
      %v617 = vld [vmem:[%s607 + $0x48] sm:$0xff]
      %v618 = vld [vmem:[%s607 + $0x50] sm:$0xff]
      %v619 = vld [vmem:[%s607 + $0x58] sm:$0xff]
      %v620 = vld [vmem:[%s607 + $0x60] sm:$0xff]
      %v621 = vld [vmem:[%s607 + $0x68] sm:$0xff]
      %v622 = vld [vmem:[%s607 + $0x70] sm:$0xff]
      %v623 = vld [vmem:[%s607 + $0x78] sm:$0xff]
      %624 = vmatprep.subr.mxu0 0.0
      %625 = vmatpush1.msra.mxu0 %v608
      %626 = vmatprep.subr.mxu0 0.0
      %627 = vmatpush1.msra.mxu0 %v609
      %628 = vmatprep.subr.mxu0 0.0
      %629 = vmatpush1.msra.mxu0 %v610
      %630 = vmatprep.subr.mxu0 0.0
      %631 = vmatpush1.msra.mxu0 %v611
      %632 = vmatprep.subr.mxu0 0.0
      %633 = vmatpush1.msra.mxu0 %v612
      %634 = vmatprep.subr.mxu0 0.0
      %635 = vmatpush1.msra.mxu0 %v613
      %636 = vmatprep.subr.mxu0 0.0
      %637 = vmatpush1.msra.mxu0 %v614
      %638 = vmatprep.subr.mxu0 0.0
      %639 = vmatpush1.msra.mxu0 %v615
      %640 = vmatprep.subr.mxu0 0.0
      %641 = vmatpush1.msra.mxu0 %v616
      %642 = vmatprep.subr.mxu0 0.0
      %643 = vmatpush1.msra.mxu0 %v617
      %644 = vmatprep.subr.mxu0 0.0
      %645 = vmatpush1.msra.mxu0 %v618
      %646 = vmatprep.subr.mxu0 0.0
      %647 = vmatpush1.msra.mxu0 %v619
      %648 = vmatprep.subr.mxu0 0.0
      %649 = vmatpush1.msra.mxu0 %v620
      %650 = vmatprep.subr.mxu0 0.0
      %651 = vmatpush1.msra.mxu0 %v621
      %652 = vmatprep.subr.mxu0 0.0
      %653 = vmatpush1.msra.mxu0 %v622
      %654 = vmatprep.subr.mxu0 0.0
      %655 = vmatpush1.msra.mxu0 %v623
      %656 = vmatprep.subr.mxu0 0.0
      %657 = vmatpush1.msra.mxu0 0.0
      %658 = vmatprep.subr.mxu0 0.0
      %659 = vmatpush1.msra.mxu0 0.0
      %660 = vmatprep.subr.mxu0 0.0
      %661 = vmatpush1.msra.mxu0 0.0
      %662 = vmatprep.subr.mxu0 0.0
      %663 = vmatpush1.msra.mxu0 0.0
      %664 = vmatprep.subr.mxu0 0.0
      %665 = vmatpush1.msra.mxu0 0.0
      %666 = vmatprep.subr.mxu0 0.0
      %667 = vmatpush1.msra.mxu0 0.0
      %668 = vmatprep.subr.mxu0 0.0
      %669 = vmatpush1.msra.mxu0 0.0
      %670 = vmatprep.subr.mxu0 0.0
      %671 = vmatpush1.msra.mxu0 0.0
      %672 = vmatprep.subr.mxu0 0.0
      %673 = vmatpush1.msra.mxu0 0.0
      %674 = vmatprep.subr.mxu0 0.0
      %675 = vmatpush1.msra.mxu0 0.0
      %676 = vmatprep.subr.mxu0 0.0
      %677 = vmatpush1.msra.mxu0 0.0
      %678 = vmatprep.subr.mxu0 0.0
      %679 = vmatpush1.msra.mxu0 0.0
      %680 = vmatprep.subr.mxu0 0.0
      %681 = vmatpush1.msra.mxu0 0.0
      %682 = vmatprep.subr.mxu0 0.0
      %683 = vmatpush1.msra.mxu0 0.0
      %684 = vmatprep.subr.mxu0 0.0
      %685 = vmatpush1.msra.mxu0 0.0
      %686 = vmatprep.subr.mxu0 0.0
      %687 = vmatpush1.msra.mxu0 0.0
      %688 = vmatprep.mubr.f32.mxu0 0.0
      %689 = vmatmul.mubr.f32.gmra.mrb[0].mxu0 %v599
      %v690 = vpop.f32.mrb[0].mxu0
      %v691 = vadd.f32 0.0, %v690
      %v692 = vpop.f32.mrb[0].mxu0
      %693 = vmatprep.mubr.f32.mxu0 0.0
      %694 = vmatmul.mubr.f32.gmra.mrb[0].mxu0 %v600
      %v695 = vpop.f32.mrb[0].mxu0
      %v696 = vadd.f32 0.0, %v695
      %v697 = vpop.f32.mrb[0].mxu0
      %698 = vmatprep.mubr.f32.mxu0 0.0
      %699 = vmatmul.mubr.f32.gmra.mrb[0].mxu0 %v601
      %v700 = vpop.f32.mrb[0].mxu0
      %v701 = vadd.f32 0.0, %v700
      %v702 = vpop.f32.mrb[0].mxu0
      %703 = vmatprep.mubr.f32.mxu0 0.0
      %704 = vmatmul.mubr.f32.gmra.mrb[0].mxu0 %v602
      %v705 = vpop.f32.mrb[0].mxu0
      %v706 = vadd.f32 0.0, %v705
      %v707 = vpop.f32.mrb[0].mxu0
      %708 = vmatprep.mubr.f32.mxu0 0.0
      %709 = vmatmul.mubr.f32.gmra.mrb[0].mxu0 %v603
      %v710 = vpop.f32.mrb[0].mxu0
      %v711 = vadd.f32 0.0, %v710
      %v712 = vpop.f32.mrb[0].mxu0
      %713 = vmatprep.mubr.f32.mxu0 0.0
      %714 = vmatmul.mubr.f32.gmra.mrb[0].mxu0 %v604
      %v715 = vpop.f32.mrb[0].mxu0
      %v716 = vadd.f32 0.0, %v715
      %v717 = vpop.f32.mrb[0].mxu0
      %718 = vmatprep.mubr.f32.mxu0 0.0
      %719 = vmatmul.mubr.f32.gmra.mrb[0].mxu0 %v605
      %v720 = vpop.f32.mrb[0].mxu0
      %v721 = vadd.f32 0.0, %v720
      %v722 = vpop.f32.mrb[0].mxu0
      %723 = vmatprep.mubr.f32.mxu0 0.0
      %724 = vmatmul.mubr.f32.gmra.mrb[0].mxu0 %v606
      %v725 = vpop.f32.mrb[0].mxu0
      %v726 = vadd.f32 0.0, %v725
      %v727 = vpop.f32.mrb[0].mxu0
      %728 = vdwg.mxu0
      %v729 = vadd.f32 %v561, %v691
      %v730 = vadd.f32 %v566, %v696
      %v731 = vadd.f32 %v571, %v701
      %v732 = vadd.f32 %v576, %v706
      %v733 = vadd.f32 %v581, %v711
      %v734 = vadd.f32 %v586, %v716
      %v735 = vadd.f32 %v591, %v721
      %v736 = vadd.f32 %v596, %v726
      %s737 = scalar_lea.vmem %s308, 288
      %v738 = vld [vmem:[%s737] sm:$0xff]
      %v739 = vld [vmem:[%s737 + $0x10] sm:$0xff]
      %v740 = vld [vmem:[%s737 + $0x20] sm:$0xff]
      %v741 = vld [vmem:[%s737 + $0x30] sm:$0xff]
      %v742 = vld [vmem:[%s737 + $0x40] sm:$0xff]
      %v743 = vld [vmem:[%s737 + $0x50] sm:$0xff]
      %v744 = vld [vmem:[%s737 + $0x60] sm:$0xff]
      %v745 = vld [vmem:[%s737 + $0x70] sm:$0xff]
      %s746 = scalar_lea.vmem %s1, 384
      %v747 = vld [vmem:[%s746] sm:$0xff]
      %v748 = vld [vmem:[%s746 + $0x8] sm:$0xff]
      %v749 = vld [vmem:[%s746 + $0x10] sm:$0xff]
      %v750 = vld [vmem:[%s746 + $0x18] sm:$0xff]
      %v751 = vld [vmem:[%s746 + $0x20] sm:$0xff]
      %v752 = vld [vmem:[%s746 + $0x28] sm:$0xff]
      %v753 = vld [vmem:[%s746 + $0x30] sm:$0xff]
      %v754 = vld [vmem:[%s746 + $0x38] sm:$0xff]
      %v755 = vld [vmem:[%s746 + $0x40] sm:$0xff]
      %v756 = vld [vmem:[%s746 + $0x48] sm:$0xff]
      %v757 = vld [vmem:[%s746 + $0x50] sm:$0xff]
      %v758 = vld [vmem:[%s746 + $0x58] sm:$0xff]
      %v759 = vld [vmem:[%s746 + $0x60] sm:$0xff]
      %v760 = vld [vmem:[%s746 + $0x68] sm:$0xff]
      %v761 = vld [vmem:[%s746 + $0x70] sm:$0xff]
      %v762 = vld [vmem:[%s746 + $0x78] sm:$0xff]
      %763 = vmatprep.subr.mxu0 0.0
      %764 = vmatpush1.msra.mxu0 %v747
      %765 = vmatprep.subr.mxu0 0.0
      %766 = vmatpush1.msra.mxu0 %v748
      %767 = vmatprep.subr.mxu0 0.0
      %768 = vmatpush1.msra.mxu0 %v749
      %769 = vmatprep.subr.mxu0 0.0
      %770 = vmatpush1.msra.mxu0 %v750
      %771 = vmatprep.subr.mxu0 0.0
      %772 = vmatpush1.msra.mxu0 %v751
      %773 = vmatprep.subr.mxu0 0.0
      %774 = vmatpush1.msra.mxu0 %v752
      %775 = vmatprep.subr.mxu0 0.0
      %776 = vmatpush1.msra.mxu0 %v753
      %777 = vmatprep.subr.mxu0 0.0
      %778 = vmatpush1.msra.mxu0 %v754
      %779 = vmatprep.subr.mxu0 0.0
      %780 = vmatpush1.msra.mxu0 %v755
      %781 = vmatprep.subr.mxu0 0.0
      %782 = vmatpush1.msra.mxu0 %v756
      %783 = vmatprep.subr.mxu0 0.0
      %784 = vmatpush1.msra.mxu0 %v757
      %785 = vmatprep.subr.mxu0 0.0
      %786 = vmatpush1.msra.mxu0 %v758
      %787 = vmatprep.subr.mxu0 0.0
      %788 = vmatpush1.msra.mxu0 %v759
      %789 = vmatprep.subr.mxu0 0.0
      %790 = vmatpush1.msra.mxu0 %v760
      %791 = vmatprep.subr.mxu0 0.0
      %792 = vmatpush1.msra.mxu0 %v761
      %793 = vmatprep.subr.mxu0 0.0
      %794 = vmatpush1.msra.mxu0 %v762
      %795 = vmatprep.subr.mxu0 0.0
      %796 = vmatpush1.msra.mxu0 0.0
      %797 = vmatprep.subr.mxu0 0.0
      %798 = vmatpush1.msra.mxu0 0.0
      %799 = vmatprep.subr.mxu0 0.0
      %800 = vmatpush1.msra.mxu0 0.0
      %801 = vmatprep.subr.mxu0 0.0
      %802 = vmatpush1.msra.mxu0 0.0
      %803 = vmatprep.subr.mxu0 0.0
      %804 = vmatpush1.msra.mxu0 0.0
      %805 = vmatprep.subr.mxu0 0.0
      %806 = vmatpush1.msra.mxu0 0.0
      %807 = vmatprep.subr.mxu0 0.0
      %808 = vmatpush1.msra.mxu0 0.0
      %809 = vmatprep.subr.mxu0 0.0
      %810 = vmatpush1.msra.mxu0 0.0
      %811 = vmatprep.subr.mxu0 0.0
      %812 = vmatpush1.msra.mxu0 0.0
      %813 = vmatprep.subr.mxu0 0.0
      %814 = vmatpush1.msra.mxu0 0.0
      %815 = vmatprep.subr.mxu0 0.0
      %816 = vmatpush1.msra.mxu0 0.0
      %817 = vmatprep.subr.mxu0 0.0
      %818 = vmatpush1.msra.mxu0 0.0
      %819 = vmatprep.subr.mxu0 0.0
      %820 = vmatpush1.msra.mxu0 0.0
      %821 = vmatprep.subr.mxu0 0.0
      %822 = vmatpush1.msra.mxu0 0.0
      %823 = vmatprep.subr.mxu0 0.0
      %824 = vmatpush1.msra.mxu0 0.0
      %825 = vmatprep.subr.mxu0 0.0
      %826 = vmatpush1.msra.mxu0 0.0
      %827 = vmatprep.mubr.f32.mxu0 0.0
      %828 = vmatmul.mubr.f32.gmra.mrb[0].mxu0 %v738
      %v829 = vpop.f32.mrb[0].mxu0
      %v830 = vadd.f32 0.0, %v829
      %v831 = vpop.f32.mrb[0].mxu0
      %832 = vmatprep.mubr.f32.mxu0 0.0
      %833 = vmatmul.mubr.f32.gmra.mrb[0].mxu0 %v739
      %v834 = vpop.f32.mrb[0].mxu0
      %v835 = vadd.f32 0.0, %v834
      %v836 = vpop.f32.mrb[0].mxu0
      %837 = vmatprep.mubr.f32.mxu0 0.0
      %838 = vmatmul.mubr.f32.gmra.mrb[0].mxu0 %v740
      %v839 = vpop.f32.mrb[0].mxu0
      %v840 = vadd.f32 0.0, %v839
      %v841 = vpop.f32.mrb[0].mxu0
      %842 = vmatprep.mubr.f32.mxu0 0.0
      %843 = vmatmul.mubr.f32.gmra.mrb[0].mxu0 %v741
      %v844 = vpop.f32.mrb[0].mxu0
      %v845 = vadd.f32 0.0, %v844
      %v846 = vpop.f32.mrb[0].mxu0
      %847 = vmatprep.mubr.f32.mxu0 0.0
      %848 = vmatmul.mubr.f32.gmra.mrb[0].mxu0 %v742
      %v849 = vpop.f32.mrb[0].mxu0
      %v850 = vadd.f32 0.0, %v849
      %v851 = vpop.f32.mrb[0].mxu0
      %852 = vmatprep.mubr.f32.mxu0 0.0
      %853 = vmatmul.mubr.f32.gmra.mrb[0].mxu0 %v743
      %v854 = vpop.f32.mrb[0].mxu0
      %v855 = vadd.f32 0.0, %v854
      %v856 = vpop.f32.mrb[0].mxu0
      %857 = vmatprep.mubr.f32.mxu0 0.0
      %858 = vmatmul.mubr.f32.gmra.mrb[0].mxu0 %v744
      %v859 = vpop.f32.mrb[0].mxu0
      %v860 = vadd.f32 0.0, %v859
      %v861 = vpop.f32.mrb[0].mxu0
      %862 = vmatprep.mubr.f32.mxu0 0.0
      %863 = vmatmul.mubr.f32.gmra.mrb[0].mxu0 %v745
      %v864 = vpop.f32.mrb[0].mxu0
      %v865 = vadd.f32 0.0, %v864
      %v866 = vpop.f32.mrb[0].mxu0
      %867 = vdwg.mxu0
      %v868 = vadd.f32 %v729, %v830
      %v869 = vadd.f32 %v730, %v835
      %v870 = vadd.f32 %v731, %v840
      %v871 = vadd.f32 %v732, %v845
      %v872 = vadd.f32 %v733, %v850
      %v873 = vadd.f32 %v734, %v855
      %v874 = vadd.f32 %v735, %v860
      %v875 = vadd.f32 %v736, %v865
      %s876 = scalar_lea.vmem %s308, 432
      %v877 = vld [vmem:[%s876] sm:$0xff]
      %v878 = vld [vmem:[%s876 + $0x10] sm:$0xff]
      %v879 = vld [vmem:[%s876 + $0x20] sm:$0xff]
      %v880 = vld [vmem:[%s876 + $0x30] sm:$0xff]
      %v881 = vld [vmem:[%s876 + $0x40] sm:$0xff]
      %v882 = vld [vmem:[%s876 + $0x50] sm:$0xff]
      %v883 = vld [vmem:[%s876 + $0x60] sm:$0xff]
      %v884 = vld [vmem:[%s876 + $0x70] sm:$0xff]
      %s885 = scalar_lea.vmem %s1, 512
      %v886 = vld [vmem:[%s885] sm:$0xff]
      %v887 = vld [vmem:[%s885 + $0x8] sm:$0xff]
      %v888 = vld [vmem:[%s885 + $0x10] sm:$0xff]
      %v889 = vld [vmem:[%s885 + $0x18] sm:$0xff]
      %v890 = vld [vmem:[%s885 + $0x20] sm:$0xff]
      %v891 = vld [vmem:[%s885 + $0x28] sm:$0xff]
      %v892 = vld [vmem:[%s885 + $0x30] sm:$0xff]
      %v893 = vld [vmem:[%s885 + $0x38] sm:$0xff]
      %v894 = vld [vmem:[%s885 + $0x40] sm:$0xff]
      %v895 = vld [vmem:[%s885 + $0x48] sm:$0xff]
      %v896 = vld [vmem:[%s885 + $0x50] sm:$0xff]
      %v897 = vld [vmem:[%s885 + $0x58] sm:$0xff]
      %v898 = vld [vmem:[%s885 + $0x60] sm:$0xff]
      %v899 = vld [vmem:[%s885 + $0x68] sm:$0xff]
      %v900 = vld [vmem:[%s885 + $0x70] sm:$0xff]
      %v901 = vld [vmem:[%s885 + $0x78] sm:$0xff]
      %902 = vmatprep.subr.mxu0 0.0
      %903 = vmatpush1.msra.mxu0 %v886
      %904 = vmatprep.subr.mxu0 0.0
      %905 = vmatpush1.msra.mxu0 %v887
      %906 = vmatprep.subr.mxu0 0.0
      %907 = vmatpush1.msra.mxu0 %v888
      %908 = vmatprep.subr.mxu0 0.0
      %909 = vmatpush1.msra.mxu0 %v889
      %910 = vmatprep.subr.mxu0 0.0
      %911 = vmatpush1.msra.mxu0 %v890
      %912 = vmatprep.subr.mxu0 0.0
      %913 = vmatpush1.msra.mxu0 %v891
      %914 = vmatprep.subr.mxu0 0.0
      %915 = vmatpush1.msra.mxu0 %v892
      %916 = vmatprep.subr.mxu0 0.0
      %917 = vmatpush1.msra.mxu0 %v893
      %918 = vmatprep.subr.mxu0 0.0
      %919 = vmatpush1.msra.mxu0 %v894
      %920 = vmatprep.subr.mxu0 0.0
      %921 = vmatpush1.msra.mxu0 %v895
      %922 = vmatprep.subr.mxu0 0.0
      %923 = vmatpush1.msra.mxu0 %v896
      %924 = vmatprep.subr.mxu0 0.0
      %925 = vmatpush1.msra.mxu0 %v897
      %926 = vmatprep.subr.mxu0 0.0
      %927 = vmatpush1.msra.mxu0 %v898
      %928 = vmatprep.subr.mxu0 0.0
      %929 = vmatpush1.msra.mxu0 %v899
      %930 = vmatprep.subr.mxu0 0.0
      %931 = vmatpush1.msra.mxu0 %v900
      %932 = vmatprep.subr.mxu0 0.0
      %933 = vmatpush1.msra.mxu0 %v901
      %934 = vmatprep.subr.mxu0 0.0
      %935 = vmatpush1.msra.mxu0 0.0
      %936 = vmatprep.subr.mxu0 0.0
      %937 = vmatpush1.msra.mxu0 0.0
      %938 = vmatprep.subr.mxu0 0.0
      %939 = vmatpush1.msra.mxu0 0.0
      %940 = vmatprep.subr.mxu0 0.0
      %941 = vmatpush1.msra.mxu0 0.0
      %942 = vmatprep.subr.mxu0 0.0
      %943 = vmatpush1.msra.mxu0 0.0
      %944 = vmatprep.subr.mxu0 0.0
      %945 = vmatpush1.msra.mxu0 0.0
      %946 = vmatprep.subr.mxu0 0.0
      %947 = vmatpush1.msra.mxu0 0.0
      %948 = vmatprep.subr.mxu0 0.0
      %949 = vmatpush1.msra.mxu0 0.0
      %950 = vmatprep.subr.mxu0 0.0
      %951 = vmatpush1.msra.mxu0 0.0
      %952 = vmatprep.subr.mxu0 0.0
      %953 = vmatpush1.msra.mxu0 0.0
      %954 = vmatprep.subr.mxu0 0.0
      %955 = vmatpush1.msra.mxu0 0.0
      %956 = vmatprep.subr.mxu0 0.0
      %957 = vmatpush1.msra.mxu0 0.0
      %958 = vmatprep.subr.mxu0 0.0
      %959 = vmatpush1.msra.mxu0 0.0
      %960 = vmatprep.subr.mxu0 0.0
      %961 = vmatpush1.msra.mxu0 0.0
      %962 = vmatprep.subr.mxu0 0.0
      %963 = vmatpush1.msra.mxu0 0.0
      %964 = vmatprep.subr.mxu0 0.0
      %965 = vmatpush1.msra.mxu0 0.0
      %966 = vmatprep.mubr.f32.mxu0 0.0
      %967 = vmatmul.mubr.f32.gmra.mrb[0].mxu0 %v877
      %v968 = vpop.f32.mrb[0].mxu0
      %v969 = vadd.f32 0.0, %v968
      %v970 = vpop.f32.mrb[0].mxu0
      %971 = vmatprep.mubr.f32.mxu0 0.0
      %972 = vmatmul.mubr.f32.gmra.mrb[0].mxu0 %v878
      %v973 = vpop.f32.mrb[0].mxu0
      %v974 = vadd.f32 0.0, %v973
      %v975 = vpop.f32.mrb[0].mxu0
      %976 = vmatprep.mubr.f32.mxu0 0.0
      %977 = vmatmul.mubr.f32.gmra.mrb[0].mxu0 %v879
      %v978 = vpop.f32.mrb[0].mxu0
      %v979 = vadd.f32 0.0, %v978
      %v980 = vpop.f32.mrb[0].mxu0
      %981 = vmatprep.mubr.f32.mxu0 0.0
      %982 = vmatmul.mubr.f32.gmra.mrb[0].mxu0 %v880
      %v983 = vpop.f32.mrb[0].mxu0
      %v984 = vadd.f32 0.0, %v983
      %v985 = vpop.f32.mrb[0].mxu0
      %986 = vmatprep.mubr.f32.mxu0 0.0
      %987 = vmatmul.mubr.f32.gmra.mrb[0].mxu0 %v881
      %v988 = vpop.f32.mrb[0].mxu0
      %v989 = vadd.f32 0.0, %v988
      %v990 = vpop.f32.mrb[0].mxu0
      %991 = vmatprep.mubr.f32.mxu0 0.0
      %992 = vmatmul.mubr.f32.gmra.mrb[0].mxu0 %v882
      %v993 = vpop.f32.mrb[0].mxu0
      %v994 = vadd.f32 0.0, %v993
      %v995 = vpop.f32.mrb[0].mxu0
      %996 = vmatprep.mubr.f32.mxu0 0.0
      %997 = vmatmul.mubr.f32.gmra.mrb[0].mxu0 %v883
      %v998 = vpop.f32.mrb[0].mxu0
      %v999 = vadd.f32 0.0, %v998
      %v1000 = vpop.f32.mrb[0].mxu0
      %1001 = vmatprep.mubr.f32.mxu0 0.0
      %1002 = vmatmul.mubr.f32.gmra.mrb[0].mxu0 %v884
      %v1003 = vpop.f32.mrb[0].mxu0
      %v1004 = vadd.f32 0.0, %v1003
      %v1005 = vpop.f32.mrb[0].mxu0
      %1006 = vdwg.mxu0
      %v1007 = vadd.f32 %v868, %v969
      %v1008 = vadd.f32 %v869, %v974
      %v1009 = vadd.f32 %v870, %v979
      %v1010 = vadd.f32 %v871, %v984
      %v1011 = vadd.f32 %v872, %v989
      %v1012 = vadd.f32 %v873, %v994
      %v1013 = vadd.f32 %v874, %v999
      %v1014 = vadd.f32 %v875, %v1004
      %v1015 = vld [vmem:[%s737 + $0x1] sm:$0xff]
      %v1016 = vld [vmem:[%s737 + $0x11] sm:$0xff]
      %v1017 = vld [vmem:[%s737 + $0x21] sm:$0xff]
      %v1018 = vld [vmem:[%s737 + $0x31] sm:$0xff]
      %v1019 = vld [vmem:[%s737 + $0x41] sm:$0xff]
      %v1020 = vld [vmem:[%s737 + $0x51] sm:$0xff]
      %v1021 = vld [vmem:[%s737 + $0x61] sm:$0xff]
      %v1022 = vld [vmem:[%s737 + $0x71] sm:$0xff]
      %s1023 = scalar_lea.vmem %s1, 640
      %v1024 = vld [vmem:[%s1023] sm:$0xff]
      %v1025 = vld [vmem:[%s1023 + $0x8] sm:$0xff]
      %v1026 = vld [vmem:[%s1023 + $0x10] sm:$0xff]
      %v1027 = vld [vmem:[%s1023 + $0x18] sm:$0xff]
      %v1028 = vld [vmem:[%s1023 + $0x20] sm:$0xff]
      %v1029 = vld [vmem:[%s1023 + $0x28] sm:$0xff]
      %v1030 = vld [vmem:[%s1023 + $0x30] sm:$0xff]
      %v1031 = vld [vmem:[%s1023 + $0x38] sm:$0xff]
      %v1032 = vld [vmem:[%s1023 + $0x40] sm:$0xff]
      %v1033 = vld [vmem:[%s1023 + $0x48] sm:$0xff]
      %v1034 = vld [vmem:[%s1023 + $0x50] sm:$0xff]
      %v1035 = vld [vmem:[%s1023 + $0x58] sm:$0xff]
      %v1036 = vld [vmem:[%s1023 + $0x60] sm:$0xff]
      %v1037 = vld [vmem:[%s1023 + $0x68] sm:$0xff]
      %v1038 = vld [vmem:[%s1023 + $0x70] sm:$0xff]
      %v1039 = vld [vmem:[%s1023 + $0x78] sm:$0xff]
      %1040 = vmatprep.subr.mxu0 0.0
      %1041 = vmatpush1.msra.mxu0 %v1024
      %1042 = vmatprep.subr.mxu0 0.0
      %1043 = vmatpush1.msra.mxu0 %v1025
      %1044 = vmatprep.subr.mxu0 0.0
      %1045 = vmatpush1.msra.mxu0 %v1026
      %1046 = vmatprep.subr.mxu0 0.0
      %1047 = vmatpush1.msra.mxu0 %v1027
      %1048 = vmatprep.subr.mxu0 0.0
      %1049 = vmatpush1.msra.mxu0 %v1028
      %1050 = vmatprep.subr.mxu0 0.0
      %1051 = vmatpush1.msra.mxu0 %v1029
      %1052 = vmatprep.subr.mxu0 0.0
      %1053 = vmatpush1.msra.mxu0 %v1030
      %1054 = vmatprep.subr.mxu0 0.0
      %1055 = vmatpush1.msra.mxu0 %v1031
      %1056 = vmatprep.subr.mxu0 0.0
      %1057 = vmatpush1.msra.mxu0 %v1032
      %1058 = vmatprep.subr.mxu0 0.0
      %1059 = vmatpush1.msra.mxu0 %v1033
      %1060 = vmatprep.subr.mxu0 0.0
      %1061 = vmatpush1.msra.mxu0 %v1034
      %1062 = vmatprep.subr.mxu0 0.0
      %1063 = vmatpush1.msra.mxu0 %v1035
      %1064 = vmatprep.subr.mxu0 0.0
      %1065 = vmatpush1.msra.mxu0 %v1036
      %1066 = vmatprep.subr.mxu0 0.0
      %1067 = vmatpush1.msra.mxu0 %v1037
      %1068 = vmatprep.subr.mxu0 0.0
      %1069 = vmatpush1.msra.mxu0 %v1038
      %1070 = vmatprep.subr.mxu0 0.0
      %1071 = vmatpush1.msra.mxu0 %v1039
      %1072 = vmatprep.subr.mxu0 0.0
      %1073 = vmatpush1.msra.mxu0 0.0
      %1074 = vmatprep.subr.mxu0 0.0
      %1075 = vmatpush1.msra.mxu0 0.0
      %1076 = vmatprep.subr.mxu0 0.0
      %1077 = vmatpush1.msra.mxu0 0.0
      %1078 = vmatprep.subr.mxu0 0.0
      %1079 = vmatpush1.msra.mxu0 0.0
      %1080 = vmatprep.subr.mxu0 0.0
      %1081 = vmatpush1.msra.mxu0 0.0
      %1082 = vmatprep.subr.mxu0 0.0
      %1083 = vmatpush1.msra.mxu0 0.0
      %1084 = vmatprep.subr.mxu0 0.0
      %1085 = vmatpush1.msra.mxu0 0.0
      %1086 = vmatprep.subr.mxu0 0.0
      %1087 = vmatpush1.msra.mxu0 0.0
      %1088 = vmatprep.subr.mxu0 0.0
      %1089 = vmatpush1.msra.mxu0 0.0
      %1090 = vmatprep.subr.mxu0 0.0
      %1091 = vmatpush1.msra.mxu0 0.0
      %1092 = vmatprep.subr.mxu0 0.0
      %1093 = vmatpush1.msra.mxu0 0.0
      %1094 = vmatprep.subr.mxu0 0.0
      %1095 = vmatpush1.msra.mxu0 0.0
      %1096 = vmatprep.subr.mxu0 0.0
      %1097 = vmatpush1.msra.mxu0 0.0
      %1098 = vmatprep.subr.mxu0 0.0
      %1099 = vmatpush1.msra.mxu0 0.0
      %1100 = vmatprep.subr.mxu0 0.0
      %1101 = vmatpush1.msra.mxu0 0.0
      %1102 = vmatprep.subr.mxu0 0.0
      %1103 = vmatpush1.msra.mxu0 0.0
      %1104 = vmatprep.mubr.f32.mxu0 0.0
      %1105 = vmatmul.mubr.f32.gmra.mrb[0].mxu0 %v1015
      %v1106 = vpop.f32.mrb[0].mxu0
      %v1107 = vadd.f32 0.0, %v1106
      %v1108 = vpop.f32.mrb[0].mxu0
      %1109 = vmatprep.mubr.f32.mxu0 0.0
      %1110 = vmatmul.mubr.f32.gmra.mrb[0].mxu0 %v1016
      %v1111 = vpop.f32.mrb[0].mxu0
      %v1112 = vadd.f32 0.0, %v1111
      %v1113 = vpop.f32.mrb[0].mxu0
      %1114 = vmatprep.mubr.f32.mxu0 0.0
      %1115 = vmatmul.mubr.f32.gmra.mrb[0].mxu0 %v1017
      %v1116 = vpop.f32.mrb[0].mxu0
      %v1117 = vadd.f32 0.0, %v1116
      %v1118 = vpop.f32.mrb[0].mxu0
      %1119 = vmatprep.mubr.f32.mxu0 0.0
      %1120 = vmatmul.mubr.f32.gmra.mrb[0].mxu0 %v1018
      %v1121 = vpop.f32.mrb[0].mxu0
      %v1122 = vadd.f32 0.0, %v1121
      %v1123 = vpop.f32.mrb[0].mxu0
      %1124 = vmatprep.mubr.f32.mxu0 0.0
      %1125 = vmatmul.mubr.f32.gmra.mrb[0].mxu0 %v1019
      %v1126 = vpop.f32.mrb[0].mxu0
      %v1127 = vadd.f32 0.0, %v1126
      %v1128 = vpop.f32.mrb[0].mxu0
      %1129 = vmatprep.mubr.f32.mxu0 0.0
      %1130 = vmatmul.mubr.f32.gmra.mrb[0].mxu0 %v1020
      %v1131 = vpop.f32.mrb[0].mxu0
      %v1132 = vadd.f32 0.0, %v1131
      %v1133 = vpop.f32.mrb[0].mxu0
      %1134 = vmatprep.mubr.f32.mxu0 0.0
      %1135 = vmatmul.mubr.f32.gmra.mrb[0].mxu0 %v1021
      %v1136 = vpop.f32.mrb[0].mxu0
      %v1137 = vadd.f32 0.0, %v1136
      %v1138 = vpop.f32.mrb[0].mxu0
      %1139 = vmatprep.mubr.f32.mxu0 0.0
      %1140 = vmatmul.mubr.f32.gmra.mrb[0].mxu0 %v1022
      %v1141 = vpop.f32.mrb[0].mxu0
      %v1142 = vadd.f32 0.0, %v1141
      %v1143 = vpop.f32.mrb[0].mxu0
      %1144 = vdwg.mxu0
      %v1145 = vadd.f32 %v1007, %v1107
      %v1146 = vadd.f32 %v1008, %v1112
      %v1147 = vadd.f32 %v1009, %v1117
      %v1148 = vadd.f32 %v1010, %v1122
      %v1149 = vadd.f32 %v1011, %v1127
      %v1150 = vadd.f32 %v1012, %v1132
      %v1151 = vadd.f32 %v1013, %v1137
      %v1152 = vadd.f32 %v1014, %v1142
      %s1153 = scalar_lea.vmem %s308, 16
      %v1154 = vld [vmem:[%s1153] sm:$0xff]
      %v1155 = vld [vmem:[%s1153 + $0x10] sm:$0xff]
      %v1156 = vld [vmem:[%s1153 + $0x20] sm:$0xff]
      %v1157 = vld [vmem:[%s1153 + $0x30] sm:$0xff]
      %v1158 = vld [vmem:[%s1153 + $0x40] sm:$0xff]
      %v1159 = vld [vmem:[%s1153 + $0x50] sm:$0xff]
      %v1160 = vld [vmem:[%s1153 + $0x60] sm:$0xff]
      %v1161 = vld [vmem:[%s1153 + $0x70] sm:$0xff]
      %s1162 = scalar_lea.vmem %s1, 768
      %v1163 = vld [vmem:[%s1162] sm:$0xff]
      %v1164 = vld [vmem:[%s1162 + $0x8] sm:$0xff]
      %v1165 = vld [vmem:[%s1162 + $0x10] sm:$0xff]
      %v1166 = vld [vmem:[%s1162 + $0x18] sm:$0xff]
      %v1167 = vld [vmem:[%s1162 + $0x20] sm:$0xff]
      %v1168 = vld [vmem:[%s1162 + $0x28] sm:$0xff]
      %v1169 = vld [vmem:[%s1162 + $0x30] sm:$0xff]
      %v1170 = vld [vmem:[%s1162 + $0x38] sm:$0xff]
      %v1171 = vld [vmem:[%s1162 + $0x40] sm:$0xff]
      %v1172 = vld [vmem:[%s1162 + $0x48] sm:$0xff]
      %v1173 = vld [vmem:[%s1162 + $0x50] sm:$0xff]
      %v1174 = vld [vmem:[%s1162 + $0x58] sm:$0xff]
      %v1175 = vld [vmem:[%s1162 + $0x60] sm:$0xff]
      %v1176 = vld [vmem:[%s1162 + $0x68] sm:$0xff]
      %v1177 = vld [vmem:[%s1162 + $0x70] sm:$0xff]
      %v1178 = vld [vmem:[%s1162 + $0x78] sm:$0xff]
      %1179 = vmatprep.subr.mxu0 0.0
      %1180 = vmatpush1.msra.mxu0 %v1163
      %1181 = vmatprep.subr.mxu0 0.0
      %1182 = vmatpush1.msra.mxu0 %v1164
      %1183 = vmatprep.subr.mxu0 0.0
      %1184 = vmatpush1.msra.mxu0 %v1165
      %1185 = vmatprep.subr.mxu0 0.0
      %1186 = vmatpush1.msra.mxu0 %v1166
      %1187 = vmatprep.subr.mxu0 0.0
      %1188 = vmatpush1.msra.mxu0 %v1167
      %1189 = vmatprep.subr.mxu0 0.0
      %1190 = vmatpush1.msra.mxu0 %v1168
      %1191 = vmatprep.subr.mxu0 0.0
      %1192 = vmatpush1.msra.mxu0 %v1169
      %1193 = vmatprep.subr.mxu0 0.0
      %1194 = vmatpush1.msra.mxu0 %v1170
      %1195 = vmatprep.subr.mxu0 0.0
      %1196 = vmatpush1.msra.mxu0 %v1171
      %1197 = vmatprep.subr.mxu0 0.0
      %1198 = vmatpush1.msra.mxu0 %v1172
      %1199 = vmatprep.subr.mxu0 0.0
      %1200 = vmatpush1.msra.mxu0 %v1173
      %1201 = vmatprep.subr.mxu0 0.0
      %1202 = vmatpush1.msra.mxu0 %v1174
      %1203 = vmatprep.subr.mxu0 0.0
      %1204 = vmatpush1.msra.mxu0 %v1175
      %1205 = vmatprep.subr.mxu0 0.0
      %1206 = vmatpush1.msra.mxu0 %v1176
      %1207 = vmatprep.subr.mxu0 0.0
      %1208 = vmatpush1.msra.mxu0 %v1177
      %1209 = vmatprep.subr.mxu0 0.0
      %1210 = vmatpush1.msra.mxu0 %v1178
      %1211 = vmatprep.subr.mxu0 0.0
      %1212 = vmatpush1.msra.mxu0 0.0
      %1213 = vmatprep.subr.mxu0 0.0
      %1214 = vmatpush1.msra.mxu0 0.0
      %1215 = vmatprep.subr.mxu0 0.0
      %1216 = vmatpush1.msra.mxu0 0.0
      %1217 = vmatprep.subr.mxu0 0.0
      %1218 = vmatpush1.msra.mxu0 0.0
      %1219 = vmatprep.subr.mxu0 0.0
      %1220 = vmatpush1.msra.mxu0 0.0
      %1221 = vmatprep.subr.mxu0 0.0
      %1222 = vmatpush1.msra.mxu0 0.0
      %1223 = vmatprep.subr.mxu0 0.0
      %1224 = vmatpush1.msra.mxu0 0.0
      %1225 = vmatprep.subr.mxu0 0.0
      %1226 = vmatpush1.msra.mxu0 0.0
      %1227 = vmatprep.subr.mxu0 0.0
      %1228 = vmatpush1.msra.mxu0 0.0
      %1229 = vmatprep.subr.mxu0 0.0
      %1230 = vmatpush1.msra.mxu0 0.0
      %1231 = vmatprep.subr.mxu0 0.0
      %1232 = vmatpush1.msra.mxu0 0.0
      %1233 = vmatprep.subr.mxu0 0.0
      %1234 = vmatpush1.msra.mxu0 0.0
      %1235 = vmatprep.subr.mxu0 0.0
      %1236 = vmatpush1.msra.mxu0 0.0
      %1237 = vmatprep.subr.mxu0 0.0
      %1238 = vmatpush1.msra.mxu0 0.0
      %1239 = vmatprep.subr.mxu0 0.0
      %1240 = vmatpush1.msra.mxu0 0.0
      %1241 = vmatprep.subr.mxu0 0.0
      %1242 = vmatpush1.msra.mxu0 0.0
      %1243 = vmatprep.mubr.f32.mxu0 0.0
      %1244 = vmatmul.mubr.f32.gmra.mrb[0].mxu0 %v1154
      %v1245 = vpop.f32.mrb[0].mxu0
      %v1246 = vadd.f32 0.0, %v1245
      %v1247 = vpop.f32.mrb[0].mxu0
      %1248 = vmatprep.mubr.f32.mxu0 0.0
      %1249 = vmatmul.mubr.f32.gmra.mrb[0].mxu0 %v1155
      %v1250 = vpop.f32.mrb[0].mxu0
      %v1251 = vadd.f32 0.0, %v1250
      %v1252 = vpop.f32.mrb[0].mxu0
      %1253 = vmatprep.mubr.f32.mxu0 0.0
      %1254 = vmatmul.mubr.f32.gmra.mrb[0].mxu0 %v1156
      %v1255 = vpop.f32.mrb[0].mxu0
      %v1256 = vadd.f32 0.0, %v1255
      %v1257 = vpop.f32.mrb[0].mxu0
      %1258 = vmatprep.mubr.f32.mxu0 0.0
      %1259 = vmatmul.mubr.f32.gmra.mrb[0].mxu0 %v1157
      %v1260 = vpop.f32.mrb[0].mxu0
      %v1261 = vadd.f32 0.0, %v1260
      %v1262 = vpop.f32.mrb[0].mxu0
      %1263 = vmatprep.mubr.f32.mxu0 0.0
      %1264 = vmatmul.mubr.f32.gmra.mrb[0].mxu0 %v1158
      %v1265 = vpop.f32.mrb[0].mxu0
      %v1266 = vadd.f32 0.0, %v1265
      %v1267 = vpop.f32.mrb[0].mxu0
      %1268 = vmatprep.mubr.f32.mxu0 0.0
      %1269 = vmatmul.mubr.f32.gmra.mrb[0].mxu0 %v1159
      %v1270 = vpop.f32.mrb[0].mxu0
      %v1271 = vadd.f32 0.0, %v1270
      %v1272 = vpop.f32.mrb[0].mxu0
      %1273 = vmatprep.mubr.f32.mxu0 0.0
      %1274 = vmatmul.mubr.f32.gmra.mrb[0].mxu0 %v1160
      %v1275 = vpop.f32.mrb[0].mxu0
      %v1276 = vadd.f32 0.0, %v1275
      %v1277 = vpop.f32.mrb[0].mxu0
      %1278 = vmatprep.mubr.f32.mxu0 0.0
      %1279 = vmatmul.mubr.f32.gmra.mrb[0].mxu0 %v1161
      %v1280 = vpop.f32.mrb[0].mxu0
      %v1281 = vadd.f32 0.0, %v1280
      %v1282 = vpop.f32.mrb[0].mxu0
      %1283 = vdwg.mxu0
      %v1284 = vadd.f32 %v1145, %v1246
      %v1285 = vadd.f32 %v1146, %v1251
      %v1286 = vadd.f32 %v1147, %v1256
      %v1287 = vadd.f32 %v1148, %v1261
      %v1288 = vadd.f32 %v1149, %v1266
      %v1289 = vadd.f32 %v1150, %v1271
      %v1290 = vadd.f32 %v1151, %v1276
      %v1291 = vadd.f32 %v1152, %v1281
      %s1292 = scalar_lea.vmem %s308, 160
      %v1293 = vld [vmem:[%s1292] sm:$0xff]
      %v1294 = vld [vmem:[%s1292 + $0x10] sm:$0xff]
      %v1295 = vld [vmem:[%s1292 + $0x20] sm:$0xff]
      %v1296 = vld [vmem:[%s1292 + $0x30] sm:$0xff]
      %v1297 = vld [vmem:[%s1292 + $0x40] sm:$0xff]
      %v1298 = vld [vmem:[%s1292 + $0x50] sm:$0xff]
      %v1299 = vld [vmem:[%s1292 + $0x60] sm:$0xff]
      %v1300 = vld [vmem:[%s1292 + $0x70] sm:$0xff]
      %s1301 = scalar_lea.vmem %s1, 896
      %v1302 = vld [vmem:[%s1301] sm:$0xff]
      %v1303 = vld [vmem:[%s1301 + $0x8] sm:$0xff]
      %v1304 = vld [vmem:[%s1301 + $0x10] sm:$0xff]
      %v1305 = vld [vmem:[%s1301 + $0x18] sm:$0xff]
      %v1306 = vld [vmem:[%s1301 + $0x20] sm:$0xff]
      %v1307 = vld [vmem:[%s1301 + $0x28] sm:$0xff]
      %v1308 = vld [vmem:[%s1301 + $0x30] sm:$0xff]
      %v1309 = vld [vmem:[%s1301 + $0x38] sm:$0xff]
      %v1310 = vld [vmem:[%s1301 + $0x40] sm:$0xff]
      %v1311 = vld [vmem:[%s1301 + $0x48] sm:$0xff]
      %v1312 = vld [vmem:[%s1301 + $0x50] sm:$0xff]
      %v1313 = vld [vmem:[%s1301 + $0x58] sm:$0xff]
      %v1314 = vld [vmem:[%s1301 + $0x60] sm:$0xff]
      %v1315 = vld [vmem:[%s1301 + $0x68] sm:$0xff]
      %v1316 = vld [vmem:[%s1301 + $0x70] sm:$0xff]
      %v1317 = vld [vmem:[%s1301 + $0x78] sm:$0xff]
      %1318 = vmatprep.subr.mxu0 0.0
      %1319 = vmatpush1.msra.mxu0 %v1302
      %1320 = vmatprep.subr.mxu0 0.0
      %1321 = vmatpush1.msra.mxu0 %v1303
      %1322 = vmatprep.subr.mxu0 0.0
      %1323 = vmatpush1.msra.mxu0 %v1304
      %1324 = vmatprep.subr.mxu0 0.0
      %1325 = vmatpush1.msra.mxu0 %v1305
      %1326 = vmatprep.subr.mxu0 0.0
      %1327 = vmatpush1.msra.mxu0 %v1306
      %1328 = vmatprep.subr.mxu0 0.0
      %1329 = vmatpush1.msra.mxu0 %v1307
      %1330 = vmatprep.subr.mxu0 0.0
      %1331 = vmatpush1.msra.mxu0 %v1308
      %1332 = vmatprep.subr.mxu0 0.0
      %1333 = vmatpush1.msra.mxu0 %v1309
      %1334 = vmatprep.subr.mxu0 0.0
      %1335 = vmatpush1.msra.mxu0 %v1310
      %1336 = vmatprep.subr.mxu0 0.0
      %1337 = vmatpush1.msra.mxu0 %v1311
      %1338 = vmatprep.subr.mxu0 0.0
      %1339 = vmatpush1.msra.mxu0 %v1312
      %1340 = vmatprep.subr.mxu0 0.0
      %1341 = vmatpush1.msra.mxu0 %v1313
      %1342 = vmatprep.subr.mxu0 0.0
      %1343 = vmatpush1.msra.mxu0 %v1314
      %1344 = vmatprep.subr.mxu0 0.0
      %1345 = vmatpush1.msra.mxu0 %v1315
      %1346 = vmatprep.subr.mxu0 0.0
      %1347 = vmatpush1.msra.mxu0 %v1316
      %1348 = vmatprep.subr.mxu0 0.0
      %1349 = vmatpush1.msra.mxu0 %v1317
      %1350 = vmatprep.subr.mxu0 0.0
      %1351 = vmatpush1.msra.mxu0 0.0
      %1352 = vmatprep.subr.mxu0 0.0
      %1353 = vmatpush1.msra.mxu0 0.0
      %1354 = vmatprep.subr.mxu0 0.0
      %1355 = vmatpush1.msra.mxu0 0.0
      %1356 = vmatprep.subr.mxu0 0.0
      %1357 = vmatpush1.msra.mxu0 0.0
      %1358 = vmatprep.subr.mxu0 0.0
      %1359 = vmatpush1.msra.mxu0 0.0
      %1360 = vmatprep.subr.mxu0 0.0
      %1361 = vmatpush1.msra.mxu0 0.0
      %1362 = vmatprep.subr.mxu0 0.0
      %1363 = vmatpush1.msra.mxu0 0.0
      %1364 = vmatprep.subr.mxu0 0.0
      %1365 = vmatpush1.msra.mxu0 0.0
      %1366 = vmatprep.subr.mxu0 0.0
      %1367 = vmatpush1.msra.mxu0 0.0
      %1368 = vmatprep.subr.mxu0 0.0
      %1369 = vmatpush1.msra.mxu0 0.0
      %1370 = vmatprep.subr.mxu0 0.0
      %1371 = vmatpush1.msra.mxu0 0.0
      %1372 = vmatprep.subr.mxu0 0.0
      %1373 = vmatpush1.msra.mxu0 0.0
      %1374 = vmatprep.subr.mxu0 0.0
      %1375 = vmatpush1.msra.mxu0 0.0
      %1376 = vmatprep.subr.mxu0 0.0
      %1377 = vmatpush1.msra.mxu0 0.0
      %1378 = vmatprep.subr.mxu0 0.0
      %1379 = vmatpush1.msra.mxu0 0.0
      %1380 = vmatprep.subr.mxu0 0.0
      %1381 = vmatpush1.msra.mxu0 0.0
      %1382 = vmatprep.mubr.f32.mxu0 0.0
      %1383 = vmatmul.mubr.f32.gmra.mrb[0].mxu0 %v1293
      %v1384 = vpop.f32.mrb[0].mxu0
      %v1385 = vadd.f32 0.0, %v1384
      %v1386 = vpop.f32.mrb[0].mxu0
      %1387 = vmatprep.mubr.f32.mxu0 0.0
      %1388 = vmatmul.mubr.f32.gmra.mrb[0].mxu0 %v1294
      %v1389 = vpop.f32.mrb[0].mxu0
      %v1390 = vadd.f32 0.0, %v1389
      %v1391 = vpop.f32.mrb[0].mxu0
      %1392 = vmatprep.mubr.f32.mxu0 0.0
      %1393 = vmatmul.mubr.f32.gmra.mrb[0].mxu0 %v1295
      %v1394 = vpop.f32.mrb[0].mxu0
      %v1395 = vadd.f32 0.0, %v1394
      %v1396 = vpop.f32.mrb[0].mxu0
      %1397 = vmatprep.mubr.f32.mxu0 0.0
      %1398 = vmatmul.mubr.f32.gmra.mrb[0].mxu0 %v1296
      %v1399 = vpop.f32.mrb[0].mxu0
      %v1400 = vadd.f32 0.0, %v1399
      %v1401 = vpop.f32.mrb[0].mxu0
      %1402 = vmatprep.mubr.f32.mxu0 0.0
      %1403 = vmatmul.mubr.f32.gmra.mrb[0].mxu0 %v1297
      %v1404 = vpop.f32.mrb[0].mxu0
      %v1405 = vadd.f32 0.0, %v1404
      %v1406 = vpop.f32.mrb[0].mxu0
      %1407 = vmatprep.mubr.f32.mxu0 0.0
      %1408 = vmatmul.mubr.f32.gmra.mrb[0].mxu0 %v1298
      %v1409 = vpop.f32.mrb[0].mxu0
      %v1410 = vadd.f32 0.0, %v1409
      %v1411 = vpop.f32.mrb[0].mxu0
      %1412 = vmatprep.mubr.f32.mxu0 0.0
      %1413 = vmatmul.mubr.f32.gmra.mrb[0].mxu0 %v1299
      %v1414 = vpop.f32.mrb[0].mxu0
      %v1415 = vadd.f32 0.0, %v1414
      %v1416 = vpop.f32.mrb[0].mxu0
      %1417 = vmatprep.mubr.f32.mxu0 0.0
      %1418 = vmatmul.mubr.f32.gmra.mrb[0].mxu0 %v1300
      %v1419 = vpop.f32.mrb[0].mxu0
      %v1420 = vadd.f32 0.0, %v1419
      %v1421 = vpop.f32.mrb[0].mxu0
      %1422 = vdwg.mxu0
      %v1423 = vadd.f32 %v1284, %v1385
      %v1424 = vadd.f32 %v1285, %v1390
      %v1425 = vadd.f32 %v1286, %v1395
      %v1426 = vadd.f32 %v1287, %v1400
      %v1427 = vadd.f32 %v1288, %v1405
      %v1428 = vadd.f32 %v1289, %v1410
      %v1429 = vadd.f32 %v1290, %v1415
      %v1430 = vadd.f32 %v1291, %v1420
      %v1431 = vld [vmem:[%s1153 + $0x1] sm:$0xff]
      %v1432 = vld [vmem:[%s1153 + $0x11] sm:$0xff]
      %v1433 = vld [vmem:[%s1153 + $0x21] sm:$0xff]
      %v1434 = vld [vmem:[%s1153 + $0x31] sm:$0xff]
      %v1435 = vld [vmem:[%s1153 + $0x41] sm:$0xff]
      %v1436 = vld [vmem:[%s1153 + $0x51] sm:$0xff]
      %v1437 = vld [vmem:[%s1153 + $0x61] sm:$0xff]
      %v1438 = vld [vmem:[%s1153 + $0x71] sm:$0xff]
      %s1439 = scalar_lea.vmem %s1, 1024
      %v1440 = vld [vmem:[%s1439] sm:$0xff]
      %v1441 = vld [vmem:[%s1439 + $0x8] sm:$0xff]
      %v1442 = vld [vmem:[%s1439 + $0x10] sm:$0xff]
      %v1443 = vld [vmem:[%s1439 + $0x18] sm:$0xff]
      %v1444 = vld [vmem:[%s1439 + $0x20] sm:$0xff]
      %v1445 = vld [vmem:[%s1439 + $0x28] sm:$0xff]
      %v1446 = vld [vmem:[%s1439 + $0x30] sm:$0xff]
      %v1447 = vld [vmem:[%s1439 + $0x38] sm:$0xff]
      %v1448 = vld [vmem:[%s1439 + $0x40] sm:$0xff]
      %v1449 = vld [vmem:[%s1439 + $0x48] sm:$0xff]
      %v1450 = vld [vmem:[%s1439 + $0x50] sm:$0xff]
      %v1451 = vld [vmem:[%s1439 + $0x58] sm:$0xff]
      %v1452 = vld [vmem:[%s1439 + $0x60] sm:$0xff]
      %v1453 = vld [vmem:[%s1439 + $0x68] sm:$0xff]
      %v1454 = vld [vmem:[%s1439 + $0x70] sm:$0xff]
      %v1455 = vld [vmem:[%s1439 + $0x78] sm:$0xff]
      %1456 = vmatprep.subr.mxu0 0.0
      %1457 = vmatpush1.msra.mxu0 %v1440
      %1458 = vmatprep.subr.mxu0 0.0
      %1459 = vmatpush1.msra.mxu0 %v1441
      %1460 = vmatprep.subr.mxu0 0.0
      %1461 = vmatpush1.msra.mxu0 %v1442
      %1462 = vmatprep.subr.mxu0 0.0
      %1463 = vmatpush1.msra.mxu0 %v1443
      %1464 = vmatprep.subr.mxu0 0.0
      %1465 = vmatpush1.msra.mxu0 %v1444
      %1466 = vmatprep.subr.mxu0 0.0
      %1467 = vmatpush1.msra.mxu0 %v1445
      %1468 = vmatprep.subr.mxu0 0.0
      %1469 = vmatpush1.msra.mxu0 %v1446
      %1470 = vmatprep.subr.mxu0 0.0
      %1471 = vmatpush1.msra.mxu0 %v1447
      %1472 = vmatprep.subr.mxu0 0.0
      %1473 = vmatpush1.msra.mxu0 %v1448
      %1474 = vmatprep.subr.mxu0 0.0
      %1475 = vmatpush1.msra.mxu0 %v1449
      %1476 = vmatprep.subr.mxu0 0.0
      %1477 = vmatpush1.msra.mxu0 %v1450
      %1478 = vmatprep.subr.mxu0 0.0
      %1479 = vmatpush1.msra.mxu0 %v1451
      %1480 = vmatprep.subr.mxu0 0.0
      %1481 = vmatpush1.msra.mxu0 %v1452
      %1482 = vmatprep.subr.mxu0 0.0
      %1483 = vmatpush1.msra.mxu0 %v1453
      %1484 = vmatprep.subr.mxu0 0.0
      %1485 = vmatpush1.msra.mxu0 %v1454
      %1486 = vmatprep.subr.mxu0 0.0
      %1487 = vmatpush1.msra.mxu0 %v1455
      %1488 = vmatprep.subr.mxu0 0.0
      %1489 = vmatpush1.msra.mxu0 0.0
      %1490 = vmatprep.subr.mxu0 0.0
      %1491 = vmatpush1.msra.mxu0 0.0
      %1492 = vmatprep.subr.mxu0 0.0
      %1493 = vmatpush1.msra.mxu0 0.0
      %1494 = vmatprep.subr.mxu0 0.0
      %1495 = vmatpush1.msra.mxu0 0.0
      %1496 = vmatprep.subr.mxu0 0.0
      %1497 = vmatpush1.msra.mxu0 0.0
      %1498 = vmatprep.subr.mxu0 0.0
      %1499 = vmatpush1.msra.mxu0 0.0
      %1500 = vmatprep.subr.mxu0 0.0
      %1501 = vmatpush1.msra.mxu0 0.0
      %1502 = vmatprep.subr.mxu0 0.0
      %1503 = vmatpush1.msra.mxu0 0.0
      %1504 = vmatprep.subr.mxu0 0.0
      %1505 = vmatpush1.msra.mxu0 0.0
      %1506 = vmatprep.subr.mxu0 0.0
      %1507 = vmatpush1.msra.mxu0 0.0
      %1508 = vmatprep.subr.mxu0 0.0
      %1509 = vmatpush1.msra.mxu0 0.0
      %1510 = vmatprep.subr.mxu0 0.0
      %1511 = vmatpush1.msra.mxu0 0.0
      %1512 = vmatprep.subr.mxu0 0.0
      %1513 = vmatpush1.msra.mxu0 0.0
      %1514 = vmatprep.subr.mxu0 0.0
      %1515 = vmatpush1.msra.mxu0 0.0
      %1516 = vmatprep.subr.mxu0 0.0
      %1517 = vmatpush1.msra.mxu0 0.0
      %1518 = vmatprep.subr.mxu0 0.0
      %1519 = vmatpush1.msra.mxu0 0.0
      %1520 = vmatprep.mubr.f32.mxu0 0.0
      %1521 = vmatmul.mubr.f32.gmra.mrb[0].mxu0 %v1431
      %v1522 = vpop.f32.mrb[0].mxu0
      %v1523 = vadd.f32 0.0, %v1522
      %v1524 = vpop.f32.mrb[0].mxu0
      %1525 = vmatprep.mubr.f32.mxu0 0.0
      %1526 = vmatmul.mubr.f32.gmra.mrb[0].mxu0 %v1432
      %v1527 = vpop.f32.mrb[0].mxu0
      %v1528 = vadd.f32 0.0, %v1527
      %v1529 = vpop.f32.mrb[0].mxu0
      %1530 = vmatprep.mubr.f32.mxu0 0.0
      %1531 = vmatmul.mubr.f32.gmra.mrb[0].mxu0 %v1433
      %v1532 = vpop.f32.mrb[0].mxu0
      %v1533 = vadd.f32 0.0, %v1532
      %v1534 = vpop.f32.mrb[0].mxu0
      %1535 = vmatprep.mubr.f32.mxu0 0.0
      %1536 = vmatmul.mubr.f32.gmra.mrb[0].mxu0 %v1434
      %v1537 = vpop.f32.mrb[0].mxu0
      %v1538 = vadd.f32 0.0, %v1537
      %v1539 = vpop.f32.mrb[0].mxu0
      %1540 = vmatprep.mubr.f32.mxu0 0.0
      %1541 = vmatmul.mubr.f32.gmra.mrb[0].mxu0 %v1435
      %v1542 = vpop.f32.mrb[0].mxu0
      %v1543 = vadd.f32 0.0, %v1542
      %v1544 = vpop.f32.mrb[0].mxu0
      %1545 = vmatprep.mubr.f32.mxu0 0.0
      %1546 = vmatmul.mubr.f32.gmra.mrb[0].mxu0 %v1436
      %v1547 = vpop.f32.mrb[0].mxu0
      %v1548 = vadd.f32 0.0, %v1547
      %v1549 = vpop.f32.mrb[0].mxu0
      %1550 = vmatprep.mubr.f32.mxu0 0.0
      %1551 = vmatmul.mubr.f32.gmra.mrb[0].mxu0 %v1437
      %v1552 = vpop.f32.mrb[0].mxu0
      %v1553 = vadd.f32 0.0, %v1552
      %v1554 = vpop.f32.mrb[0].mxu0
      %1555 = vmatprep.mubr.f32.mxu0 0.0
      %1556 = vmatmul.mubr.f32.gmra.mrb[0].mxu0 %v1438
      %v1557 = vpop.f32.mrb[0].mxu0
      %v1558 = vadd.f32 0.0, %v1557
      %v1559 = vpop.f32.mrb[0].mxu0
      %1560 = vdwg.mxu0
      %v1561 = vadd.f32 %v1423, %v1523
      %v1562 = vadd.f32 %v1424, %v1528
      %v1563 = vadd.f32 %v1425, %v1533
      %v1564 = vadd.f32 %v1426, %v1538
      %v1565 = vadd.f32 %v1427, %v1543
      %v1566 = vadd.f32 %v1428, %v1548
      %v1567 = vadd.f32 %v1429, %v1553
      %v1568 = vadd.f32 %v1430, %v1558
      %v1569 = vld [vmem:[%s2] sm:$0x1]
      %v1571 = vlaneseq
      %v1572 = vshrl.u32 %v1571, 7
      %v1573 = vsub.s32 0, %v1572
      %v1574 = vrot.slane %v1569, %v1573
      %v1576 = vadd.f32 %v1561, %v1574
      %v1577 = vadd.f32 %v1562, %v1574
      %v1578 = vadd.f32 %v1563, %v1574
      %v1579 = vadd.f32 %v1564, %v1574
      %v1580 = vadd.f32 %v1565, %v1574
      %v1581 = vadd.f32 %v1566, %v1574
      %v1582 = vadd.f32 %v1567, %v1574
      %v1583 = vadd.f32 %v1568, %v1574
      %vm1584 = vcmp.gt.f32.partialorder %v1576, 0.0
      %vm1585 = vcmp.gt.f32.partialorder %v1577, 0.0
      %vm1586 = vcmp.gt.f32.partialorder %v1578, 0.0
      %vm1587 = vcmp.gt.f32.partialorder %v1579, 0.0
      %vm1588 = vcmp.gt.f32.partialorder %v1580, 0.0
      %vm1589 = vcmp.gt.f32.partialorder %v1581, 0.0
      %vm1590 = vcmp.gt.f32.partialorder %v1582, 0.0
      %vm1591 = vcmp.gt.f32.partialorder %v1583, 0.0
      %v1592 = vmin.f32 %v1576, 0.0
      %v1593 = vmin.f32 %v1577, 0.0
      %v1594 = vmin.f32 %v1578, 0.0
      %v1595 = vmin.f32 %v1579, 0.0
      %v1596 = vmin.f32 %v1580, 0.0
      %v1597 = vmin.f32 %v1581, 0.0
      %v1598 = vmin.f32 %v1582, 0.0
      %v1599 = vmin.f32 %v1583, 0.0
      %v1600 = vmul.f32 %v1592, 1.442695
      %v1601 = vpow.pop %v1600
      %v1602 = vmul.f32 %v1593, 1.442695
      %v1603 = vpow.pop %v1602
      %v1604 = vmul.f32 %v1594, 1.442695
      %v1605 = vpow.pop %v1604
      %v1606 = vmul.f32 %v1595, 1.442695
      %v1607 = vpow.pop %v1606
      %v1608 = vmul.f32 %v1596, 1.442695
      %v1609 = vpow.pop %v1608
      %v1610 = vmul.f32 %v1597, 1.442695
      %v1611 = vpow.pop %v1610
      %v1612 = vmul.f32 %v1598, 1.442695
      %v1613 = vpow.pop %v1612
      %v1614 = vmul.f32 %v1599, 1.442695
      %v1615 = vpow.pop %v1614
      %v1616 = vsub.f32 %v1601, 1.0
      %v1617 = vsub.f32 %v1603, 1.0
      %v1618 = vsub.f32 %v1605, 1.0
      %v1619 = vsub.f32 %v1607, 1.0
      %v1620 = vsub.f32 %v1609, 1.0
      %v1621 = vsub.f32 %v1611, 1.0
      %v1622 = vsub.f32 %v1613, 1.0
      %v1623 = vsub.f32 %v1615, 1.0
      %v1624 = vsel %vm1584, %v1576, %v1616
      %v1625 = vsel %vm1585, %v1577, %v1617
      %v1626 = vsel %vm1586, %v1578, %v1618
      %v1627 = vsel %vm1587, %v1579, %v1619
      %v1628 = vsel %vm1588, %v1580, %v1620
      %v1629 = vsel %vm1589, %v1581, %v1621
      %v1630 = vsel %vm1590, %v1582, %v1622
      %v1631 = vsel %vm1591, %v1583, %v1623
      %s1632 = scalar_lea.vmem [#allocation2], 16
      %1633 = vst [vmem:[%s1632 + $0x1] sm:$0xff] %v1624
      %1634 = vst [vmem:[%s1632 + $0x11] sm:$0xff] %v1625
      %1635 = vst [vmem:[%s1632 + $0x21] sm:$0xff] %v1626
      %1636 = vst [vmem:[%s1632 + $0x31] sm:$0xff] %v1627
      %1637 = vst [vmem:[%s1632 + $0x41] sm:$0xff] %v1628
      %1638 = vst [vmem:[%s1632 + $0x51] sm:$0xff] %v1629
      %1639 = vst [vmem:[%s1632 + $0x61] sm:$0xff] %v1630
      %1640 = vst [vmem:[%s1632 + $0x71] sm:$0xff] %v1631
      %v1641 = vld [vmem:[#allocation2] sm:$0xff]
      %v1642 = vld [vmem:[#allocation2 + $0x10] sm:$0xff]
      %v1643 = vld [vmem:[#allocation2 + $0x20] sm:$0xff]
      %v1644 = vld [vmem:[#allocation2 + $0x30] sm:$0xff]
      %v1645 = vld [vmem:[#allocation2 + $0x40] sm:$0xff]
      %v1646 = vld [vmem:[#allocation2 + $0x50] sm:$0xff]
      %v1647 = vld [vmem:[#allocation2 + $0x60] sm:$0xff]
      %v1648 = vld [vmem:[#allocation2 + $0x70] sm:$0xff]
      %v1649 = vld [vmem:[%s3] sm:$0xff]
      %v1650 = vld [vmem:[%s3 + $0x8] sm:$0xff]
      %v1651 = vld [vmem:[%s3 + $0x10] sm:$0xff]
      %v1652 = vld [vmem:[%s3 + $0x18] sm:$0xff]
      %v1653 = vld [vmem:[%s3 + $0x20] sm:$0xff]
      %v1654 = vld [vmem:[%s3 + $0x28] sm:$0xff]
      %v1655 = vld [vmem:[%s3 + $0x30] sm:$0xff]
      %v1656 = vld [vmem:[%s3 + $0x38] sm:$0xff]
      %v1657 = vld [vmem:[%s3 + $0x40] sm:$0xff]
      %v1658 = vld [vmem:[%s3 + $0x48] sm:$0xff]
      %v1659 = vld [vmem:[%s3 + $0x50] sm:$0xff]
      %v1660 = vld [vmem:[%s3 + $0x58] sm:$0xff]
      %v1661 = vld [vmem:[%s3 + $0x60] sm:$0xff]
      %v1662 = vld [vmem:[%s3 + $0x68] sm:$0xff]
      %v1663 = vld [vmem:[%s3 + $0x70] sm:$0xff]
      %v1664 = vld [vmem:[%s3 + $0x78] sm:$0xff]
      %v1665 = vld [vmem:[#allocation2 + $0x1] sm:$0xff]
      %v1666 = vld [vmem:[#allocation2 + $0x11] sm:$0xff]
      %v1667 = vld [vmem:[#allocation2 + $0x21] sm:$0xff]
      %v1668 = vld [vmem:[#allocation2 + $0x31] sm:$0xff]
      %v1669 = vld [vmem:[#allocation2 + $0x41] sm:$0xff]
      %v1670 = vld [vmem:[#allocation2 + $0x51] sm:$0xff]
      %v1671 = vld [vmem:[#allocation2 + $0x61] sm:$0xff]
      %v1672 = vld [vmem:[#allocation2 + $0x71] sm:$0xff]
      %s1673 = scalar_lea.vmem %s3, 128
      %v1674 = vld [vmem:[%s1673] sm:$0xff]
      %v1675 = vld [vmem:[%s1673 + $0x8] sm:$0xff]
      %v1676 = vld [vmem:[%s1673 + $0x10] sm:$0xff]
      %v1677 = vld [vmem:[%s1673 + $0x18] sm:$0xff]
      %v1678 = vld [vmem:[%s1673 + $0x20] sm:$0xff]
      %v1679 = vld [vmem:[%s1673 + $0x28] sm:$0xff]
      %v1680 = vld [vmem:[%s1673 + $0x30] sm:$0xff]
      %v1681 = vld [vmem:[%s1673 + $0x38] sm:$0xff]
      %v1682 = vld [vmem:[%s1673 + $0x40] sm:$0xff]
      %v1683 = vld [vmem:[%s1673 + $0x48] sm:$0xff]
      %v1684 = vld [vmem:[%s1673 + $0x50] sm:$0xff]
      %v1685 = vld [vmem:[%s1673 + $0x58] sm:$0xff]
      %v1686 = vld [vmem:[%s1673 + $0x60] sm:$0xff]
      %v1687 = vld [vmem:[%s1673 + $0x68] sm:$0xff]
      %v1688 = vld [vmem:[%s1673 + $0x70] sm:$0xff]
      %v1689 = vld [vmem:[%s1673 + $0x78] sm:$0xff]
      %1690 = vmatprep.subr.mxu0 0.0
      %1691 = vmatpush1.msra.mxu0 %v1674
      %1692 = vmatprep.subr.mxu0 0.0
      %1693 = vmatpush1.msra.mxu0 %v1675
      %1694 = vmatprep.subr.mxu0 0.0
      %1695 = vmatpush1.msra.mxu0 %v1676
      %1696 = vmatprep.subr.mxu0 0.0
      %1697 = vmatpush1.msra.mxu0 %v1677
      %1698 = vmatprep.subr.mxu0 0.0
      %1699 = vmatpush1.msra.mxu0 %v1678
      %1700 = vmatprep.subr.mxu0 0.0
      %1701 = vmatpush1.msra.mxu0 %v1679
      %1702 = vmatprep.subr.mxu0 0.0
      %1703 = vmatpush1.msra.mxu0 %v1680
      %1704 = vmatprep.subr.mxu0 0.0
      %1705 = vmatpush1.msra.mxu0 %v1681
      %1706 = vmatprep.subr.mxu0 0.0
      %1707 = vmatpush1.msra.mxu0 %v1682
      %1708 = vmatprep.subr.mxu0 0.0
      %1709 = vmatpush1.msra.mxu0 %v1683
      %1710 = vmatprep.subr.mxu0 0.0
      %1711 = vmatpush1.msra.mxu0 %v1684
      %1712 = vmatprep.subr.mxu0 0.0
      %1713 = vmatpush1.msra.mxu0 %v1685
      %1714 = vmatprep.subr.mxu0 0.0
      %1715 = vmatpush1.msra.mxu0 %v1686
      %1716 = vmatprep.subr.mxu0 0.0
      %1717 = vmatpush1.msra.mxu0 %v1687
      %1718 = vmatprep.subr.mxu0 0.0
      %1719 = vmatpush1.msra.mxu0 %v1688
      %1720 = vmatprep.subr.mxu0 0.0
      %1721 = vmatpush1.msra.mxu0 %v1689
      %1722 = vmatprep.subr.mxu0 0.0
      %1723 = vmatpush1.msra.mxu0 0.0
      %1724 = vmatprep.subr.mxu0 0.0
      %1725 = vmatpush1.msra.mxu0 0.0
      %1726 = vmatprep.subr.mxu0 0.0
      %1727 = vmatpush1.msra.mxu0 0.0
      %1728 = vmatprep.subr.mxu0 0.0
      %1729 = vmatpush1.msra.mxu0 0.0
      %1730 = vmatprep.subr.mxu0 0.0
      %1731 = vmatpush1.msra.mxu0 0.0
      %1732 = vmatprep.subr.mxu0 0.0
      %1733 = vmatpush1.msra.mxu0 0.0
      %1734 = vmatprep.subr.mxu0 0.0
      %1735 = vmatpush1.msra.mxu0 0.0
      %1736 = vmatprep.subr.mxu0 0.0
      %1737 = vmatpush1.msra.mxu0 0.0
      %1738 = vmatprep.subr.mxu0 0.0
      %1739 = vmatpush1.msra.mxu0 0.0
      %1740 = vmatprep.subr.mxu0 0.0
      %1741 = vmatpush1.msra.mxu0 0.0
      %1742 = vmatprep.subr.mxu0 0.0
      %1743 = vmatpush1.msra.mxu0 0.0
      %1744 = vmatprep.subr.mxu0 0.0
      %1745 = vmatpush1.msra.mxu0 0.0
      %1746 = vmatprep.subr.mxu0 0.0
      %1747 = vmatpush1.msra.mxu0 0.0
      %1748 = vmatprep.subr.mxu0 0.0
      %1749 = vmatpush1.msra.mxu0 0.0
      %1750 = vmatprep.subr.mxu0 0.0
      %1751 = vmatpush1.msra.mxu0 0.0
      %1752 = vmatprep.subr.mxu0 0.0
      %1753 = vmatpush1.msra.mxu0 0.0
      %1754 = vmatprep.mubr.f32.mxu0 0.0
      %1755 = vmatmul.mubr.f32.gmra.mrb[0].mxu0 %v1665
      %v1756 = vpop.f32.mrb[0].mxu0
      %v1757 = vadd.f32 0.0, %v1756
      %v1758 = vpop.f32.mrb[0].mxu0
      %1759 = vmatprep.mubr.f32.mxu0 0.0
      %1760 = vmatmul.mubr.f32.gmra.mrb[0].mxu0 %v1666
      %v1761 = vpop.f32.mrb[0].mxu0
      %v1762 = vadd.f32 0.0, %v1761
      %v1763 = vpop.f32.mrb[0].mxu0
      %1764 = vmatprep.mubr.f32.mxu0 0.0
      %1765 = vmatmul.mubr.f32.gmra.mrb[0].mxu0 %v1667
      %v1766 = vpop.f32.mrb[0].mxu0
      %v1767 = vadd.f32 0.0, %v1766
      %v1768 = vpop.f32.mrb[0].mxu0
      %1769 = vmatprep.mubr.f32.mxu0 0.0
      %1770 = vmatmul.mubr.f32.gmra.mrb[0].mxu0 %v1668
      %v1771 = vpop.f32.mrb[0].mxu0
      %v1772 = vadd.f32 0.0, %v1771
      %v1773 = vpop.f32.mrb[0].mxu0
      %1774 = vmatprep.mubr.f32.mxu0 0.0
      %1775 = vmatmul.mubr.f32.gmra.mrb[0].mxu0 %v1669
      %v1776 = vpop.f32.mrb[0].mxu0
      %v1777 = vadd.f32 0.0, %v1776
      %v1778 = vpop.f32.mrb[0].mxu0
      %1779 = vmatprep.mubr.f32.mxu0 0.0
      %1780 = vmatmul.mubr.f32.gmra.mrb[0].mxu0 %v1670
      %v1781 = vpop.f32.mrb[0].mxu0
      %v1782 = vadd.f32 0.0, %v1781
      %v1783 = vpop.f32.mrb[0].mxu0
      %1784 = vmatprep.mubr.f32.mxu0 0.0
      %1785 = vmatmul.mubr.f32.gmra.mrb[0].mxu0 %v1671
      %v1786 = vpop.f32.mrb[0].mxu0
      %v1787 = vadd.f32 0.0, %v1786
      %v1788 = vpop.f32.mrb[0].mxu0
      %1789 = vmatprep.mubr.f32.mxu0 0.0
      %1790 = vmatmul.mubr.f32.gmra.mrb[0].mxu0 %v1672
      %v1791 = vpop.f32.mrb[0].mxu0
      %v1792 = vadd.f32 0.0, %v1791
      %v1793 = vpop.f32.mrb[0].mxu0
      %1794 = vdwg.mxu0
      %1795 = vmatprep.subr.mxu0 0.0
      %1796 = vmatpush1.msra.mxu0 %v1649
      %1797 = vmatprep.subr.mxu0 0.0
      %1798 = vmatpush1.msra.mxu0 %v1650
      %1799 = vmatprep.subr.mxu0 0.0
      %1800 = vmatpush1.msra.mxu0 %v1651
      %1801 = vmatprep.subr.mxu0 0.0
      %1802 = vmatpush1.msra.mxu0 %v1652
      %1803 = vmatprep.subr.mxu0 0.0
      %1804 = vmatpush1.msra.mxu0 %v1653
      %1805 = vmatprep.subr.mxu0 0.0
      %1806 = vmatpush1.msra.mxu0 %v1654
      %1807 = vmatprep.subr.mxu0 0.0
      %1808 = vmatpush1.msra.mxu0 %v1655
      %1809 = vmatprep.subr.mxu0 0.0
      %1810 = vmatpush1.msra.mxu0 %v1656
      %1811 = vmatprep.subr.mxu0 0.0
      %1812 = vmatpush1.msra.mxu0 %v1657
      %1813 = vmatprep.subr.mxu0 0.0
      %1814 = vmatpush1.msra.mxu0 %v1658
      %1815 = vmatprep.subr.mxu0 0.0
      %1816 = vmatpush1.msra.mxu0 %v1659
      %1817 = vmatprep.subr.mxu0 0.0
      %1818 = vmatpush1.msra.mxu0 %v1660
      %1819 = vmatprep.subr.mxu0 0.0
      %1820 = vmatpush1.msra.mxu0 %v1661
      %1821 = vmatprep.subr.mxu0 0.0
      %1822 = vmatpush1.msra.mxu0 %v1662
      %1823 = vmatprep.subr.mxu0 0.0
      %1824 = vmatpush1.msra.mxu0 %v1663
      %1825 = vmatprep.subr.mxu0 0.0
      %1826 = vmatpush1.msra.mxu0 %v1664
      %1827 = vmatprep.subr.mxu0 0.0
      %1828 = vmatpush1.msra.mxu0 0.0
      %1829 = vmatprep.subr.mxu0 0.0
      %1830 = vmatpush1.msra.mxu0 0.0
      %1831 = vmatprep.subr.mxu0 0.0
      %1832 = vmatpush1.msra.mxu0 0.0
      %1833 = vmatprep.subr.mxu0 0.0
      %1834 = vmatpush1.msra.mxu0 0.0
      %1835 = vmatprep.subr.mxu0 0.0
      %1836 = vmatpush1.msra.mxu0 0.0
      %1837 = vmatprep.subr.mxu0 0.0
      %1838 = vmatpush1.msra.mxu0 0.0
      %1839 = vmatprep.subr.mxu0 0.0
      %1840 = vmatpush1.msra.mxu0 0.0
      %1841 = vmatprep.subr.mxu0 0.0
      %1842 = vmatpush1.msra.mxu0 0.0
      %1843 = vmatprep.subr.mxu0 0.0
      %1844 = vmatpush1.msra.mxu0 0.0
      %1845 = vmatprep.subr.mxu0 0.0
      %1846 = vmatpush1.msra.mxu0 0.0
      %1847 = vmatprep.subr.mxu0 0.0
      %1848 = vmatpush1.msra.mxu0 0.0
      %1849 = vmatprep.subr.mxu0 0.0
      %1850 = vmatpush1.msra.mxu0 0.0
      %1851 = vmatprep.subr.mxu0 0.0
      %1852 = vmatpush1.msra.mxu0 0.0
      %1853 = vmatprep.subr.mxu0 0.0
      %1854 = vmatpush1.msra.mxu0 0.0
      %1855 = vmatprep.subr.mxu0 0.0
      %1856 = vmatpush1.msra.mxu0 0.0
      %1857 = vmatprep.subr.mxu0 0.0
      %1858 = vmatpush1.msra.mxu0 0.0
      %1859 = vmatprep.mubr.f32.mxu0 0.0
      %1860 = vmatmul.mubr.f32.gmra.mrb[0].mxu0 %v1641
      %v1861 = vpop.f32.mrb[0].mxu0
      %v1862 = vadd.f32 %v1757, %v1861
      %v1863 = vpop.f32.mrb[0].mxu0
      %1864 = vmatprep.mubr.f32.mxu0 0.0
      %1865 = vmatmul.mubr.f32.gmra.mrb[0].mxu0 %v1642
      %v1866 = vpop.f32.mrb[0].mxu0
      %v1867 = vadd.f32 %v1762, %v1866
      %v1868 = vpop.f32.mrb[0].mxu0
      %1869 = vmatprep.mubr.f32.mxu0 0.0
      %1870 = vmatmul.mubr.f32.gmra.mrb[0].mxu0 %v1643
      %v1871 = vpop.f32.mrb[0].mxu0
      %v1872 = vadd.f32 %v1767, %v1871
      %v1873 = vpop.f32.mrb[0].mxu0
      %1874 = vmatprep.mubr.f32.mxu0 0.0
      %1875 = vmatmul.mubr.f32.gmra.mrb[0].mxu0 %v1644
      %v1876 = vpop.f32.mrb[0].mxu0
      %v1877 = vadd.f32 %v1772, %v1876
      %v1878 = vpop.f32.mrb[0].mxu0
      %1879 = vmatprep.mubr.f32.mxu0 0.0
      %1880 = vmatmul.mubr.f32.gmra.mrb[0].mxu0 %v1645
      %v1881 = vpop.f32.mrb[0].mxu0
      %v1882 = vadd.f32 %v1777, %v1881
      %v1883 = vpop.f32.mrb[0].mxu0
      %1884 = vmatprep.mubr.f32.mxu0 0.0
      %1885 = vmatmul.mubr.f32.gmra.mrb[0].mxu0 %v1646
      %v1886 = vpop.f32.mrb[0].mxu0
      %v1887 = vadd.f32 %v1782, %v1886
      %v1888 = vpop.f32.mrb[0].mxu0
      %1889 = vmatprep.mubr.f32.mxu0 0.0
      %1890 = vmatmul.mubr.f32.gmra.mrb[0].mxu0 %v1647
      %v1891 = vpop.f32.mrb[0].mxu0
      %v1892 = vadd.f32 %v1787, %v1891
      %v1893 = vpop.f32.mrb[0].mxu0
      %1894 = vmatprep.mubr.f32.mxu0 0.0
      %1895 = vmatmul.mubr.f32.gmra.mrb[0].mxu0 %v1648
      %v1896 = vpop.f32.mrb[0].mxu0
      %v1897 = vadd.f32 %v1792, %v1896
      %v1898 = vpop.f32.mrb[0].mxu0
      %1899 = vdwg.mxu0
      %v1900 = vld [vmem:[#allocation2 + $0x2] sm:$0xff]
      %v1901 = vld [vmem:[#allocation2 + $0x12] sm:$0xff]
      %v1902 = vld [vmem:[#allocation2 + $0x22] sm:$0xff]
      %v1903 = vld [vmem:[#allocation2 + $0x32] sm:$0xff]
      %v1904 = vld [vmem:[#allocation2 + $0x42] sm:$0xff]
      %v1905 = vld [vmem:[#allocation2 + $0x52] sm:$0xff]
      %v1906 = vld [vmem:[#allocation2 + $0x62] sm:$0xff]
      %v1907 = vld [vmem:[#allocation2 + $0x72] sm:$0xff]
      %s1908 = scalar_lea.vmem %s3, 256
      %v1909 = vld [vmem:[%s1908] sm:$0xff]
      %v1910 = vld [vmem:[%s1908 + $0x8] sm:$0xff]
      %v1911 = vld [vmem:[%s1908 + $0x10] sm:$0xff]
      %v1912 = vld [vmem:[%s1908 + $0x18] sm:$0xff]
      %v1913 = vld [vmem:[%s1908 + $0x20] sm:$0xff]
      %v1914 = vld [vmem:[%s1908 + $0x28] sm:$0xff]
      %v1915 = vld [vmem:[%s1908 + $0x30] sm:$0xff]
      %v1916 = vld [vmem:[%s1908 + $0x38] sm:$0xff]
      %v1917 = vld [vmem:[%s1908 + $0x40] sm:$0xff]
      %v1918 = vld [vmem:[%s1908 + $0x48] sm:$0xff]
      %v1919 = vld [vmem:[%s1908 + $0x50] sm:$0xff]
      %v1920 = vld [vmem:[%s1908 + $0x58] sm:$0xff]
      %v1921 = vld [vmem:[%s1908 + $0x60] sm:$0xff]
      %v1922 = vld [vmem:[%s1908 + $0x68] sm:$0xff]
      %v1923 = vld [vmem:[%s1908 + $0x70] sm:$0xff]
      %v1924 = vld [vmem:[%s1908 + $0x78] sm:$0xff]
      %1925 = vmatprep.subr.mxu0 0.0
      %1926 = vmatpush1.msra.mxu0 %v1909
      %1927 = vmatprep.subr.mxu0 0.0
      %1928 = vmatpush1.msra.mxu0 %v1910
      %1929 = vmatprep.subr.mxu0 0.0
      %1930 = vmatpush1.msra.mxu0 %v1911
      %1931 = vmatprep.subr.mxu0 0.0
      %1932 = vmatpush1.msra.mxu0 %v1912
      %1933 = vmatprep.subr.mxu0 0.0
      %1934 = vmatpush1.msra.mxu0 %v1913
      %1935 = vmatprep.subr.mxu0 0.0
      %1936 = vmatpush1.msra.mxu0 %v1914
      %1937 = vmatprep.subr.mxu0 0.0
      %1938 = vmatpush1.msra.mxu0 %v1915
      %1939 = vmatprep.subr.mxu0 0.0
      %1940 = vmatpush1.msra.mxu0 %v1916
      %1941 = vmatprep.subr.mxu0 0.0
      %1942 = vmatpush1.msra.mxu0 %v1917
      %1943 = vmatprep.subr.mxu0 0.0
      %1944 = vmatpush1.msra.mxu0 %v1918
      %1945 = vmatprep.subr.mxu0 0.0
      %1946 = vmatpush1.msra.mxu0 %v1919
      %1947 = vmatprep.subr.mxu0 0.0
      %1948 = vmatpush1.msra.mxu0 %v1920
      %1949 = vmatprep.subr.mxu0 0.0
      %1950 = vmatpush1.msra.mxu0 %v1921
      %1951 = vmatprep.subr.mxu0 0.0
      %1952 = vmatpush1.msra.mxu0 %v1922
      %1953 = vmatprep.subr.mxu0 0.0
      %1954 = vmatpush1.msra.mxu0 %v1923
      %1955 = vmatprep.subr.mxu0 0.0
      %1956 = vmatpush1.msra.mxu0 %v1924
      %1957 = vmatprep.subr.mxu0 0.0
      %1958 = vmatpush1.msra.mxu0 0.0
      %1959 = vmatprep.subr.mxu0 0.0
      %1960 = vmatpush1.msra.mxu0 0.0
      %1961 = vmatprep.subr.mxu0 0.0
      %1962 = vmatpush1.msra.mxu0 0.0
      %1963 = vmatprep.subr.mxu0 0.0
      %1964 = vmatpush1.msra.mxu0 0.0
      %1965 = vmatprep.subr.mxu0 0.0
      %1966 = vmatpush1.msra.mxu0 0.0
      %1967 = vmatprep.subr.mxu0 0.0
      %1968 = vmatpush1.msra.mxu0 0.0
      %1969 = vmatprep.subr.mxu0 0.0
      %1970 = vmatpush1.msra.mxu0 0.0
      %1971 = vmatprep.subr.mxu0 0.0
      %1972 = vmatpush1.msra.mxu0 0.0
      %1973 = vmatprep.subr.mxu0 0.0
      %1974 = vmatpush1.msra.mxu0 0.0
      %1975 = vmatprep.subr.mxu0 0.0
      %1976 = vmatpush1.msra.mxu0 0.0
      %1977 = vmatprep.subr.mxu0 0.0
      %1978 = vmatpush1.msra.mxu0 0.0
      %1979 = vmatprep.subr.mxu0 0.0
      %1980 = vmatpush1.msra.mxu0 0.0
      %1981 = vmatprep.subr.mxu0 0.0
      %1982 = vmatpush1.msra.mxu0 0.0
      %1983 = vmatprep.subr.mxu0 0.0
      %1984 = vmatpush1.msra.mxu0 0.0
      %1985 = vmatprep.subr.mxu0 0.0
      %1986 = vmatpush1.msra.mxu0 0.0
      %1987 = vmatprep.subr.mxu0 0.0
      %1988 = vmatpush1.msra.mxu0 0.0
      %1989 = vmatprep.mubr.f32.mxu0 0.0
      %1990 = vmatmul.mubr.f32.gmra.mrb[0].mxu0 %v1900
      %v1991 = vpop.f32.mrb[0].mxu0
      %v1992 = vadd.f32 0.0, %v1991
      %v1993 = vpop.f32.mrb[0].mxu0
      %1994 = vmatprep.mubr.f32.mxu0 0.0
      %1995 = vmatmul.mubr.f32.gmra.mrb[0].mxu0 %v1901
      %v1996 = vpop.f32.mrb[0].mxu0
      %v1997 = vadd.f32 0.0, %v1996
      %v1998 = vpop.f32.mrb[0].mxu0
      %1999 = vmatprep.mubr.f32.mxu0 0.0
      %2000 = vmatmul.mubr.f32.gmra.mrb[0].mxu0 %v1902
      %v2001 = vpop.f32.mrb[0].mxu0
      %v2002 = vadd.f32 0.0, %v2001
      %v2003 = vpop.f32.mrb[0].mxu0
      %2004 = vmatprep.mubr.f32.mxu0 0.0
      %2005 = vmatmul.mubr.f32.gmra.mrb[0].mxu0 %v1903
      %v2006 = vpop.f32.mrb[0].mxu0
      %v2007 = vadd.f32 0.0, %v2006
      %v2008 = vpop.f32.mrb[0].mxu0
      %2009 = vmatprep.mubr.f32.mxu0 0.0
      %2010 = vmatmul.mubr.f32.gmra.mrb[0].mxu0 %v1904
      %v2011 = vpop.f32.mrb[0].mxu0
      %v2012 = vadd.f32 0.0, %v2011
      %v2013 = vpop.f32.mrb[0].mxu0
      %2014 = vmatprep.mubr.f32.mxu0 0.0
      %2015 = vmatmul.mubr.f32.gmra.mrb[0].mxu0 %v1905
      %v2016 = vpop.f32.mrb[0].mxu0
      %v2017 = vadd.f32 0.0, %v2016
      %v2018 = vpop.f32.mrb[0].mxu0
      %2019 = vmatprep.mubr.f32.mxu0 0.0
      %2020 = vmatmul.mubr.f32.gmra.mrb[0].mxu0 %v1906
      %v2021 = vpop.f32.mrb[0].mxu0
      %v2022 = vadd.f32 0.0, %v2021
      %v2023 = vpop.f32.mrb[0].mxu0
      %2024 = vmatprep.mubr.f32.mxu0 0.0
      %2025 = vmatmul.mubr.f32.gmra.mrb[0].mxu0 %v1907
      %v2026 = vpop.f32.mrb[0].mxu0
      %v2027 = vadd.f32 0.0, %v2026
      %v2028 = vpop.f32.mrb[0].mxu0
      %2029 = vdwg.mxu0
      %v2030 = vadd.f32 %v1862, %v1992
      %v2031 = vadd.f32 %v1867, %v1997
      %v2032 = vadd.f32 %v1872, %v2002
      %v2033 = vadd.f32 %v1877, %v2007
      %v2034 = vadd.f32 %v1882, %v2012
      %v2035 = vadd.f32 %v1887, %v2017
      %v2036 = vadd.f32 %v1892, %v2022
      %v2037 = vadd.f32 %v1897, %v2027
      %v2038 = vld [vmem:[%s1632] sm:$0xff]
      %v2039 = vld [vmem:[%s1632 + $0x10] sm:$0xff]
      %v2040 = vld [vmem:[%s1632 + $0x20] sm:$0xff]
      %v2041 = vld [vmem:[%s1632 + $0x30] sm:$0xff]
      %v2042 = vld [vmem:[%s1632 + $0x40] sm:$0xff]
      %v2043 = vld [vmem:[%s1632 + $0x50] sm:$0xff]
      %v2044 = vld [vmem:[%s1632 + $0x60] sm:$0xff]
      %v2045 = vld [vmem:[%s1632 + $0x70] sm:$0xff]
      %s2046 = scalar_lea.vmem %s3, 384
      %v2047 = vld [vmem:[%s2046] sm:$0xff]
      %v2048 = vld [vmem:[%s2046 + $0x8] sm:$0xff]
      %v2049 = vld [vmem:[%s2046 + $0x10] sm:$0xff]
      %v2050 = vld [vmem:[%s2046 + $0x18] sm:$0xff]
      %v2051 = vld [vmem:[%s2046 + $0x20] sm:$0xff]
      %v2052 = vld [vmem:[%s2046 + $0x28] sm:$0xff]
      %v2053 = vld [vmem:[%s2046 + $0x30] sm:$0xff]
      %v2054 = vld [vmem:[%s2046 + $0x38] sm:$0xff]
      %v2055 = vld [vmem:[%s2046 + $0x40] sm:$0xff]
      %v2056 = vld [vmem:[%s2046 + $0x48] sm:$0xff]
      %v2057 = vld [vmem:[%s2046 + $0x50] sm:$0xff]
      %v2058 = vld [vmem:[%s2046 + $0x58] sm:$0xff]
      %v2059 = vld [vmem:[%s2046 + $0x60] sm:$0xff]
      %v2060 = vld [vmem:[%s2046 + $0x68] sm:$0xff]
      %v2061 = vld [vmem:[%s2046 + $0x70] sm:$0xff]
      %v2062 = vld [vmem:[%s2046 + $0x78] sm:$0xff]
      %2063 = vmatprep.subr.mxu0 0.0
      %2064 = vmatpush1.msra.mxu0 %v2047
      %2065 = vmatprep.subr.mxu0 0.0
      %2066 = vmatpush1.msra.mxu0 %v2048
      %2067 = vmatprep.subr.mxu0 0.0
      %2068 = vmatpush1.msra.mxu0 %v2049
      %2069 = vmatprep.subr.mxu0 0.0
      %2070 = vmatpush1.msra.mxu0 %v2050
      %2071 = vmatprep.subr.mxu0 0.0
      %2072 = vmatpush1.msra.mxu0 %v2051
      %2073 = vmatprep.subr.mxu0 0.0
      %2074 = vmatpush1.msra.mxu0 %v2052
      %2075 = vmatprep.subr.mxu0 0.0
      %2076 = vmatpush1.msra.mxu0 %v2053
      %2077 = vmatprep.subr.mxu0 0.0
      %2078 = vmatpush1.msra.mxu0 %v2054
      %2079 = vmatprep.subr.mxu0 0.0
      %2080 = vmatpush1.msra.mxu0 %v2055
      %2081 = vmatprep.subr.mxu0 0.0
      %2082 = vmatpush1.msra.mxu0 %v2056
      %2083 = vmatprep.subr.mxu0 0.0
      %2084 = vmatpush1.msra.mxu0 %v2057
      %2085 = vmatprep.subr.mxu0 0.0
      %2086 = vmatpush1.msra.mxu0 %v2058
      %2087 = vmatprep.subr.mxu0 0.0
      %2088 = vmatpush1.msra.mxu0 %v2059
      %2089 = vmatprep.subr.mxu0 0.0
      %2090 = vmatpush1.msra.mxu0 %v2060
      %2091 = vmatprep.subr.mxu0 0.0
      %2092 = vmatpush1.msra.mxu0 %v2061
      %2093 = vmatprep.subr.mxu0 0.0
      %2094 = vmatpush1.msra.mxu0 %v2062
      %2095 = vmatprep.subr.mxu0 0.0
      %2096 = vmatpush1.msra.mxu0 0.0
      %2097 = vmatprep.subr.mxu0 0.0
      %2098 = vmatpush1.msra.mxu0 0.0
      %2099 = vmatprep.subr.mxu0 0.0
      %2100 = vmatpush1.msra.mxu0 0.0
      %2101 = vmatprep.subr.mxu0 0.0
      %2102 = vmatpush1.msra.mxu0 0.0
      %2103 = vmatprep.subr.mxu0 0.0
      %2104 = vmatpush1.msra.mxu0 0.0
      %2105 = vmatprep.subr.mxu0 0.0
      %2106 = vmatpush1.msra.mxu0 0.0
      %2107 = vmatprep.subr.mxu0 0.0
      %2108 = vmatpush1.msra.mxu0 0.0
      %2109 = vmatprep.subr.mxu0 0.0
      %2110 = vmatpush1.msra.mxu0 0.0
      %2111 = vmatprep.subr.mxu0 0.0
      %2112 = vmatpush1.msra.mxu0 0.0
      %2113 = vmatprep.subr.mxu0 0.0
      %2114 = vmatpush1.msra.mxu0 0.0
      %2115 = vmatprep.subr.mxu0 0.0
      %2116 = vmatpush1.msra.mxu0 0.0
      %2117 = vmatprep.subr.mxu0 0.0
      %2118 = vmatpush1.msra.mxu0 0.0
      %2119 = vmatprep.subr.mxu0 0.0
      %2120 = vmatpush1.msra.mxu0 0.0
      %2121 = vmatprep.subr.mxu0 0.0
      %2122 = vmatpush1.msra.mxu0 0.0
      %2123 = vmatprep.subr.mxu0 0.0
      %2124 = vmatpush1.msra.mxu0 0.0
      %2125 = vmatprep.subr.mxu0 0.0
      %2126 = vmatpush1.msra.mxu0 0.0
      %2127 = vmatprep.mubr.f32.mxu0 0.0
      %2128 = vmatmul.mubr.f32.gmra.mrb[0].mxu0 %v2038
      %v2129 = vpop.f32.mrb[0].mxu0
      %v2130 = vadd.f32 0.0, %v2129
      %v2131 = vpop.f32.mrb[0].mxu0
      %2132 = vmatprep.mubr.f32.mxu0 0.0
      %2133 = vmatmul.mubr.f32.gmra.mrb[0].mxu0 %v2039
      %v2134 = vpop.f32.mrb[0].mxu0
      %v2135 = vadd.f32 0.0, %v2134
      %v2136 = vpop.f32.mrb[0].mxu0
      %2137 = vmatprep.mubr.f32.mxu0 0.0
      %2138 = vmatmul.mubr.f32.gmra.mrb[0].mxu0 %v2040
      %v2139 = vpop.f32.mrb[0].mxu0
      %v2140 = vadd.f32 0.0, %v2139
      %v2141 = vpop.f32.mrb[0].mxu0
      %2142 = vmatprep.mubr.f32.mxu0 0.0
      %2143 = vmatmul.mubr.f32.gmra.mrb[0].mxu0 %v2041
      %v2144 = vpop.f32.mrb[0].mxu0
      %v2145 = vadd.f32 0.0, %v2144
      %v2146 = vpop.f32.mrb[0].mxu0
      %2147 = vmatprep.mubr.f32.mxu0 0.0
      %2148 = vmatmul.mubr.f32.gmra.mrb[0].mxu0 %v2042
      %v2149 = vpop.f32.mrb[0].mxu0
      %v2150 = vadd.f32 0.0, %v2149
      %v2151 = vpop.f32.mrb[0].mxu0
      %2152 = vmatprep.mubr.f32.mxu0 0.0
      %2153 = vmatmul.mubr.f32.gmra.mrb[0].mxu0 %v2043
      %v2154 = vpop.f32.mrb[0].mxu0
      %v2155 = vadd.f32 0.0, %v2154
      %v2156 = vpop.f32.mrb[0].mxu0
      %2157 = vmatprep.mubr.f32.mxu0 0.0
      %2158 = vmatmul.mubr.f32.gmra.mrb[0].mxu0 %v2044
      %v2159 = vpop.f32.mrb[0].mxu0
      %v2160 = vadd.f32 0.0, %v2159
      %v2161 = vpop.f32.mrb[0].mxu0
      %2162 = vmatprep.mubr.f32.mxu0 0.0
      %2163 = vmatmul.mubr.f32.gmra.mrb[0].mxu0 %v2045
      %v2164 = vpop.f32.mrb[0].mxu0
      %v2165 = vadd.f32 0.0, %v2164
      %v2166 = vpop.f32.mrb[0].mxu0
      %2167 = vdwg.mxu0
      %v2168 = vadd.f32 %v2030, %v2130
      %v2169 = vadd.f32 %v2031, %v2135
      %v2170 = vadd.f32 %v2032, %v2140
      %v2171 = vadd.f32 %v2033, %v2145
      %v2172 = vadd.f32 %v2034, %v2150
      %v2173 = vadd.f32 %v2035, %v2155
      %v2174 = vadd.f32 %v2036, %v2160
      %v2175 = vadd.f32 %v2037, %v2165
      %v2176 = vld [vmem:[%s1632 + $0x1] sm:$0xff]
      %v2177 = vld [vmem:[%s1632 + $0x11] sm:$0xff]
      %v2178 = vld [vmem:[%s1632 + $0x21] sm:$0xff]
      %v2179 = vld [vmem:[%s1632 + $0x31] sm:$0xff]
      %v2180 = vld [vmem:[%s1632 + $0x41] sm:$0xff]
      %v2181 = vld [vmem:[%s1632 + $0x51] sm:$0xff]
      %v2182 = vld [vmem:[%s1632 + $0x61] sm:$0xff]
      %v2183 = vld [vmem:[%s1632 + $0x71] sm:$0xff]
      %s2184 = scalar_lea.vmem %s3, 512
      %v2185 = vld [vmem:[%s2184] sm:$0xff]
      %v2186 = vld [vmem:[%s2184 + $0x8] sm:$0xff]
      %v2187 = vld [vmem:[%s2184 + $0x10] sm:$0xff]
      %v2188 = vld [vmem:[%s2184 + $0x18] sm:$0xff]
      %v2189 = vld [vmem:[%s2184 + $0x20] sm:$0xff]
      %v2190 = vld [vmem:[%s2184 + $0x28] sm:$0xff]
      %v2191 = vld [vmem:[%s2184 + $0x30] sm:$0xff]
      %v2192 = vld [vmem:[%s2184 + $0x38] sm:$0xff]
      %v2193 = vld [vmem:[%s2184 + $0x40] sm:$0xff]
      %v2194 = vld [vmem:[%s2184 + $0x48] sm:$0xff]
      %v2195 = vld [vmem:[%s2184 + $0x50] sm:$0xff]
      %v2196 = vld [vmem:[%s2184 + $0x58] sm:$0xff]
      %v2197 = vld [vmem:[%s2184 + $0x60] sm:$0xff]
      %v2198 = vld [vmem:[%s2184 + $0x68] sm:$0xff]
      %v2199 = vld [vmem:[%s2184 + $0x70] sm:$0xff]
      %v2200 = vld [vmem:[%s2184 + $0x78] sm:$0xff]
      %2201 = vmatprep.subr.mxu0 0.0
      %2202 = vmatpush1.msra.mxu0 %v2185
      %2203 = vmatprep.subr.mxu0 0.0
      %2204 = vmatpush1.msra.mxu0 %v2186
      %2205 = vmatprep.subr.mxu0 0.0
      %2206 = vmatpush1.msra.mxu0 %v2187
      %2207 = vmatprep.subr.mxu0 0.0
      %2208 = vmatpush1.msra.mxu0 %v2188
      %2209 = vmatprep.subr.mxu0 0.0
      %2210 = vmatpush1.msra.mxu0 %v2189
      %2211 = vmatprep.subr.mxu0 0.0
      %2212 = vmatpush1.msra.mxu0 %v2190
      %2213 = vmatprep.subr.mxu0 0.0
      %2214 = vmatpush1.msra.mxu0 %v2191
      %2215 = vmatprep.subr.mxu0 0.0
      %2216 = vmatpush1.msra.mxu0 %v2192
      %2217 = vmatprep.subr.mxu0 0.0
      %2218 = vmatpush1.msra.mxu0 %v2193
      %2219 = vmatprep.subr.mxu0 0.0
      %2220 = vmatpush1.msra.mxu0 %v2194
      %2221 = vmatprep.subr.mxu0 0.0
      %2222 = vmatpush1.msra.mxu0 %v2195
      %2223 = vmatprep.subr.mxu0 0.0
      %2224 = vmatpush1.msra.mxu0 %v2196
      %2225 = vmatprep.subr.mxu0 0.0
      %2226 = vmatpush1.msra.mxu0 %v2197
      %2227 = vmatprep.subr.mxu0 0.0
      %2228 = vmatpush1.msra.mxu0 %v2198
      %2229 = vmatprep.subr.mxu0 0.0
      %2230 = vmatpush1.msra.mxu0 %v2199
      %2231 = vmatprep.subr.mxu0 0.0
      %2232 = vmatpush1.msra.mxu0 %v2200
      %2233 = vmatprep.subr.mxu0 0.0
      %2234 = vmatpush1.msra.mxu0 0.0
      %2235 = vmatprep.subr.mxu0 0.0
      %2236 = vmatpush1.msra.mxu0 0.0
      %2237 = vmatprep.subr.mxu0 0.0
      %2238 = vmatpush1.msra.mxu0 0.0
      %2239 = vmatprep.subr.mxu0 0.0
      %2240 = vmatpush1.msra.mxu0 0.0
      %2241 = vmatprep.subr.mxu0 0.0
      %2242 = vmatpush1.msra.mxu0 0.0
      %2243 = vmatprep.subr.mxu0 0.0
      %2244 = vmatpush1.msra.mxu0 0.0
      %2245 = vmatprep.subr.mxu0 0.0
      %2246 = vmatpush1.msra.mxu0 0.0
      %2247 = vmatprep.subr.mxu0 0.0
      %2248 = vmatpush1.msra.mxu0 0.0
      %2249 = vmatprep.subr.mxu0 0.0
      %2250 = vmatpush1.msra.mxu0 0.0
      %2251 = vmatprep.subr.mxu0 0.0
      %2252 = vmatpush1.msra.mxu0 0.0
      %2253 = vmatprep.subr.mxu0 0.0
      %2254 = vmatpush1.msra.mxu0 0.0
      %2255 = vmatprep.subr.mxu0 0.0
      %2256 = vmatpush1.msra.mxu0 0.0
      %2257 = vmatprep.subr.mxu0 0.0
      %2258 = vmatpush1.msra.mxu0 0.0
      %2259 = vmatprep.subr.mxu0 0.0
      %2260 = vmatpush1.msra.mxu0 0.0
      %2261 = vmatprep.subr.mxu0 0.0
      %2262 = vmatpush1.msra.mxu0 0.0
      %2263 = vmatprep.subr.mxu0 0.0
      %2264 = vmatpush1.msra.mxu0 0.0
      %2265 = vmatprep.mubr.f32.mxu0 0.0
      %2266 = vmatmul.mubr.f32.gmra.mrb[0].mxu0 %v2176
      %v2267 = vpop.f32.mrb[0].mxu0
      %v2268 = vadd.f32 0.0, %v2267
      %v2269 = vpop.f32.mrb[0].mxu0
      %2270 = vmatprep.mubr.f32.mxu0 0.0
      %2271 = vmatmul.mubr.f32.gmra.mrb[0].mxu0 %v2177
      %v2272 = vpop.f32.mrb[0].mxu0
      %v2273 = vadd.f32 0.0, %v2272
      %v2274 = vpop.f32.mrb[0].mxu0
      %2275 = vmatprep.mubr.f32.mxu0 0.0
      %2276 = vmatmul.mubr.f32.gmra.mrb[0].mxu0 %v2178
      %v2277 = vpop.f32.mrb[0].mxu0
      %v2278 = vadd.f32 0.0, %v2277
      %v2279 = vpop.f32.mrb[0].mxu0
      %2280 = vmatprep.mubr.f32.mxu0 0.0
      %2281 = vmatmul.mubr.f32.gmra.mrb[0].mxu0 %v2179
      %v2282 = vpop.f32.mrb[0].mxu0
      %v2283 = vadd.f32 0.0, %v2282
      %v2284 = vpop.f32.mrb[0].mxu0
      %2285 = vmatprep.mubr.f32.mxu0 0.0
      %2286 = vmatmul.mubr.f32.gmra.mrb[0].mxu0 %v2180
      %v2287 = vpop.f32.mrb[0].mxu0
      %v2288 = vadd.f32 0.0, %v2287
      %v2289 = vpop.f32.mrb[0].mxu0
      %2290 = vmatprep.mubr.f32.mxu0 0.0
      %2291 = vmatmul.mubr.f32.gmra.mrb[0].mxu0 %v2181
      %v2292 = vpop.f32.mrb[0].mxu0
      %v2293 = vadd.f32 0.0, %v2292
      %v2294 = vpop.f32.mrb[0].mxu0
      %2295 = vmatprep.mubr.f32.mxu0 0.0
      %2296 = vmatmul.mubr.f32.gmra.mrb[0].mxu0 %v2182
      %v2297 = vpop.f32.mrb[0].mxu0
      %v2298 = vadd.f32 0.0, %v2297
      %v2299 = vpop.f32.mrb[0].mxu0
      %2300 = vmatprep.mubr.f32.mxu0 0.0
      %2301 = vmatmul.mubr.f32.gmra.mrb[0].mxu0 %v2183
      %v2302 = vpop.f32.mrb[0].mxu0
      %v2303 = vadd.f32 0.0, %v2302
      %v2304 = vpop.f32.mrb[0].mxu0
      %2305 = vdwg.mxu0
      %v2306 = vadd.f32 %v2168, %v2268
      %v2307 = vadd.f32 %v2169, %v2273
      %v2308 = vadd.f32 %v2170, %v2278
      %v2309 = vadd.f32 %v2171, %v2283
      %v2310 = vadd.f32 %v2172, %v2288
      %v2311 = vadd.f32 %v2173, %v2293
      %v2312 = vadd.f32 %v2174, %v2298
      %v2313 = vadd.f32 %v2175, %v2303
      %v2314 = vld [vmem:[%s1632 + $0x2] sm:$0xff]
      %v2315 = vld [vmem:[%s1632 + $0x12] sm:$0xff]
      %v2316 = vld [vmem:[%s1632 + $0x22] sm:$0xff]
      %v2317 = vld [vmem:[%s1632 + $0x32] sm:$0xff]
      %v2318 = vld [vmem:[%s1632 + $0x42] sm:$0xff]
      %v2319 = vld [vmem:[%s1632 + $0x52] sm:$0xff]
      %v2320 = vld [vmem:[%s1632 + $0x62] sm:$0xff]
      %v2321 = vld [vmem:[%s1632 + $0x72] sm:$0xff]
      %s2322 = scalar_lea.vmem %s3, 640
      %v2323 = vld [vmem:[%s2322] sm:$0xff]
      %v2324 = vld [vmem:[%s2322 + $0x8] sm:$0xff]
      %v2325 = vld [vmem:[%s2322 + $0x10] sm:$0xff]
      %v2326 = vld [vmem:[%s2322 + $0x18] sm:$0xff]
      %v2327 = vld [vmem:[%s2322 + $0x20] sm:$0xff]
      %v2328 = vld [vmem:[%s2322 + $0x28] sm:$0xff]
      %v2329 = vld [vmem:[%s2322 + $0x30] sm:$0xff]
      %v2330 = vld [vmem:[%s2322 + $0x38] sm:$0xff]
      %v2331 = vld [vmem:[%s2322 + $0x40] sm:$0xff]
      %v2332 = vld [vmem:[%s2322 + $0x48] sm:$0xff]
      %v2333 = vld [vmem:[%s2322 + $0x50] sm:$0xff]
      %v2334 = vld [vmem:[%s2322 + $0x58] sm:$0xff]
      %v2335 = vld [vmem:[%s2322 + $0x60] sm:$0xff]
      %v2336 = vld [vmem:[%s2322 + $0x68] sm:$0xff]
      %v2337 = vld [vmem:[%s2322 + $0x70] sm:$0xff]
      %v2338 = vld [vmem:[%s2322 + $0x78] sm:$0xff]
      %2339 = vmatprep.subr.mxu0 0.0
      %2340 = vmatpush1.msra.mxu0 %v2323
      %2341 = vmatprep.subr.mxu0 0.0
      %2342 = vmatpush1.msra.mxu0 %v2324
      %2343 = vmatprep.subr.mxu0 0.0
      %2344 = vmatpush1.msra.mxu0 %v2325
      %2345 = vmatprep.subr.mxu0 0.0
      %2346 = vmatpush1.msra.mxu0 %v2326
      %2347 = vmatprep.subr.mxu0 0.0
      %2348 = vmatpush1.msra.mxu0 %v2327
      %2349 = vmatprep.subr.mxu0 0.0
      %2350 = vmatpush1.msra.mxu0 %v2328
      %2351 = vmatprep.subr.mxu0 0.0
      %2352 = vmatpush1.msra.mxu0 %v2329
      %2353 = vmatprep.subr.mxu0 0.0
      %2354 = vmatpush1.msra.mxu0 %v2330
      %2355 = vmatprep.subr.mxu0 0.0
      %2356 = vmatpush1.msra.mxu0 %v2331
      %2357 = vmatprep.subr.mxu0 0.0
      %2358 = vmatpush1.msra.mxu0 %v2332
      %2359 = vmatprep.subr.mxu0 0.0
      %2360 = vmatpush1.msra.mxu0 %v2333
      %2361 = vmatprep.subr.mxu0 0.0
      %2362 = vmatpush1.msra.mxu0 %v2334
      %2363 = vmatprep.subr.mxu0 0.0
      %2364 = vmatpush1.msra.mxu0 %v2335
      %2365 = vmatprep.subr.mxu0 0.0
      %2366 = vmatpush1.msra.mxu0 %v2336
      %2367 = vmatprep.subr.mxu0 0.0
      %2368 = vmatpush1.msra.mxu0 %v2337
      %2369 = vmatprep.subr.mxu0 0.0
      %2370 = vmatpush1.msra.mxu0 %v2338
      %2371 = vmatprep.subr.mxu0 0.0
      %2372 = vmatpush1.msra.mxu0 0.0
      %2373 = vmatprep.subr.mxu0 0.0
      %2374 = vmatpush1.msra.mxu0 0.0
      %2375 = vmatprep.subr.mxu0 0.0
      %2376 = vmatpush1.msra.mxu0 0.0
      %2377 = vmatprep.subr.mxu0 0.0
      %2378 = vmatpush1.msra.mxu0 0.0
      %2379 = vmatprep.subr.mxu0 0.0
      %2380 = vmatpush1.msra.mxu0 0.0
      %2381 = vmatprep.subr.mxu0 0.0
      %2382 = vmatpush1.msra.mxu0 0.0
      %2383 = vmatprep.subr.mxu0 0.0
      %2384 = vmatpush1.msra.mxu0 0.0
      %2385 = vmatprep.subr.mxu0 0.0
      %2386 = vmatpush1.msra.mxu0 0.0
      %2387 = vmatprep.subr.mxu0 0.0
      %2388 = vmatpush1.msra.mxu0 0.0
      %2389 = vmatprep.subr.mxu0 0.0
      %2390 = vmatpush1.msra.mxu0 0.0
      %2391 = vmatprep.subr.mxu0 0.0
      %2392 = vmatpush1.msra.mxu0 0.0
      %2393 = vmatprep.subr.mxu0 0.0
      %2394 = vmatpush1.msra.mxu0 0.0
      %2395 = vmatprep.subr.mxu0 0.0
      %2396 = vmatpush1.msra.mxu0 0.0
      %2397 = vmatprep.subr.mxu0 0.0
      %2398 = vmatpush1.msra.mxu0 0.0
      %2399 = vmatprep.subr.mxu0 0.0
      %2400 = vmatpush1.msra.mxu0 0.0
      %2401 = vmatprep.subr.mxu0 0.0
      %2402 = vmatpush1.msra.mxu0 0.0
      %2403 = vmatprep.mubr.f32.mxu0 0.0
      %2404 = vmatmul.mubr.f32.gmra.mrb[0].mxu0 %v2314
      %v2405 = vpop.f32.mrb[0].mxu0
      %v2406 = vadd.f32 0.0, %v2405
      %v2407 = vpop.f32.mrb[0].mxu0
      %2408 = vmatprep.mubr.f32.mxu0 0.0
      %2409 = vmatmul.mubr.f32.gmra.mrb[0].mxu0 %v2315
      %v2410 = vpop.f32.mrb[0].mxu0
      %v2411 = vadd.f32 0.0, %v2410
      %v2412 = vpop.f32.mrb[0].mxu0
      %2413 = vmatprep.mubr.f32.mxu0 0.0
      %2414 = vmatmul.mubr.f32.gmra.mrb[0].mxu0 %v2316
      %v2415 = vpop.f32.mrb[0].mxu0
      %v2416 = vadd.f32 0.0, %v2415
      %v2417 = vpop.f32.mrb[0].mxu0
      %2418 = vmatprep.mubr.f32.mxu0 0.0
      %2419 = vmatmul.mubr.f32.gmra.mrb[0].mxu0 %v2317
      %v2420 = vpop.f32.mrb[0].mxu0
      %v2421 = vadd.f32 0.0, %v2420
      %v2422 = vpop.f32.mrb[0].mxu0
      %2423 = vmatprep.mubr.f32.mxu0 0.0
      %2424 = vmatmul.mubr.f32.gmra.mrb[0].mxu0 %v2318
      %v2425 = vpop.f32.mrb[0].mxu0
      %v2426 = vadd.f32 0.0, %v2425
      %v2427 = vpop.f32.mrb[0].mxu0
      %2428 = vmatprep.mubr.f32.mxu0 0.0
      %2429 = vmatmul.mubr.f32.gmra.mrb[0].mxu0 %v2319
      %v2430 = vpop.f32.mrb[0].mxu0
      %v2431 = vadd.f32 0.0, %v2430
      %v2432 = vpop.f32.mrb[0].mxu0
      %2433 = vmatprep.mubr.f32.mxu0 0.0
      %2434 = vmatmul.mubr.f32.gmra.mrb[0].mxu0 %v2320
      %v2435 = vpop.f32.mrb[0].mxu0
      %v2436 = vadd.f32 0.0, %v2435
      %v2437 = vpop.f32.mrb[0].mxu0
      %2438 = vmatprep.mubr.f32.mxu0 0.0
      %2439 = vmatmul.mubr.f32.gmra.mrb[0].mxu0 %v2321
      %v2440 = vpop.f32.mrb[0].mxu0
      %v2441 = vadd.f32 0.0, %v2440
      %v2442 = vpop.f32.mrb[0].mxu0
      %2443 = vdwg.mxu0
      %v2444 = vadd.f32 %v2306, %v2406
      %v2445 = vadd.f32 %v2307, %v2411
      %v2446 = vadd.f32 %v2308, %v2416
      %v2447 = vadd.f32 %v2309, %v2421
      %v2448 = vadd.f32 %v2310, %v2426
      %v2449 = vadd.f32 %v2311, %v2431
      %v2450 = vadd.f32 %v2312, %v2436
      %v2451 = vadd.f32 %v2313, %v2441
      %s2452 = scalar_lea.vmem [#allocation2], 32
      %v2453 = vld [vmem:[%s2452] sm:$0xff]
      %v2454 = vld [vmem:[%s2452 + $0x10] sm:$0xff]
      %v2455 = vld [vmem:[%s2452 + $0x20] sm:$0xff]
      %v2456 = vld [vmem:[%s2452 + $0x30] sm:$0xff]
      %v2457 = vld [vmem:[%s2452 + $0x40] sm:$0xff]
      %v2458 = vld [vmem:[%s2452 + $0x50] sm:$0xff]
      %v2459 = vld [vmem:[%s2452 + $0x60] sm:$0xff]
      %v2460 = vld [vmem:[%s2452 + $0x70] sm:$0xff]
      %s2461 = scalar_lea.vmem %s3, 768
      %v2462 = vld [vmem:[%s2461] sm:$0xff]
      %v2463 = vld [vmem:[%s2461 + $0x8] sm:$0xff]
      %v2464 = vld [vmem:[%s2461 + $0x10] sm:$0xff]
      %v2465 = vld [vmem:[%s2461 + $0x18] sm:$0xff]
      %v2466 = vld [vmem:[%s2461 + $0x20] sm:$0xff]
      %v2467 = vld [vmem:[%s2461 + $0x28] sm:$0xff]
      %v2468 = vld [vmem:[%s2461 + $0x30] sm:$0xff]
      %v2469 = vld [vmem:[%s2461 + $0x38] sm:$0xff]
      %v2470 = vld [vmem:[%s2461 + $0x40] sm:$0xff]
      %v2471 = vld [vmem:[%s2461 + $0x48] sm:$0xff]
      %v2472 = vld [vmem:[%s2461 + $0x50] sm:$0xff]
      %v2473 = vld [vmem:[%s2461 + $0x58] sm:$0xff]
      %v2474 = vld [vmem:[%s2461 + $0x60] sm:$0xff]
      %v2475 = vld [vmem:[%s2461 + $0x68] sm:$0xff]
      %v2476 = vld [vmem:[%s2461 + $0x70] sm:$0xff]
      %v2477 = vld [vmem:[%s2461 + $0x78] sm:$0xff]
      %2478 = vmatprep.subr.mxu0 0.0
      %2479 = vmatpush1.msra.mxu0 %v2462
      %2480 = vmatprep.subr.mxu0 0.0
      %2481 = vmatpush1.msra.mxu0 %v2463
      %2482 = vmatprep.subr.mxu0 0.0
      %2483 = vmatpush1.msra.mxu0 %v2464
      %2484 = vmatprep.subr.mxu0 0.0
      %2485 = vmatpush1.msra.mxu0 %v2465
      %2486 = vmatprep.subr.mxu0 0.0
      %2487 = vmatpush1.msra.mxu0 %v2466
      %2488 = vmatprep.subr.mxu0 0.0
      %2489 = vmatpush1.msra.mxu0 %v2467
      %2490 = vmatprep.subr.mxu0 0.0
      %2491 = vmatpush1.msra.mxu0 %v2468
      %2492 = vmatprep.subr.mxu0 0.0
      %2493 = vmatpush1.msra.mxu0 %v2469
      %2494 = vmatprep.subr.mxu0 0.0
      %2495 = vmatpush1.msra.mxu0 %v2470
      %2496 = vmatprep.subr.mxu0 0.0
      %2497 = vmatpush1.msra.mxu0 %v2471
      %2498 = vmatprep.subr.mxu0 0.0
      %2499 = vmatpush1.msra.mxu0 %v2472
      %2500 = vmatprep.subr.mxu0 0.0
      %2501 = vmatpush1.msra.mxu0 %v2473
      %2502 = vmatprep.subr.mxu0 0.0
      %2503 = vmatpush1.msra.mxu0 %v2474
      %2504 = vmatprep.subr.mxu0 0.0
      %2505 = vmatpush1.msra.mxu0 %v2475
      %2506 = vmatprep.subr.mxu0 0.0
      %2507 = vmatpush1.msra.mxu0 %v2476
      %2508 = vmatprep.subr.mxu0 0.0
      %2509 = vmatpush1.msra.mxu0 %v2477
      %2510 = vmatprep.subr.mxu0 0.0
      %2511 = vmatpush1.msra.mxu0 0.0
      %2512 = vmatprep.subr.mxu0 0.0
      %2513 = vmatpush1.msra.mxu0 0.0
      %2514 = vmatprep.subr.mxu0 0.0
      %2515 = vmatpush1.msra.mxu0 0.0
      %2516 = vmatprep.subr.mxu0 0.0
      %2517 = vmatpush1.msra.mxu0 0.0
      %2518 = vmatprep.subr.mxu0 0.0
      %2519 = vmatpush1.msra.mxu0 0.0
      %2520 = vmatprep.subr.mxu0 0.0
      %2521 = vmatpush1.msra.mxu0 0.0
      %2522 = vmatprep.subr.mxu0 0.0
      %2523 = vmatpush1.msra.mxu0 0.0
      %2524 = vmatprep.subr.mxu0 0.0
      %2525 = vmatpush1.msra.mxu0 0.0
      %2526 = vmatprep.subr.mxu0 0.0
      %2527 = vmatpush1.msra.mxu0 0.0
      %2528 = vmatprep.subr.mxu0 0.0
      %2529 = vmatpush1.msra.mxu0 0.0
      %2530 = vmatprep.subr.mxu0 0.0
      %2531 = vmatpush1.msra.mxu0 0.0
      %2532 = vmatprep.subr.mxu0 0.0
      %2533 = vmatpush1.msra.mxu0 0.0
      %2534 = vmatprep.subr.mxu0 0.0
      %2535 = vmatpush1.msra.mxu0 0.0
      %2536 = vmatprep.subr.mxu0 0.0
      %2537 = vmatpush1.msra.mxu0 0.0
      %2538 = vmatprep.subr.mxu0 0.0
      %2539 = vmatpush1.msra.mxu0 0.0
      %2540 = vmatprep.subr.mxu0 0.0
      %2541 = vmatpush1.msra.mxu0 0.0
      %2542 = vmatprep.mubr.f32.mxu0 0.0
      %2543 = vmatmul.mubr.f32.gmra.mrb[0].mxu0 %v2453
      %v2544 = vpop.f32.mrb[0].mxu0
      %v2545 = vadd.f32 0.0, %v2544
      %v2546 = vpop.f32.mrb[0].mxu0
      %2547 = vmatprep.mubr.f32.mxu0 0.0
      %2548 = vmatmul.mubr.f32.gmra.mrb[0].mxu0 %v2454
      %v2549 = vpop.f32.mrb[0].mxu0
      %v2550 = vadd.f32 0.0, %v2549
      %v2551 = vpop.f32.mrb[0].mxu0
      %2552 = vmatprep.mubr.f32.mxu0 0.0
      %2553 = vmatmul.mubr.f32.gmra.mrb[0].mxu0 %v2455
      %v2554 = vpop.f32.mrb[0].mxu0
      %v2555 = vadd.f32 0.0, %v2554
      %v2556 = vpop.f32.mrb[0].mxu0
      %2557 = vmatprep.mubr.f32.mxu0 0.0
      %2558 = vmatmul.mubr.f32.gmra.mrb[0].mxu0 %v2456
      %v2559 = vpop.f32.mrb[0].mxu0
      %v2560 = vadd.f32 0.0, %v2559
      %v2561 = vpop.f32.mrb[0].mxu0
      %2562 = vmatprep.mubr.f32.mxu0 0.0
      %2563 = vmatmul.mubr.f32.gmra.mrb[0].mxu0 %v2457
      %v2564 = vpop.f32.mrb[0].mxu0
      %v2565 = vadd.f32 0.0, %v2564
      %v2566 = vpop.f32.mrb[0].mxu0
      %2567 = vmatprep.mubr.f32.mxu0 0.0
      %2568 = vmatmul.mubr.f32.gmra.mrb[0].mxu0 %v2458
      %v2569 = vpop.f32.mrb[0].mxu0
      %v2570 = vadd.f32 0.0, %v2569
      %v2571 = vpop.f32.mrb[0].mxu0
      %2572 = vmatprep.mubr.f32.mxu0 0.0
      %2573 = vmatmul.mubr.f32.gmra.mrb[0].mxu0 %v2459
      %v2574 = vpop.f32.mrb[0].mxu0
      %v2575 = vadd.f32 0.0, %v2574
      %v2576 = vpop.f32.mrb[0].mxu0
      %2577 = vmatprep.mubr.f32.mxu0 0.0
      %2578 = vmatmul.mubr.f32.gmra.mrb[0].mxu0 %v2460
      %v2579 = vpop.f32.mrb[0].mxu0
      %v2580 = vadd.f32 0.0, %v2579
      %v2581 = vpop.f32.mrb[0].mxu0
      %2582 = vdwg.mxu0
      %v2583 = vadd.f32 %v2444, %v2545
      %v2584 = vadd.f32 %v2445, %v2550
      %v2585 = vadd.f32 %v2446, %v2555
      %v2586 = vadd.f32 %v2447, %v2560
      %v2587 = vadd.f32 %v2448, %v2565
      %v2588 = vadd.f32 %v2449, %v2570
      %v2589 = vadd.f32 %v2450, %v2575
      %v2590 = vadd.f32 %v2451, %v2580
      %v2591 = vld [vmem:[%s2452 + $0x1] sm:$0xff]
      %v2592 = vld [vmem:[%s2452 + $0x11] sm:$0xff]
      %v2593 = vld [vmem:[%s2452 + $0x21] sm:$0xff]
      %v2594 = vld [vmem:[%s2452 + $0x31] sm:$0xff]
      %v2595 = vld [vmem:[%s2452 + $0x41] sm:$0xff]
      %v2596 = vld [vmem:[%s2452 + $0x51] sm:$0xff]
      %v2597 = vld [vmem:[%s2452 + $0x61] sm:$0xff]
      %v2598 = vld [vmem:[%s2452 + $0x71] sm:$0xff]
      %s2599 = scalar_lea.vmem %s3, 896
      %v2600 = vld [vmem:[%s2599] sm:$0xff]
      %v2601 = vld [vmem:[%s2599 + $0x8] sm:$0xff]
      %v2602 = vld [vmem:[%s2599 + $0x10] sm:$0xff]
      %v2603 = vld [vmem:[%s2599 + $0x18] sm:$0xff]
      %v2604 = vld [vmem:[%s2599 + $0x20] sm:$0xff]
      %v2605 = vld [vmem:[%s2599 + $0x28] sm:$0xff]
      %v2606 = vld [vmem:[%s2599 + $0x30] sm:$0xff]
      %v2607 = vld [vmem:[%s2599 + $0x38] sm:$0xff]
      %v2608 = vld [vmem:[%s2599 + $0x40] sm:$0xff]
      %v2609 = vld [vmem:[%s2599 + $0x48] sm:$0xff]
      %v2610 = vld [vmem:[%s2599 + $0x50] sm:$0xff]
      %v2611 = vld [vmem:[%s2599 + $0x58] sm:$0xff]
      %v2612 = vld [vmem:[%s2599 + $0x60] sm:$0xff]
      %v2613 = vld [vmem:[%s2599 + $0x68] sm:$0xff]
      %v2614 = vld [vmem:[%s2599 + $0x70] sm:$0xff]
      %v2615 = vld [vmem:[%s2599 + $0x78] sm:$0xff]
      %2616 = vmatprep.subr.mxu0 0.0
      %2617 = vmatpush1.msra.mxu0 %v2600
      %2618 = vmatprep.subr.mxu0 0.0
      %2619 = vmatpush1.msra.mxu0 %v2601
      %2620 = vmatprep.subr.mxu0 0.0
      %2621 = vmatpush1.msra.mxu0 %v2602
      %2622 = vmatprep.subr.mxu0 0.0
      %2623 = vmatpush1.msra.mxu0 %v2603
      %2624 = vmatprep.subr.mxu0 0.0
      %2625 = vmatpush1.msra.mxu0 %v2604
      %2626 = vmatprep.subr.mxu0 0.0
      %2627 = vmatpush1.msra.mxu0 %v2605
      %2628 = vmatprep.subr.mxu0 0.0
      %2629 = vmatpush1.msra.mxu0 %v2606
      %2630 = vmatprep.subr.mxu0 0.0
      %2631 = vmatpush1.msra.mxu0 %v2607
      %2632 = vmatprep.subr.mxu0 0.0
      %2633 = vmatpush1.msra.mxu0 %v2608
      %2634 = vmatprep.subr.mxu0 0.0
      %2635 = vmatpush1.msra.mxu0 %v2609
      %2636 = vmatprep.subr.mxu0 0.0
      %2637 = vmatpush1.msra.mxu0 %v2610
      %2638 = vmatprep.subr.mxu0 0.0
      %2639 = vmatpush1.msra.mxu0 %v2611
      %2640 = vmatprep.subr.mxu0 0.0
      %2641 = vmatpush1.msra.mxu0 %v2612
      %2642 = vmatprep.subr.mxu0 0.0
      %2643 = vmatpush1.msra.mxu0 %v2613
      %2644 = vmatprep.subr.mxu0 0.0
      %2645 = vmatpush1.msra.mxu0 %v2614
      %2646 = vmatprep.subr.mxu0 0.0
      %2647 = vmatpush1.msra.mxu0 %v2615
      %2648 = vmatprep.subr.mxu0 0.0
      %2649 = vmatpush1.msra.mxu0 0.0
      %2650 = vmatprep.subr.mxu0 0.0
      %2651 = vmatpush1.msra.mxu0 0.0
      %2652 = vmatprep.subr.mxu0 0.0
      %2653 = vmatpush1.msra.mxu0 0.0
      %2654 = vmatprep.subr.mxu0 0.0
      %2655 = vmatpush1.msra.mxu0 0.0
      %2656 = vmatprep.subr.mxu0 0.0
      %2657 = vmatpush1.msra.mxu0 0.0
      %2658 = vmatprep.subr.mxu0 0.0
      %2659 = vmatpush1.msra.mxu0 0.0
      %2660 = vmatprep.subr.mxu0 0.0
      %2661 = vmatpush1.msra.mxu0 0.0
      %2662 = vmatprep.subr.mxu0 0.0
      %2663 = vmatpush1.msra.mxu0 0.0
      %2664 = vmatprep.subr.mxu0 0.0
      %2665 = vmatpush1.msra.mxu0 0.0
      %2666 = vmatprep.subr.mxu0 0.0
      %2667 = vmatpush1.msra.mxu0 0.0
      %2668 = vmatprep.subr.mxu0 0.0
      %2669 = vmatpush1.msra.mxu0 0.0
      %2670 = vmatprep.subr.mxu0 0.0
      %2671 = vmatpush1.msra.mxu0 0.0
      %2672 = vmatprep.subr.mxu0 0.0
      %2673 = vmatpush1.msra.mxu0 0.0
      %2674 = vmatprep.subr.mxu0 0.0
      %2675 = vmatpush1.msra.mxu0 0.0
      %2676 = vmatprep.subr.mxu0 0.0
      %2677 = vmatpush1.msra.mxu0 0.0
      %2678 = vmatprep.subr.mxu0 0.0
      %2679 = vmatpush1.msra.mxu0 0.0
      %2680 = vmatprep.mubr.f32.mxu0 0.0
      %2681 = vmatmul.mubr.f32.gmra.mrb[0].mxu0 %v2591
      %v2682 = vpop.f32.mrb[0].mxu0
      %v2683 = vadd.f32 0.0, %v2682
      %v2684 = vpop.f32.mrb[0].mxu0
      %2685 = vmatprep.mubr.f32.mxu0 0.0
      %2686 = vmatmul.mubr.f32.gmra.mrb[0].mxu0 %v2592
      %v2687 = vpop.f32.mrb[0].mxu0
      %v2688 = vadd.f32 0.0, %v2687
      %v2689 = vpop.f32.mrb[0].mxu0
      %2690 = vmatprep.mubr.f32.mxu0 0.0
      %2691 = vmatmul.mubr.f32.gmra.mrb[0].mxu0 %v2593
      %v2692 = vpop.f32.mrb[0].mxu0
      %v2693 = vadd.f32 0.0, %v2692
      %v2694 = vpop.f32.mrb[0].mxu0
      %2695 = vmatprep.mubr.f32.mxu0 0.0
      %2696 = vmatmul.mubr.f32.gmra.mrb[0].mxu0 %v2594
      %v2697 = vpop.f32.mrb[0].mxu0
      %v2698 = vadd.f32 0.0, %v2697
      %v2699 = vpop.f32.mrb[0].mxu0
      %2700 = vmatprep.mubr.f32.mxu0 0.0
      %2701 = vmatmul.mubr.f32.gmra.mrb[0].mxu0 %v2595
      %v2702 = vpop.f32.mrb[0].mxu0
      %v2703 = vadd.f32 0.0, %v2702
      %v2704 = vpop.f32.mrb[0].mxu0
      %2705 = vmatprep.mubr.f32.mxu0 0.0
      %2706 = vmatmul.mubr.f32.gmra.mrb[0].mxu0 %v2596
      %v2707 = vpop.f32.mrb[0].mxu0
      %v2708 = vadd.f32 0.0, %v2707
      %v2709 = vpop.f32.mrb[0].mxu0
      %2710 = vmatprep.mubr.f32.mxu0 0.0
      %2711 = vmatmul.mubr.f32.gmra.mrb[0].mxu0 %v2597
      %v2712 = vpop.f32.mrb[0].mxu0
      %v2713 = vadd.f32 0.0, %v2712
      %v2714 = vpop.f32.mrb[0].mxu0
      %2715 = vmatprep.mubr.f32.mxu0 0.0
      %2716 = vmatmul.mubr.f32.gmra.mrb[0].mxu0 %v2598
      %v2717 = vpop.f32.mrb[0].mxu0
      %v2718 = vadd.f32 0.0, %v2717
      %v2719 = vpop.f32.mrb[0].mxu0
      %2720 = vdwg.mxu0
      %v2721 = vadd.f32 %v2583, %v2683
      %v2722 = vadd.f32 %v2584, %v2688
      %v2723 = vadd.f32 %v2585, %v2693
      %v2724 = vadd.f32 %v2586, %v2698
      %v2725 = vadd.f32 %v2587, %v2703
      %v2726 = vadd.f32 %v2588, %v2708
      %v2727 = vadd.f32 %v2589, %v2713
      %v2728 = vadd.f32 %v2590, %v2718
      %v2729 = vld [vmem:[%s2452 + $0x2] sm:$0xff]
      %v2730 = vld [vmem:[%s2452 + $0x12] sm:$0xff]
      %v2731 = vld [vmem:[%s2452 + $0x22] sm:$0xff]
      %v2732 = vld [vmem:[%s2452 + $0x32] sm:$0xff]
      %v2733 = vld [vmem:[%s2452 + $0x42] sm:$0xff]
      %v2734 = vld [vmem:[%s2452 + $0x52] sm:$0xff]
      %v2735 = vld [vmem:[%s2452 + $0x62] sm:$0xff]
      %v2736 = vld [vmem:[%s2452 + $0x72] sm:$0xff]
      %s2737 = scalar_lea.vmem %s3, 1024
      %v2738 = vld [vmem:[%s2737] sm:$0xff]
      %v2739 = vld [vmem:[%s2737 + $0x8] sm:$0xff]
      %v2740 = vld [vmem:[%s2737 + $0x10] sm:$0xff]
      %v2741 = vld [vmem:[%s2737 + $0x18] sm:$0xff]
      %v2742 = vld [vmem:[%s2737 + $0x20] sm:$0xff]
      %v2743 = vld [vmem:[%s2737 + $0x28] sm:$0xff]
      %v2744 = vld [vmem:[%s2737 + $0x30] sm:$0xff]
      %v2745 = vld [vmem:[%s2737 + $0x38] sm:$0xff]
      %v2746 = vld [vmem:[%s2737 + $0x40] sm:$0xff]
      %v2747 = vld [vmem:[%s2737 + $0x48] sm:$0xff]
      %v2748 = vld [vmem:[%s2737 + $0x50] sm:$0xff]
      %v2749 = vld [vmem:[%s2737 + $0x58] sm:$0xff]
      %v2750 = vld [vmem:[%s2737 + $0x60] sm:$0xff]
      %v2751 = vld [vmem:[%s2737 + $0x68] sm:$0xff]
      %v2752 = vld [vmem:[%s2737 + $0x70] sm:$0xff]
      %v2753 = vld [vmem:[%s2737 + $0x78] sm:$0xff]
      %2754 = vmatprep.subr.mxu0 0.0
      %2755 = vmatpush1.msra.mxu0 %v2738
      %2756 = vmatprep.subr.mxu0 0.0
      %2757 = vmatpush1.msra.mxu0 %v2739
      %2758 = vmatprep.subr.mxu0 0.0
      %2759 = vmatpush1.msra.mxu0 %v2740
      %2760 = vmatprep.subr.mxu0 0.0
      %2761 = vmatpush1.msra.mxu0 %v2741
      %2762 = vmatprep.subr.mxu0 0.0
      %2763 = vmatpush1.msra.mxu0 %v2742
      %2764 = vmatprep.subr.mxu0 0.0
      %2765 = vmatpush1.msra.mxu0 %v2743
      %2766 = vmatprep.subr.mxu0 0.0
      %2767 = vmatpush1.msra.mxu0 %v2744
      %2768 = vmatprep.subr.mxu0 0.0
      %2769 = vmatpush1.msra.mxu0 %v2745
      %2770 = vmatprep.subr.mxu0 0.0
      %2771 = vmatpush1.msra.mxu0 %v2746
      %2772 = vmatprep.subr.mxu0 0.0
      %2773 = vmatpush1.msra.mxu0 %v2747
      %2774 = vmatprep.subr.mxu0 0.0
      %2775 = vmatpush1.msra.mxu0 %v2748
      %2776 = vmatprep.subr.mxu0 0.0
      %2777 = vmatpush1.msra.mxu0 %v2749
      %2778 = vmatprep.subr.mxu0 0.0
      %2779 = vmatpush1.msra.mxu0 %v2750
      %2780 = vmatprep.subr.mxu0 0.0
      %2781 = vmatpush1.msra.mxu0 %v2751
      %2782 = vmatprep.subr.mxu0 0.0
      %2783 = vmatpush1.msra.mxu0 %v2752
      %2784 = vmatprep.subr.mxu0 0.0
      %2785 = vmatpush1.msra.mxu0 %v2753
      %2786 = vmatprep.subr.mxu0 0.0
      %2787 = vmatpush1.msra.mxu0 0.0
      %2788 = vmatprep.subr.mxu0 0.0
      %2789 = vmatpush1.msra.mxu0 0.0
      %2790 = vmatprep.subr.mxu0 0.0
      %2791 = vmatpush1.msra.mxu0 0.0
      %2792 = vmatprep.subr.mxu0 0.0
      %2793 = vmatpush1.msra.mxu0 0.0
      %2794 = vmatprep.subr.mxu0 0.0
      %2795 = vmatpush1.msra.mxu0 0.0
      %2796 = vmatprep.subr.mxu0 0.0
      %2797 = vmatpush1.msra.mxu0 0.0
      %2798 = vmatprep.subr.mxu0 0.0
      %2799 = vmatpush1.msra.mxu0 0.0
      %2800 = vmatprep.subr.mxu0 0.0
      %2801 = vmatpush1.msra.mxu0 0.0
      %2802 = vmatprep.subr.mxu0 0.0
      %2803 = vmatpush1.msra.mxu0 0.0
      %2804 = vmatprep.subr.mxu0 0.0
      %2805 = vmatpush1.msra.mxu0 0.0
      %2806 = vmatprep.subr.mxu0 0.0
      %2807 = vmatpush1.msra.mxu0 0.0
      %2808 = vmatprep.subr.mxu0 0.0
      %2809 = vmatpush1.msra.mxu0 0.0
      %2810 = vmatprep.subr.mxu0 0.0
      %2811 = vmatpush1.msra.mxu0 0.0
      %2812 = vmatprep.subr.mxu0 0.0
      %2813 = vmatpush1.msra.mxu0 0.0
      %2814 = vmatprep.subr.mxu0 0.0
      %2815 = vmatpush1.msra.mxu0 0.0
      %2816 = vmatprep.subr.mxu0 0.0
      %2817 = vmatpush1.msra.mxu0 0.0
      %2818 = vmatprep.mubr.f32.mxu0 0.0
      %2819 = vmatmul.mubr.f32.gmra.mrb[0].mxu0 %v2729
      %v2820 = vpop.f32.mrb[0].mxu0
      %v2821 = vadd.f32 0.0, %v2820
      %v2822 = vpop.f32.mrb[0].mxu0
      %2823 = vmatprep.mubr.f32.mxu0 0.0
      %2824 = vmatmul.mubr.f32.gmra.mrb[0].mxu0 %v2730
      %v2825 = vpop.f32.mrb[0].mxu0
      %v2826 = vadd.f32 0.0, %v2825
      %v2827 = vpop.f32.mrb[0].mxu0
      %2828 = vmatprep.mubr.f32.mxu0 0.0
      %2829 = vmatmul.mubr.f32.gmra.mrb[0].mxu0 %v2731
      %v2830 = vpop.f32.mrb[0].mxu0
      %v2831 = vadd.f32 0.0, %v2830
      %v2832 = vpop.f32.mrb[0].mxu0
      %2833 = vmatprep.mubr.f32.mxu0 0.0
      %2834 = vmatmul.mubr.f32.gmra.mrb[0].mxu0 %v2732
      %v2835 = vpop.f32.mrb[0].mxu0
      %v2836 = vadd.f32 0.0, %v2835
      %v2837 = vpop.f32.mrb[0].mxu0
      %2838 = vmatprep.mubr.f32.mxu0 0.0
      %2839 = vmatmul.mubr.f32.gmra.mrb[0].mxu0 %v2733
      %v2840 = vpop.f32.mrb[0].mxu0
      %v2841 = vadd.f32 0.0, %v2840
      %v2842 = vpop.f32.mrb[0].mxu0
      %2843 = vmatprep.mubr.f32.mxu0 0.0
      %2844 = vmatmul.mubr.f32.gmra.mrb[0].mxu0 %v2734
      %v2845 = vpop.f32.mrb[0].mxu0
      %v2846 = vadd.f32 0.0, %v2845
      %v2847 = vpop.f32.mrb[0].mxu0
      %2848 = vmatprep.mubr.f32.mxu0 0.0
      %2849 = vmatmul.mubr.f32.gmra.mrb[0].mxu0 %v2735
      %v2850 = vpop.f32.mrb[0].mxu0
      %v2851 = vadd.f32 0.0, %v2850
      %v2852 = vpop.f32.mrb[0].mxu0
      %2853 = vmatprep.mubr.f32.mxu0 0.0
      %2854 = vmatmul.mubr.f32.gmra.mrb[0].mxu0 %v2736
      %v2855 = vpop.f32.mrb[0].mxu0
      %v2856 = vadd.f32 0.0, %v2855
      %v2857 = vpop.f32.mrb[0].mxu0
      %2858 = vdwg.mxu0
      %v2859 = vadd.f32 %v2721, %v2821
      %v2860 = vadd.f32 %v2722, %v2826
      %v2861 = vadd.f32 %v2723, %v2831
      %v2862 = vadd.f32 %v2724, %v2836
      %v2863 = vadd.f32 %v2725, %v2841
      %v2864 = vadd.f32 %v2726, %v2846
      %v2865 = vadd.f32 %v2727, %v2851
      %v2866 = vadd.f32 %v2728, %v2856
      %v2867 = vadd.f32 %v1576, %v2859
      %v2868 = vadd.f32 %v1577, %v2860
      %v2869 = vadd.f32 %v1578, %v2861
      %v2870 = vadd.f32 %v1579, %v2862
      %v2871 = vadd.f32 %v1580, %v2863
      %v2872 = vadd.f32 %v1581, %v2864
      %v2873 = vadd.f32 %v1582, %v2865
      %v2874 = vadd.f32 %v1583, %v2866
      %v2875 = vld [vmem:[%s4] sm:$0x1]
      %v2877 = vlaneseq
      %v2878 = vshrl.u32 %v2877, 7
      %v2879 = vsub.s32 0, %v2878
      %v2880 = vrot.slane %v2875, %v2879
      %v2882 = vadd.f32 %v2867, %v2880
      %v2883 = vadd.f32 %v2868, %v2880
      %v2884 = vadd.f32 %v2869, %v2880
      %v2885 = vadd.f32 %v2870, %v2880
      %v2886 = vadd.f32 %v2871, %v2880
      %v2887 = vadd.f32 %v2872, %v2880
      %v2888 = vadd.f32 %v2873, %v2880
      %v2889 = vadd.f32 %v2874, %v2880
      %2890 = vst [vmem:[%s313] sm:$0xff] %v2882
      %2891 = vst [vmem:[%s313 + $0x8] sm:$0xff] %v2883
      %2892 = vst [vmem:[%s313 + $0x10] sm:$0xff] %v2884
      %2893 = vst [vmem:[%s313 + $0x18] sm:$0xff] %v2885
      %2894 = vst [vmem:[%s313 + $0x20] sm:$0xff] %v2886
      %2895 = vst [vmem:[%s313 + $0x28] sm:$0xff] %v2887
      %2896 = vst [vmem:[%s313 + $0x30] sm:$0xff] %v2888
      %2897 = vst [vmem:[%s313 + $0x38] sm:$0xff] %v2889
      %vm2898 = vcmp.gt.f32.partialorder %v2882, 0.0
      %vm2899 = vcmp.gt.f32.partialorder %v2883, 0.0
      %vm2900 = vcmp.gt.f32.partialorder %v2884, 0.0
      %vm2901 = vcmp.gt.f32.partialorder %v2885, 0.0
      %vm2902 = vcmp.gt.f32.partialorder %v2886, 0.0
      %vm2903 = vcmp.gt.f32.partialorder %v2887, 0.0
      %vm2904 = vcmp.gt.f32.partialorder %v2888, 0.0
      %vm2905 = vcmp.gt.f32.partialorder %v2889, 0.0
      %v2906 = vmin.f32 %v2882, 0.0
      %v2907 = vmin.f32 %v2883, 0.0
      %v2908 = vmin.f32 %v2884, 0.0
      %v2909 = vmin.f32 %v2885, 0.0
      %v2910 = vmin.f32 %v2886, 0.0
      %v2911 = vmin.f32 %v2887, 0.0
      %v2912 = vmin.f32 %v2888, 0.0
      %v2913 = vmin.f32 %v2889, 0.0
      %v2914 = vmul.f32 %v2906, 1.442695
      %v2915 = vpow.pop %v2914
      %v2916 = vmul.f32 %v2907, 1.442695
      %v2917 = vpow.pop %v2916
      %v2918 = vmul.f32 %v2908, 1.442695
      %v2919 = vpow.pop %v2918
      %v2920 = vmul.f32 %v2909, 1.442695
      %v2921 = vpow.pop %v2920
      %v2922 = vmul.f32 %v2910, 1.442695
      %v2923 = vpow.pop %v2922
      %v2924 = vmul.f32 %v2911, 1.442695
      %v2925 = vpow.pop %v2924
      %v2926 = vmul.f32 %v2912, 1.442695
      %v2927 = vpow.pop %v2926
      %v2928 = vmul.f32 %v2913, 1.442695
      %v2929 = vpow.pop %v2928
      %v2930 = vsub.f32 %v2915, 1.0
      %v2931 = vsub.f32 %v2917, 1.0
      %v2932 = vsub.f32 %v2919, 1.0
      %v2933 = vsub.f32 %v2921, 1.0
      %v2934 = vsub.f32 %v2923, 1.0
      %v2935 = vsub.f32 %v2925, 1.0
      %v2936 = vsub.f32 %v2927, 1.0
      %v2937 = vsub.f32 %v2929, 1.0
      %v2938 = vsel %vm2898, %v2882, %v2930
      %v2939 = vsel %vm2899, %v2883, %v2931
      %v2940 = vsel %vm2900, %v2884, %v2932
      %v2941 = vsel %vm2901, %v2885, %v2933
      %v2942 = vsel %vm2902, %v2886, %v2934
      %v2943 = vsel %vm2903, %v2887, %v2935
      %v2944 = vsel %vm2904, %v2888, %v2936
      %v2945 = vsel %vm2905, %v2889, %v2937
      %2946 = vst [vmem:[%s1632 + $0x1] sm:$0xff] %v2938
      %2947 = vst [vmem:[%s1632 + $0x11] sm:$0xff] %v2939
      %2948 = vst [vmem:[%s1632 + $0x21] sm:$0xff] %v2940
      %2949 = vst [vmem:[%s1632 + $0x31] sm:$0xff] %v2941
      %2950 = vst [vmem:[%s1632 + $0x41] sm:$0xff] %v2942
      %2951 = vst [vmem:[%s1632 + $0x51] sm:$0xff] %v2943
      %2952 = vst [vmem:[%s1632 + $0x61] sm:$0xff] %v2944
      %2953 = vst [vmem:[%s1632 + $0x71] sm:$0xff] %v2945
      %v2954 = vld [vmem:[#allocation2] sm:$0xff]
      %v2955 = vld [vmem:[#allocation2 + $0x10] sm:$0xff]
      %v2956 = vld [vmem:[#allocation2 + $0x20] sm:$0xff]
      %v2957 = vld [vmem:[#allocation2 + $0x30] sm:$0xff]
      %v2958 = vld [vmem:[#allocation2 + $0x40] sm:$0xff]
      %v2959 = vld [vmem:[#allocation2 + $0x50] sm:$0xff]
      %v2960 = vld [vmem:[#allocation2 + $0x60] sm:$0xff]
      %v2961 = vld [vmem:[#allocation2 + $0x70] sm:$0xff]
      %v2962 = vld [vmem:[%s5] sm:$0xff]
      %v2963 = vld [vmem:[%s5 + $0x8] sm:$0xff]
      %v2964 = vld [vmem:[%s5 + $0x10] sm:$0xff]
      %v2965 = vld [vmem:[%s5 + $0x18] sm:$0xff]
      %v2966 = vld [vmem:[%s5 + $0x20] sm:$0xff]
      %v2967 = vld [vmem:[%s5 + $0x28] sm:$0xff]
      %v2968 = vld [vmem:[%s5 + $0x30] sm:$0xff]
      %v2969 = vld [vmem:[%s5 + $0x38] sm:$0xff]
      %v2970 = vld [vmem:[%s5 + $0x40] sm:$0xff]
      %v2971 = vld [vmem:[%s5 + $0x48] sm:$0xff]
      %v2972 = vld [vmem:[%s5 + $0x50] sm:$0xff]
      %v2973 = vld [vmem:[%s5 + $0x58] sm:$0xff]
      %v2974 = vld [vmem:[%s5 + $0x60] sm:$0xff]
      %v2975 = vld [vmem:[%s5 + $0x68] sm:$0xff]
      %v2976 = vld [vmem:[%s5 + $0x70] sm:$0xff]
      %v2977 = vld [vmem:[%s5 + $0x78] sm:$0xff]
      %v2978 = vld [vmem:[#allocation2 + $0x1] sm:$0xff]
      %v2979 = vld [vmem:[#allocation2 + $0x11] sm:$0xff]
      %v2980 = vld [vmem:[#allocation2 + $0x21] sm:$0xff]
      %v2981 = vld [vmem:[#allocation2 + $0x31] sm:$0xff]
      %v2982 = vld [vmem:[#allocation2 + $0x41] sm:$0xff]
      %v2983 = vld [vmem:[#allocation2 + $0x51] sm:$0xff]
      %v2984 = vld [vmem:[#allocation2 + $0x61] sm:$0xff]
      %v2985 = vld [vmem:[#allocation2 + $0x71] sm:$0xff]
      %s2986 = scalar_lea.vmem %s5, 128
      %v2987 = vld [vmem:[%s2986] sm:$0xff]
      %v2988 = vld [vmem:[%s2986 + $0x8] sm:$0xff]
      %v2989 = vld [vmem:[%s2986 + $0x10] sm:$0xff]
      %v2990 = vld [vmem:[%s2986 + $0x18] sm:$0xff]
      %v2991 = vld [vmem:[%s2986 + $0x20] sm:$0xff]
      %v2992 = vld [vmem:[%s2986 + $0x28] sm:$0xff]
      %v2993 = vld [vmem:[%s2986 + $0x30] sm:$0xff]
      %v2994 = vld [vmem:[%s2986 + $0x38] sm:$0xff]
      %v2995 = vld [vmem:[%s2986 + $0x40] sm:$0xff]
      %v2996 = vld [vmem:[%s2986 + $0x48] sm:$0xff]
      %v2997 = vld [vmem:[%s2986 + $0x50] sm:$0xff]
      %v2998 = vld [vmem:[%s2986 + $0x58] sm:$0xff]
      %v2999 = vld [vmem:[%s2986 + $0x60] sm:$0xff]
      %v3000 = vld [vmem:[%s2986 + $0x68] sm:$0xff]
      %v3001 = vld [vmem:[%s2986 + $0x70] sm:$0xff]
      %v3002 = vld [vmem:[%s2986 + $0x78] sm:$0xff]
      %3003 = vmatprep.subr.mxu0 0.0
      %3004 = vmatpush1.msra.mxu0 %v2987
      %3005 = vmatprep.subr.mxu0 0.0
      %3006 = vmatpush1.msra.mxu0 %v2988
      %3007 = vmatprep.subr.mxu0 0.0
      %3008 = vmatpush1.msra.mxu0 %v2989
      %3009 = vmatprep.subr.mxu0 0.0
      %3010 = vmatpush1.msra.mxu0 %v2990
      %3011 = vmatprep.subr.mxu0 0.0
      %3012 = vmatpush1.msra.mxu0 %v2991
      %3013 = vmatprep.subr.mxu0 0.0
      %3014 = vmatpush1.msra.mxu0 %v2992
      %3015 = vmatprep.subr.mxu0 0.0
      %3016 = vmatpush1.msra.mxu0 %v2993
      %3017 = vmatprep.subr.mxu0 0.0
      %3018 = vmatpush1.msra.mxu0 %v2994
      %3019 = vmatprep.subr.mxu0 0.0
      %3020 = vmatpush1.msra.mxu0 %v2995
      %3021 = vmatprep.subr.mxu0 0.0
      %3022 = vmatpush1.msra.mxu0 %v2996
      %3023 = vmatprep.subr.mxu0 0.0
      %3024 = vmatpush1.msra.mxu0 %v2997
      %3025 = vmatprep.subr.mxu0 0.0
      %3026 = vmatpush1.msra.mxu0 %v2998
      %3027 = vmatprep.subr.mxu0 0.0
      %3028 = vmatpush1.msra.mxu0 %v2999
      %3029 = vmatprep.subr.mxu0 0.0
      %3030 = vmatpush1.msra.mxu0 %v3000
      %3031 = vmatprep.subr.mxu0 0.0
      %3032 = vmatpush1.msra.mxu0 %v3001
      %3033 = vmatprep.subr.mxu0 0.0
      %3034 = vmatpush1.msra.mxu0 %v3002
      %3035 = vmatprep.subr.mxu0 0.0
      %3036 = vmatpush1.msra.mxu0 0.0
      %3037 = vmatprep.subr.mxu0 0.0
      %3038 = vmatpush1.msra.mxu0 0.0
      %3039 = vmatprep.subr.mxu0 0.0
      %3040 = vmatpush1.msra.mxu0 0.0
      %3041 = vmatprep.subr.mxu0 0.0
      %3042 = vmatpush1.msra.mxu0 0.0
      %3043 = vmatprep.subr.mxu0 0.0
      %3044 = vmatpush1.msra.mxu0 0.0
      %3045 = vmatprep.subr.mxu0 0.0
      %3046 = vmatpush1.msra.mxu0 0.0
      %3047 = vmatprep.subr.mxu0 0.0
      %3048 = vmatpush1.msra.mxu0 0.0
      %3049 = vmatprep.subr.mxu0 0.0
      %3050 = vmatpush1.msra.mxu0 0.0
      %3051 = vmatprep.subr.mxu0 0.0
      %3052 = vmatpush1.msra.mxu0 0.0
      %3053 = vmatprep.subr.mxu0 0.0
      %3054 = vmatpush1.msra.mxu0 0.0
      %3055 = vmatprep.subr.mxu0 0.0
      %3056 = vmatpush1.msra.mxu0 0.0
      %3057 = vmatprep.subr.mxu0 0.0
      %3058 = vmatpush1.msra.mxu0 0.0
      %3059 = vmatprep.subr.mxu0 0.0
      %3060 = vmatpush1.msra.mxu0 0.0
      %3061 = vmatprep.subr.mxu0 0.0
      %3062 = vmatpush1.msra.mxu0 0.0
      %3063 = vmatprep.subr.mxu0 0.0
      %3064 = vmatpush1.msra.mxu0 0.0
      %3065 = vmatprep.subr.mxu0 0.0
      %3066 = vmatpush1.msra.mxu0 0.0
      %3067 = vmatprep.mubr.f32.mxu0 0.0
      %3068 = vmatmul.mubr.f32.gmra.mrb[0].mxu0 %v2978
      %v3069 = vpop.f32.mrb[0].mxu0
      %v3070 = vadd.f32 0.0, %v3069
      %v3071 = vpop.f32.mrb[0].mxu0
      %3072 = vmatprep.mubr.f32.mxu0 0.0
      %3073 = vmatmul.mubr.f32.gmra.mrb[0].mxu0 %v2979
      %v3074 = vpop.f32.mrb[0].mxu0
      %v3075 = vadd.f32 0.0, %v3074
      %v3076 = vpop.f32.mrb[0].mxu0
      %3077 = vmatprep.mubr.f32.mxu0 0.0
      %3078 = vmatmul.mubr.f32.gmra.mrb[0].mxu0 %v2980
      %v3079 = vpop.f32.mrb[0].mxu0
      %v3080 = vadd.f32 0.0, %v3079
      %v3081 = vpop.f32.mrb[0].mxu0
      %3082 = vmatprep.mubr.f32.mxu0 0.0
      %3083 = vmatmul.mubr.f32.gmra.mrb[0].mxu0 %v2981
      %v3084 = vpop.f32.mrb[0].mxu0
      %v3085 = vadd.f32 0.0, %v3084
      %v3086 = vpop.f32.mrb[0].mxu0
      %3087 = vmatprep.mubr.f32.mxu0 0.0
      %3088 = vmatmul.mubr.f32.gmra.mrb[0].mxu0 %v2982
      %v3089 = vpop.f32.mrb[0].mxu0
      %v3090 = vadd.f32 0.0, %v3089
      %v3091 = vpop.f32.mrb[0].mxu0
      %3092 = vmatprep.mubr.f32.mxu0 0.0
      %3093 = vmatmul.mubr.f32.gmra.mrb[0].mxu0 %v2983
      %v3094 = vpop.f32.mrb[0].mxu0
      %v3095 = vadd.f32 0.0, %v3094
      %v3096 = vpop.f32.mrb[0].mxu0
      %3097 = vmatprep.mubr.f32.mxu0 0.0
      %3098 = vmatmul.mubr.f32.gmra.mrb[0].mxu0 %v2984
      %v3099 = vpop.f32.mrb[0].mxu0
      %v3100 = vadd.f32 0.0, %v3099
      %v3101 = vpop.f32.mrb[0].mxu0
      %3102 = vmatprep.mubr.f32.mxu0 0.0
      %3103 = vmatmul.mubr.f32.gmra.mrb[0].mxu0 %v2985
      %v3104 = vpop.f32.mrb[0].mxu0
      %v3105 = vadd.f32 0.0, %v3104
      %v3106 = vpop.f32.mrb[0].mxu0
      %3107 = vdwg.mxu0
      %3108 = vmatprep.subr.mxu0 0.0
      %3109 = vmatpush1.msra.mxu0 %v2962
      %3110 = vmatprep.subr.mxu0 0.0
      %3111 = vmatpush1.msra.mxu0 %v2963
      %3112 = vmatprep.subr.mxu0 0.0
      %3113 = vmatpush1.msra.mxu0 %v2964
      %3114 = vmatprep.subr.mxu0 0.0
      %3115 = vmatpush1.msra.mxu0 %v2965
      %3116 = vmatprep.subr.mxu0 0.0
      %3117 = vmatpush1.msra.mxu0 %v2966
      %3118 = vmatprep.subr.mxu0 0.0
      %3119 = vmatpush1.msra.mxu0 %v2967
      %3120 = vmatprep.subr.mxu0 0.0
      %3121 = vmatpush1.msra.mxu0 %v2968
      %3122 = vmatprep.subr.mxu0 0.0
      %3123 = vmatpush1.msra.mxu0 %v2969
      %3124 = vmatprep.subr.mxu0 0.0
      %3125 = vmatpush1.msra.mxu0 %v2970
      %3126 = vmatprep.subr.mxu0 0.0
      %3127 = vmatpush1.msra.mxu0 %v2971
      %3128 = vmatprep.subr.mxu0 0.0
      %3129 = vmatpush1.msra.mxu0 %v2972
      %3130 = vmatprep.subr.mxu0 0.0
      %3131 = vmatpush1.msra.mxu0 %v2973
      %3132 = vmatprep.subr.mxu0 0.0
      %3133 = vmatpush1.msra.mxu0 %v2974
      %3134 = vmatprep.subr.mxu0 0.0
      %3135 = vmatpush1.msra.mxu0 %v2975
      %3136 = vmatprep.subr.mxu0 0.0
      %3137 = vmatpush1.msra.mxu0 %v2976
      %3138 = vmatprep.subr.mxu0 0.0
      %3139 = vmatpush1.msra.mxu0 %v2977
      %3140 = vmatprep.subr.mxu0 0.0
      %3141 = vmatpush1.msra.mxu0 0.0
      %3142 = vmatprep.subr.mxu0 0.0
      %3143 = vmatpush1.msra.mxu0 0.0
      %3144 = vmatprep.subr.mxu0 0.0
      %3145 = vmatpush1.msra.mxu0 0.0
      %3146 = vmatprep.subr.mxu0 0.0
      %3147 = vmatpush1.msra.mxu0 0.0
      %3148 = vmatprep.subr.mxu0 0.0
      %3149 = vmatpush1.msra.mxu0 0.0
      %3150 = vmatprep.subr.mxu0 0.0
      %3151 = vmatpush1.msra.mxu0 0.0
      %3152 = vmatprep.subr.mxu0 0.0
      %3153 = vmatpush1.msra.mxu0 0.0
      %3154 = vmatprep.subr.mxu0 0.0
      %3155 = vmatpush1.msra.mxu0 0.0
      %3156 = vmatprep.subr.mxu0 0.0
      %3157 = vmatpush1.msra.mxu0 0.0
      %3158 = vmatprep.subr.mxu0 0.0
      %3159 = vmatpush1.msra.mxu0 0.0
      %3160 = vmatprep.subr.mxu0 0.0
      %3161 = vmatpush1.msra.mxu0 0.0
      %3162 = vmatprep.subr.mxu0 0.0
      %3163 = vmatpush1.msra.mxu0 0.0
      %3164 = vmatprep.subr.mxu0 0.0
      %3165 = vmatpush1.msra.mxu0 0.0
      %3166 = vmatprep.subr.mxu0 0.0
      %3167 = vmatpush1.msra.mxu0 0.0
      %3168 = vmatprep.subr.mxu0 0.0
      %3169 = vmatpush1.msra.mxu0 0.0
      %3170 = vmatprep.subr.mxu0 0.0
      %3171 = vmatpush1.msra.mxu0 0.0
      %3172 = vmatprep.mubr.f32.mxu0 0.0
      %3173 = vmatmul.mubr.f32.gmra.mrb[0].mxu0 %v2954
      %v3174 = vpop.f32.mrb[0].mxu0
      %v3175 = vadd.f32 %v3070, %v3174
      %v3176 = vpop.f32.mrb[0].mxu0
      %3177 = vmatprep.mubr.f32.mxu0 0.0
      %3178 = vmatmul.mubr.f32.gmra.mrb[0].mxu0 %v2955
      %v3179 = vpop.f32.mrb[0].mxu0
      %v3180 = vadd.f32 %v3075, %v3179
      %v3181 = vpop.f32.mrb[0].mxu0
      %3182 = vmatprep.mubr.f32.mxu0 0.0
      %3183 = vmatmul.mubr.f32.gmra.mrb[0].mxu0 %v2956
      %v3184 = vpop.f32.mrb[0].mxu0
      %v3185 = vadd.f32 %v3080, %v3184
      %v3186 = vpop.f32.mrb[0].mxu0
      %3187 = vmatprep.mubr.f32.mxu0 0.0
      %3188 = vmatmul.mubr.f32.gmra.mrb[0].mxu0 %v2957
      %v3189 = vpop.f32.mrb[0].mxu0
      %v3190 = vadd.f32 %v3085, %v3189
      %v3191 = vpop.f32.mrb[0].mxu0
      %3192 = vmatprep.mubr.f32.mxu0 0.0
      %3193 = vmatmul.mubr.f32.gmra.mrb[0].mxu0 %v2958
      %v3194 = vpop.f32.mrb[0].mxu0
      %v3195 = vadd.f32 %v3090, %v3194
      %v3196 = vpop.f32.mrb[0].mxu0
      %3197 = vmatprep.mubr.f32.mxu0 0.0
      %3198 = vmatmul.mubr.f32.gmra.mrb[0].mxu0 %v2959
      %v3199 = vpop.f32.mrb[0].mxu0
      %v3200 = vadd.f32 %v3095, %v3199
      %v3201 = vpop.f32.mrb[0].mxu0
      %3202 = vmatprep.mubr.f32.mxu0 0.0
      %3203 = vmatmul.mubr.f32.gmra.mrb[0].mxu0 %v2960
      %v3204 = vpop.f32.mrb[0].mxu0
      %v3205 = vadd.f32 %v3100, %v3204
      %v3206 = vpop.f32.mrb[0].mxu0
      %3207 = vmatprep.mubr.f32.mxu0 0.0
      %3208 = vmatmul.mubr.f32.gmra.mrb[0].mxu0 %v2961
      %v3209 = vpop.f32.mrb[0].mxu0
      %v3210 = vadd.f32 %v3105, %v3209
      %v3211 = vpop.f32.mrb[0].mxu0
      %3212 = vdwg.mxu0
      %v3213 = vld [vmem:[#allocation2 + $0x2] sm:$0xff]
      %v3214 = vld [vmem:[#allocation2 + $0x12] sm:$0xff]
      %v3215 = vld [vmem:[#allocation2 + $0x22] sm:$0xff]
      %v3216 = vld [vmem:[#allocation2 + $0x32] sm:$0xff]
      %v3217 = vld [vmem:[#allocation2 + $0x42] sm:$0xff]
      %v3218 = vld [vmem:[#allocation2 + $0x52] sm:$0xff]
      %v3219 = vld [vmem:[#allocation2 + $0x62] sm:$0xff]
      %v3220 = vld [vmem:[#allocation2 + $0x72] sm:$0xff]
      %s3221 = scalar_lea.vmem %s5, 256
      %v3222 = vld [vmem:[%s3221] sm:$0xff]
      %v3223 = vld [vmem:[%s3221 + $0x8] sm:$0xff]
      %v3224 = vld [vmem:[%s3221 + $0x10] sm:$0xff]
      %v3225 = vld [vmem:[%s3221 + $0x18] sm:$0xff]
      %v3226 = vld [vmem:[%s3221 + $0x20] sm:$0xff]
      %v3227 = vld [vmem:[%s3221 + $0x28] sm:$0xff]
      %v3228 = vld [vmem:[%s3221 + $0x30] sm:$0xff]
      %v3229 = vld [vmem:[%s3221 + $0x38] sm:$0xff]
      %v3230 = vld [vmem:[%s3221 + $0x40] sm:$0xff]
      %v3231 = vld [vmem:[%s3221 + $0x48] sm:$0xff]
      %v3232 = vld [vmem:[%s3221 + $0x50] sm:$0xff]
      %v3233 = vld [vmem:[%s3221 + $0x58] sm:$0xff]
      %v3234 = vld [vmem:[%s3221 + $0x60] sm:$0xff]
      %v3235 = vld [vmem:[%s3221 + $0x68] sm:$0xff]
      %v3236 = vld [vmem:[%s3221 + $0x70] sm:$0xff]
      %v3237 = vld [vmem:[%s3221 + $0x78] sm:$0xff]
      %3238 = vmatprep.subr.mxu0 0.0
      %3239 = vmatpush1.msra.mxu0 %v3222
      %3240 = vmatprep.subr.mxu0 0.0
      %3241 = vmatpush1.msra.mxu0 %v3223
      %3242 = vmatprep.subr.mxu0 0.0
      %3243 = vmatpush1.msra.mxu0 %v3224
      %3244 = vmatprep.subr.mxu0 0.0
      %3245 = vmatpush1.msra.mxu0 %v3225
      %3246 = vmatprep.subr.mxu0 0.0
      %3247 = vmatpush1.msra.mxu0 %v3226
      %3248 = vmatprep.subr.mxu0 0.0
      %3249 = vmatpush1.msra.mxu0 %v3227
      %3250 = vmatprep.subr.mxu0 0.0
      %3251 = vmatpush1.msra.mxu0 %v3228
      %3252 = vmatprep.subr.mxu0 0.0
      %3253 = vmatpush1.msra.mxu0 %v3229
      %3254 = vmatprep.subr.mxu0 0.0
      %3255 = vmatpush1.msra.mxu0 %v3230
      %3256 = vmatprep.subr.mxu0 0.0
      %3257 = vmatpush1.msra.mxu0 %v3231
      %3258 = vmatprep.subr.mxu0 0.0
      %3259 = vmatpush1.msra.mxu0 %v3232
      %3260 = vmatprep.subr.mxu0 0.0
      %3261 = vmatpush1.msra.mxu0 %v3233
      %3262 = vmatprep.subr.mxu0 0.0
      %3263 = vmatpush1.msra.mxu0 %v3234
      %3264 = vmatprep.subr.mxu0 0.0
      %3265 = vmatpush1.msra.mxu0 %v3235
      %3266 = vmatprep.subr.mxu0 0.0
      %3267 = vmatpush1.msra.mxu0 %v3236
      %3268 = vmatprep.subr.mxu0 0.0
      %3269 = vmatpush1.msra.mxu0 %v3237
      %3270 = vmatprep.subr.mxu0 0.0
      %3271 = vmatpush1.msra.mxu0 0.0
      %3272 = vmatprep.subr.mxu0 0.0
      %3273 = vmatpush1.msra.mxu0 0.0
      %3274 = vmatprep.subr.mxu0 0.0
      %3275 = vmatpush1.msra.mxu0 0.0
      %3276 = vmatprep.subr.mxu0 0.0
      %3277 = vmatpush1.msra.mxu0 0.0
      %3278 = vmatprep.subr.mxu0 0.0
      %3279 = vmatpush1.msra.mxu0 0.0
      %3280 = vmatprep.subr.mxu0 0.0
      %3281 = vmatpush1.msra.mxu0 0.0
      %3282 = vmatprep.subr.mxu0 0.0
      %3283 = vmatpush1.msra.mxu0 0.0
      %3284 = vmatprep.subr.mxu0 0.0
      %3285 = vmatpush1.msra.mxu0 0.0
      %3286 = vmatprep.subr.mxu0 0.0
      %3287 = vmatpush1.msra.mxu0 0.0
      %3288 = vmatprep.subr.mxu0 0.0
      %3289 = vmatpush1.msra.mxu0 0.0
      %3290 = vmatprep.subr.mxu0 0.0
      %3291 = vmatpush1.msra.mxu0 0.0
      %3292 = vmatprep.subr.mxu0 0.0
      %3293 = vmatpush1.msra.mxu0 0.0
      %3294 = vmatprep.subr.mxu0 0.0
      %3295 = vmatpush1.msra.mxu0 0.0
      %3296 = vmatprep.subr.mxu0 0.0
      %3297 = vmatpush1.msra.mxu0 0.0
      %3298 = vmatprep.subr.mxu0 0.0
      %3299 = vmatpush1.msra.mxu0 0.0
      %3300 = vmatprep.subr.mxu0 0.0
      %3301 = vmatpush1.msra.mxu0 0.0
      %3302 = vmatprep.mubr.f32.mxu0 0.0
      %3303 = vmatmul.mubr.f32.gmra.mrb[0].mxu0 %v3213
      %v3304 = vpop.f32.mrb[0].mxu0
      %v3305 = vadd.f32 0.0, %v3304
      %v3306 = vpop.f32.mrb[0].mxu0
      %3307 = vmatprep.mubr.f32.mxu0 0.0
      %3308 = vmatmul.mubr.f32.gmra.mrb[0].mxu0 %v3214
      %v3309 = vpop.f32.mrb[0].mxu0
      %v3310 = vadd.f32 0.0, %v3309
      %v3311 = vpop.f32.mrb[0].mxu0
      %3312 = vmatprep.mubr.f32.mxu0 0.0
      %3313 = vmatmul.mubr.f32.gmra.mrb[0].mxu0 %v3215
      %v3314 = vpop.f32.mrb[0].mxu0
      %v3315 = vadd.f32 0.0, %v3314
      %v3316 = vpop.f32.mrb[0].mxu0
      %3317 = vmatprep.mubr.f32.mxu0 0.0
      %3318 = vmatmul.mubr.f32.gmra.mrb[0].mxu0 %v3216
      %v3319 = vpop.f32.mrb[0].mxu0
      %v3320 = vadd.f32 0.0, %v3319
      %v3321 = vpop.f32.mrb[0].mxu0
      %3322 = vmatprep.mubr.f32.mxu0 0.0
      %3323 = vmatmul.mubr.f32.gmra.mrb[0].mxu0 %v3217
      %v3324 = vpop.f32.mrb[0].mxu0
      %v3325 = vadd.f32 0.0, %v3324
      %v3326 = vpop.f32.mrb[0].mxu0
      %3327 = vmatprep.mubr.f32.mxu0 0.0
      %3328 = vmatmul.mubr.f32.gmra.mrb[0].mxu0 %v3218
      %v3329 = vpop.f32.mrb[0].mxu0
      %v3330 = vadd.f32 0.0, %v3329
      %v3331 = vpop.f32.mrb[0].mxu0
      %3332 = vmatprep.mubr.f32.mxu0 0.0
      %3333 = vmatmul.mubr.f32.gmra.mrb[0].mxu0 %v3219
      %v3334 = vpop.f32.mrb[0].mxu0
      %v3335 = vadd.f32 0.0, %v3334
      %v3336 = vpop.f32.mrb[0].mxu0
      %3337 = vmatprep.mubr.f32.mxu0 0.0
      %3338 = vmatmul.mubr.f32.gmra.mrb[0].mxu0 %v3220
      %v3339 = vpop.f32.mrb[0].mxu0
      %v3340 = vadd.f32 0.0, %v3339
      %v3341 = vpop.f32.mrb[0].mxu0
      %3342 = vdwg.mxu0
      %v3343 = vadd.f32 %v3175, %v3305
      %v3344 = vadd.f32 %v3180, %v3310
      %v3345 = vadd.f32 %v3185, %v3315
      %v3346 = vadd.f32 %v3190, %v3320
      %v3347 = vadd.f32 %v3195, %v3325
      %v3348 = vadd.f32 %v3200, %v3330
      %v3349 = vadd.f32 %v3205, %v3335
      %v3350 = vadd.f32 %v3210, %v3340
      %v3351 = vld [vmem:[%s1632] sm:$0xff]
      %v3352 = vld [vmem:[%s1632 + $0x10] sm:$0xff]
      %v3353 = vld [vmem:[%s1632 + $0x20] sm:$0xff]
      %v3354 = vld [vmem:[%s1632 + $0x30] sm:$0xff]
      %v3355 = vld [vmem:[%s1632 + $0x40] sm:$0xff]
      %v3356 = vld [vmem:[%s1632 + $0x50] sm:$0xff]
      %v3357 = vld [vmem:[%s1632 + $0x60] sm:$0xff]
      %v3358 = vld [vmem:[%s1632 + $0x70] sm:$0xff]
      %s3359 = scalar_lea.vmem %s5, 384
      %v3360 = vld [vmem:[%s3359] sm:$0xff]
      %v3361 = vld [vmem:[%s3359 + $0x8] sm:$0xff]
      %v3362 = vld [vmem:[%s3359 + $0x10] sm:$0xff]
      %v3363 = vld [vmem:[%s3359 + $0x18] sm:$0xff]
      %v3364 = vld [vmem:[%s3359 + $0x20] sm:$0xff]
      %v3365 = vld [vmem:[%s3359 + $0x28] sm:$0xff]
      %v3366 = vld [vmem:[%s3359 + $0x30] sm:$0xff]
      %v3367 = vld [vmem:[%s3359 + $0x38] sm:$0xff]
      %v3368 = vld [vmem:[%s3359 + $0x40] sm:$0xff]
      %v3369 = vld [vmem:[%s3359 + $0x48] sm:$0xff]
      %v3370 = vld [vmem:[%s3359 + $0x50] sm:$0xff]
      %v3371 = vld [vmem:[%s3359 + $0x58] sm:$0xff]
      %v3372 = vld [vmem:[%s3359 + $0x60] sm:$0xff]
      %v3373 = vld [vmem:[%s3359 + $0x68] sm:$0xff]
      %v3374 = vld [vmem:[%s3359 + $0x70] sm:$0xff]
      %v3375 = vld [vmem:[%s3359 + $0x78] sm:$0xff]
      %3376 = vmatprep.subr.mxu0 0.0
      %3377 = vmatpush1.msra.mxu0 %v3360
      %3378 = vmatprep.subr.mxu0 0.0
      %3379 = vmatpush1.msra.mxu0 %v3361
      %3380 = vmatprep.subr.mxu0 0.0
      %3381 = vmatpush1.msra.mxu0 %v3362
      %3382 = vmatprep.subr.mxu0 0.0
      %3383 = vmatpush1.msra.mxu0 %v3363
      %3384 = vmatprep.subr.mxu0 0.0
      %3385 = vmatpush1.msra.mxu0 %v3364
      %3386 = vmatprep.subr.mxu0 0.0
      %3387 = vmatpush1.msra.mxu0 %v3365
      %3388 = vmatprep.subr.mxu0 0.0
      %3389 = vmatpush1.msra.mxu0 %v3366
      %3390 = vmatprep.subr.mxu0 0.0
      %3391 = vmatpush1.msra.mxu0 %v3367
      %3392 = vmatprep.subr.mxu0 0.0
      %3393 = vmatpush1.msra.mxu0 %v3368
      %3394 = vmatprep.subr.mxu0 0.0
      %3395 = vmatpush1.msra.mxu0 %v3369
      %3396 = vmatprep.subr.mxu0 0.0
      %3397 = vmatpush1.msra.mxu0 %v3370
      %3398 = vmatprep.subr.mxu0 0.0
      %3399 = vmatpush1.msra.mxu0 %v3371
      %3400 = vmatprep.subr.mxu0 0.0
      %3401 = vmatpush1.msra.mxu0 %v3372
      %3402 = vmatprep.subr.mxu0 0.0
      %3403 = vmatpush1.msra.mxu0 %v3373
      %3404 = vmatprep.subr.mxu0 0.0
      %3405 = vmatpush1.msra.mxu0 %v3374
      %3406 = vmatprep.subr.mxu0 0.0
      %3407 = vmatpush1.msra.mxu0 %v3375
      %3408 = vmatprep.subr.mxu0 0.0
      %3409 = vmatpush1.msra.mxu0 0.0
      %3410 = vmatprep.subr.mxu0 0.0
      %3411 = vmatpush1.msra.mxu0 0.0
      %3412 = vmatprep.subr.mxu0 0.0
      %3413 = vmatpush1.msra.mxu0 0.0
      %3414 = vmatprep.subr.mxu0 0.0
      %3415 = vmatpush1.msra.mxu0 0.0
      %3416 = vmatprep.subr.mxu0 0.0
      %3417 = vmatpush1.msra.mxu0 0.0
      %3418 = vmatprep.subr.mxu0 0.0
      %3419 = vmatpush1.msra.mxu0 0.0
      %3420 = vmatprep.subr.mxu0 0.0
      %3421 = vmatpush1.msra.mxu0 0.0
      %3422 = vmatprep.subr.mxu0 0.0
      %3423 = vmatpush1.msra.mxu0 0.0
      %3424 = vmatprep.subr.mxu0 0.0
      %3425 = vmatpush1.msra.mxu0 0.0
      %3426 = vmatprep.subr.mxu0 0.0
      %3427 = vmatpush1.msra.mxu0 0.0
      %3428 = vmatprep.subr.mxu0 0.0
      %3429 = vmatpush1.msra.mxu0 0.0
      %3430 = vmatprep.subr.mxu0 0.0
      %3431 = vmatpush1.msra.mxu0 0.0
      %3432 = vmatprep.subr.mxu0 0.0
      %3433 = vmatpush1.msra.mxu0 0.0
      %3434 = vmatprep.subr.mxu0 0.0
      %3435 = vmatpush1.msra.mxu0 0.0
      %3436 = vmatprep.subr.mxu0 0.0
      %3437 = vmatpush1.msra.mxu0 0.0
      %3438 = vmatprep.subr.mxu0 0.0
      %3439 = vmatpush1.msra.mxu0 0.0
      %3440 = vmatprep.mubr.f32.mxu0 0.0
      %3441 = vmatmul.mubr.f32.gmra.mrb[0].mxu0 %v3351
      %v3442 = vpop.f32.mrb[0].mxu0
      %v3443 = vadd.f32 0.0, %v3442
      %v3444 = vpop.f32.mrb[0].mxu0
      %3445 = vmatprep.mubr.f32.mxu0 0.0
      %3446 = vmatmul.mubr.f32.gmra.mrb[0].mxu0 %v3352
      %v3447 = vpop.f32.mrb[0].mxu0
      %v3448 = vadd.f32 0.0, %v3447
      %v3449 = vpop.f32.mrb[0].mxu0
      %3450 = vmatprep.mubr.f32.mxu0 0.0
      %3451 = vmatmul.mubr.f32.gmra.mrb[0].mxu0 %v3353
      %v3452 = vpop.f32.mrb[0].mxu0
      %v3453 = vadd.f32 0.0, %v3452
      %v3454 = vpop.f32.mrb[0].mxu0
      %3455 = vmatprep.mubr.f32.mxu0 0.0
      %3456 = vmatmul.mubr.f32.gmra.mrb[0].mxu0 %v3354
      %v3457 = vpop.f32.mrb[0].mxu0
      %v3458 = vadd.f32 0.0, %v3457
      %v3459 = vpop.f32.mrb[0].mxu0
      %3460 = vmatprep.mubr.f32.mxu0 0.0
      %3461 = vmatmul.mubr.f32.gmra.mrb[0].mxu0 %v3355
      %v3462 = vpop.f32.mrb[0].mxu0
      %v3463 = vadd.f32 0.0, %v3462
      %v3464 = vpop.f32.mrb[0].mxu0
      %3465 = vmatprep.mubr.f32.mxu0 0.0
      %3466 = vmatmul.mubr.f32.gmra.mrb[0].mxu0 %v3356
      %v3467 = vpop.f32.mrb[0].mxu0
      %v3468 = vadd.f32 0.0, %v3467
      %v3469 = vpop.f32.mrb[0].mxu0
      %3470 = vmatprep.mubr.f32.mxu0 0.0
      %3471 = vmatmul.mubr.f32.gmra.mrb[0].mxu0 %v3357
      %v3472 = vpop.f32.mrb[0].mxu0
      %v3473 = vadd.f32 0.0, %v3472
      %v3474 = vpop.f32.mrb[0].mxu0
      %3475 = vmatprep.mubr.f32.mxu0 0.0
      %3476 = vmatmul.mubr.f32.gmra.mrb[0].mxu0 %v3358
      %v3477 = vpop.f32.mrb[0].mxu0
      %v3478 = vadd.f32 0.0, %v3477
      %v3479 = vpop.f32.mrb[0].mxu0
      %3480 = vdwg.mxu0
      %v3481 = vadd.f32 %v3343, %v3443
      %v3482 = vadd.f32 %v3344, %v3448
      %v3483 = vadd.f32 %v3345, %v3453
      %v3484 = vadd.f32 %v3346, %v3458
      %v3485 = vadd.f32 %v3347, %v3463
      %v3486 = vadd.f32 %v3348, %v3468
      %v3487 = vadd.f32 %v3349, %v3473
      %v3488 = vadd.f32 %v3350, %v3478
      %v3489 = vld [vmem:[%s1632 + $0x1] sm:$0xff]
      %v3490 = vld [vmem:[%s1632 + $0x11] sm:$0xff]
      %v3491 = vld [vmem:[%s1632 + $0x21] sm:$0xff]
      %v3492 = vld [vmem:[%s1632 + $0x31] sm:$0xff]
      %v3493 = vld [vmem:[%s1632 + $0x41] sm:$0xff]
      %v3494 = vld [vmem:[%s1632 + $0x51] sm:$0xff]
      %v3495 = vld [vmem:[%s1632 + $0x61] sm:$0xff]
      %v3496 = vld [vmem:[%s1632 + $0x71] sm:$0xff]
      %s3497 = scalar_lea.vmem %s5, 512
      %v3498 = vld [vmem:[%s3497] sm:$0xff]
      %v3499 = vld [vmem:[%s3497 + $0x8] sm:$0xff]
      %v3500 = vld [vmem:[%s3497 + $0x10] sm:$0xff]
      %v3501 = vld [vmem:[%s3497 + $0x18] sm:$0xff]
      %v3502 = vld [vmem:[%s3497 + $0x20] sm:$0xff]
      %v3503 = vld [vmem:[%s3497 + $0x28] sm:$0xff]
      %v3504 = vld [vmem:[%s3497 + $0x30] sm:$0xff]
      %v3505 = vld [vmem:[%s3497 + $0x38] sm:$0xff]
      %v3506 = vld [vmem:[%s3497 + $0x40] sm:$0xff]
      %v3507 = vld [vmem:[%s3497 + $0x48] sm:$0xff]
      %v3508 = vld [vmem:[%s3497 + $0x50] sm:$0xff]
      %v3509 = vld [vmem:[%s3497 + $0x58] sm:$0xff]
      %v3510 = vld [vmem:[%s3497 + $0x60] sm:$0xff]
      %v3511 = vld [vmem:[%s3497 + $0x68] sm:$0xff]
      %v3512 = vld [vmem:[%s3497 + $0x70] sm:$0xff]
      %v3513 = vld [vmem:[%s3497 + $0x78] sm:$0xff]
      %3514 = vmatprep.subr.mxu0 0.0
      %3515 = vmatpush1.msra.mxu0 %v3498
      %3516 = vmatprep.subr.mxu0 0.0
      %3517 = vmatpush1.msra.mxu0 %v3499
      %3518 = vmatprep.subr.mxu0 0.0
      %3519 = vmatpush1.msra.mxu0 %v3500
      %3520 = vmatprep.subr.mxu0 0.0
      %3521 = vmatpush1.msra.mxu0 %v3501
      %3522 = vmatprep.subr.mxu0 0.0
      %3523 = vmatpush1.msra.mxu0 %v3502
      %3524 = vmatprep.subr.mxu0 0.0
      %3525 = vmatpush1.msra.mxu0 %v3503
      %3526 = vmatprep.subr.mxu0 0.0
      %3527 = vmatpush1.msra.mxu0 %v3504
      %3528 = vmatprep.subr.mxu0 0.0
      %3529 = vmatpush1.msra.mxu0 %v3505
      %3530 = vmatprep.subr.mxu0 0.0
      %3531 = vmatpush1.msra.mxu0 %v3506
      %3532 = vmatprep.subr.mxu0 0.0
      %3533 = vmatpush1.msra.mxu0 %v3507
      %3534 = vmatprep.subr.mxu0 0.0
      %3535 = vmatpush1.msra.mxu0 %v3508
      %3536 = vmatprep.subr.mxu0 0.0
      %3537 = vmatpush1.msra.mxu0 %v3509
      %3538 = vmatprep.subr.mxu0 0.0
      %3539 = vmatpush1.msra.mxu0 %v3510
      %3540 = vmatprep.subr.mxu0 0.0
      %3541 = vmatpush1.msra.mxu0 %v3511
      %3542 = vmatprep.subr.mxu0 0.0
      %3543 = vmatpush1.msra.mxu0 %v3512
      %3544 = vmatprep.subr.mxu0 0.0
      %3545 = vmatpush1.msra.mxu0 %v3513
      %3546 = vmatprep.subr.mxu0 0.0
      %3547 = vmatpush1.msra.mxu0 0.0
      %3548 = vmatprep.subr.mxu0 0.0
      %3549 = vmatpush1.msra.mxu0 0.0
      %3550 = vmatprep.subr.mxu0 0.0
      %3551 = vmatpush1.msra.mxu0 0.0
      %3552 = vmatprep.subr.mxu0 0.0
      %3553 = vmatpush1.msra.mxu0 0.0
      %3554 = vmatprep.subr.mxu0 0.0
      %3555 = vmatpush1.msra.mxu0 0.0
      %3556 = vmatprep.subr.mxu0 0.0
      %3557 = vmatpush1.msra.mxu0 0.0
      %3558 = vmatprep.subr.mxu0 0.0
      %3559 = vmatpush1.msra.mxu0 0.0
      %3560 = vmatprep.subr.mxu0 0.0
      %3561 = vmatpush1.msra.mxu0 0.0
      %3562 = vmatprep.subr.mxu0 0.0
      %3563 = vmatpush1.msra.mxu0 0.0
      %3564 = vmatprep.subr.mxu0 0.0
      %3565 = vmatpush1.msra.mxu0 0.0
      %3566 = vmatprep.subr.mxu0 0.0
      %3567 = vmatpush1.msra.mxu0 0.0
      %3568 = vmatprep.subr.mxu0 0.0
      %3569 = vmatpush1.msra.mxu0 0.0
      %3570 = vmatprep.subr.mxu0 0.0
      %3571 = vmatpush1.msra.mxu0 0.0
      %3572 = vmatprep.subr.mxu0 0.0
      %3573 = vmatpush1.msra.mxu0 0.0
      %3574 = vmatprep.subr.mxu0 0.0
      %3575 = vmatpush1.msra.mxu0 0.0
      %3576 = vmatprep.subr.mxu0 0.0
      %3577 = vmatpush1.msra.mxu0 0.0
      %3578 = vmatprep.mubr.f32.mxu0 0.0
      %3579 = vmatmul.mubr.f32.gmra.mrb[0].mxu0 %v3489
      %v3580 = vpop.f32.mrb[0].mxu0
      %v3581 = vadd.f32 0.0, %v3580
      %v3582 = vpop.f32.mrb[0].mxu0
      %3583 = vmatprep.mubr.f32.mxu0 0.0
      %3584 = vmatmul.mubr.f32.gmra.mrb[0].mxu0 %v3490
      %v3585 = vpop.f32.mrb[0].mxu0
      %v3586 = vadd.f32 0.0, %v3585
      %v3587 = vpop.f32.mrb[0].mxu0
      %3588 = vmatprep.mubr.f32.mxu0 0.0
      %3589 = vmatmul.mubr.f32.gmra.mrb[0].mxu0 %v3491
      %v3590 = vpop.f32.mrb[0].mxu0
      %v3591 = vadd.f32 0.0, %v3590
      %v3592 = vpop.f32.mrb[0].mxu0
      %3593 = vmatprep.mubr.f32.mxu0 0.0
      %3594 = vmatmul.mubr.f32.gmra.mrb[0].mxu0 %v3492
      %v3595 = vpop.f32.mrb[0].mxu0
      %v3596 = vadd.f32 0.0, %v3595
      %v3597 = vpop.f32.mrb[0].mxu0
      %3598 = vmatprep.mubr.f32.mxu0 0.0
      %3599 = vmatmul.mubr.f32.gmra.mrb[0].mxu0 %v3493
      %v3600 = vpop.f32.mrb[0].mxu0
      %v3601 = vadd.f32 0.0, %v3600
      %v3602 = vpop.f32.mrb[0].mxu0
      %3603 = vmatprep.mubr.f32.mxu0 0.0
      %3604 = vmatmul.mubr.f32.gmra.mrb[0].mxu0 %v3494
      %v3605 = vpop.f32.mrb[0].mxu0
      %v3606 = vadd.f32 0.0, %v3605
      %v3607 = vpop.f32.mrb[0].mxu0
      %3608 = vmatprep.mubr.f32.mxu0 0.0
      %3609 = vmatmul.mubr.f32.gmra.mrb[0].mxu0 %v3495
      %v3610 = vpop.f32.mrb[0].mxu0
      %v3611 = vadd.f32 0.0, %v3610
      %v3612 = vpop.f32.mrb[0].mxu0
      %3613 = vmatprep.mubr.f32.mxu0 0.0
      %3614 = vmatmul.mubr.f32.gmra.mrb[0].mxu0 %v3496
      %v3615 = vpop.f32.mrb[0].mxu0
      %v3616 = vadd.f32 0.0, %v3615
      %v3617 = vpop.f32.mrb[0].mxu0
      %3618 = vdwg.mxu0
      %v3619 = vadd.f32 %v3481, %v3581
      %v3620 = vadd.f32 %v3482, %v3586
      %v3621 = vadd.f32 %v3483, %v3591
      %v3622 = vadd.f32 %v3484, %v3596
      %v3623 = vadd.f32 %v3485, %v3601
      %v3624 = vadd.f32 %v3486, %v3606
      %v3625 = vadd.f32 %v3487, %v3611
      %v3626 = vadd.f32 %v3488, %v3616
      %v3627 = vld [vmem:[%s1632 + $0x2] sm:$0xff]
      %v3628 = vld [vmem:[%s1632 + $0x12] sm:$0xff]
      %v3629 = vld [vmem:[%s1632 + $0x22] sm:$0xff]
      %v3630 = vld [vmem:[%s1632 + $0x32] sm:$0xff]
      %v3631 = vld [vmem:[%s1632 + $0x42] sm:$0xff]
      %v3632 = vld [vmem:[%s1632 + $0x52] sm:$0xff]
      %v3633 = vld [vmem:[%s1632 + $0x62] sm:$0xff]
      %v3634 = vld [vmem:[%s1632 + $0x72] sm:$0xff]
      %s3635 = scalar_lea.vmem %s5, 640
      %v3636 = vld [vmem:[%s3635] sm:$0xff]
      %v3637 = vld [vmem:[%s3635 + $0x8] sm:$0xff]
      %v3638 = vld [vmem:[%s3635 + $0x10] sm:$0xff]
      %v3639 = vld [vmem:[%s3635 + $0x18] sm:$0xff]
      %v3640 = vld [vmem:[%s3635 + $0x20] sm:$0xff]
      %v3641 = vld [vmem:[%s3635 + $0x28] sm:$0xff]
      %v3642 = vld [vmem:[%s3635 + $0x30] sm:$0xff]
      %v3643 = vld [vmem:[%s3635 + $0x38] sm:$0xff]
      %v3644 = vld [vmem:[%s3635 + $0x40] sm:$0xff]
      %v3645 = vld [vmem:[%s3635 + $0x48] sm:$0xff]
      %v3646 = vld [vmem:[%s3635 + $0x50] sm:$0xff]
      %v3647 = vld [vmem:[%s3635 + $0x58] sm:$0xff]
      %v3648 = vld [vmem:[%s3635 + $0x60] sm:$0xff]
      %v3649 = vld [vmem:[%s3635 + $0x68] sm:$0xff]
      %v3650 = vld [vmem:[%s3635 + $0x70] sm:$0xff]
      %v3651 = vld [vmem:[%s3635 + $0x78] sm:$0xff]
      %3652 = vmatprep.subr.mxu0 0.0
      %3653 = vmatpush1.msra.mxu0 %v3636
      %3654 = vmatprep.subr.mxu0 0.0
      %3655 = vmatpush1.msra.mxu0 %v3637
      %3656 = vmatprep.subr.mxu0 0.0
      %3657 = vmatpush1.msra.mxu0 %v3638
      %3658 = vmatprep.subr.mxu0 0.0
      %3659 = vmatpush1.msra.mxu0 %v3639
      %3660 = vmatprep.subr.mxu0 0.0
      %3661 = vmatpush1.msra.mxu0 %v3640
      %3662 = vmatprep.subr.mxu0 0.0
      %3663 = vmatpush1.msra.mxu0 %v3641
      %3664 = vmatprep.subr.mxu0 0.0
      %3665 = vmatpush1.msra.mxu0 %v3642
      %3666 = vmatprep.subr.mxu0 0.0
      %3667 = vmatpush1.msra.mxu0 %v3643
      %3668 = vmatprep.subr.mxu0 0.0
      %3669 = vmatpush1.msra.mxu0 %v3644
      %3670 = vmatprep.subr.mxu0 0.0
      %3671 = vmatpush1.msra.mxu0 %v3645
      %3672 = vmatprep.subr.mxu0 0.0
      %3673 = vmatpush1.msra.mxu0 %v3646
      %3674 = vmatprep.subr.mxu0 0.0
      %3675 = vmatpush1.msra.mxu0 %v3647
      %3676 = vmatprep.subr.mxu0 0.0
      %3677 = vmatpush1.msra.mxu0 %v3648
      %3678 = vmatprep.subr.mxu0 0.0
      %3679 = vmatpush1.msra.mxu0 %v3649
      %3680 = vmatprep.subr.mxu0 0.0
      %3681 = vmatpush1.msra.mxu0 %v3650
      %3682 = vmatprep.subr.mxu0 0.0
      %3683 = vmatpush1.msra.mxu0 %v3651
      %3684 = vmatprep.subr.mxu0 0.0
      %3685 = vmatpush1.msra.mxu0 0.0
      %3686 = vmatprep.subr.mxu0 0.0
      %3687 = vmatpush1.msra.mxu0 0.0
      %3688 = vmatprep.subr.mxu0 0.0
      %3689 = vmatpush1.msra.mxu0 0.0
      %3690 = vmatprep.subr.mxu0 0.0
      %3691 = vmatpush1.msra.mxu0 0.0
      %3692 = vmatprep.subr.mxu0 0.0
      %3693 = vmatpush1.msra.mxu0 0.0
      %3694 = vmatprep.subr.mxu0 0.0
      %3695 = vmatpush1.msra.mxu0 0.0
      %3696 = vmatprep.subr.mxu0 0.0
      %3697 = vmatpush1.msra.mxu0 0.0
      %3698 = vmatprep.subr.mxu0 0.0
      %3699 = vmatpush1.msra.mxu0 0.0
      %3700 = vmatprep.subr.mxu0 0.0
      %3701 = vmatpush1.msra.mxu0 0.0
      %3702 = vmatprep.subr.mxu0 0.0
      %3703 = vmatpush1.msra.mxu0 0.0
      %3704 = vmatprep.subr.mxu0 0.0
      %3705 = vmatpush1.msra.mxu0 0.0
      %3706 = vmatprep.subr.mxu0 0.0
      %3707 = vmatpush1.msra.mxu0 0.0
      %3708 = vmatprep.subr.mxu0 0.0
      %3709 = vmatpush1.msra.mxu0 0.0
      %3710 = vmatprep.subr.mxu0 0.0
      %3711 = vmatpush1.msra.mxu0 0.0
      %3712 = vmatprep.subr.mxu0 0.0
      %3713 = vmatpush1.msra.mxu0 0.0
      %3714 = vmatprep.subr.mxu0 0.0
      %3715 = vmatpush1.msra.mxu0 0.0
      %3716 = vmatprep.mubr.f32.mxu0 0.0
      %3717 = vmatmul.mubr.f32.gmra.mrb[0].mxu0 %v3627
      %v3718 = vpop.f32.mrb[0].mxu0
      %v3719 = vadd.f32 0.0, %v3718
      %v3720 = vpop.f32.mrb[0].mxu0
      %3721 = vmatprep.mubr.f32.mxu0 0.0
      %3722 = vmatmul.mubr.f32.gmra.mrb[0].mxu0 %v3628
      %v3723 = vpop.f32.mrb[0].mxu0
      %v3724 = vadd.f32 0.0, %v3723
      %v3725 = vpop.f32.mrb[0].mxu0
      %3726 = vmatprep.mubr.f32.mxu0 0.0
      %3727 = vmatmul.mubr.f32.gmra.mrb[0].mxu0 %v3629
      %v3728 = vpop.f32.mrb[0].mxu0
      %v3729 = vadd.f32 0.0, %v3728
      %v3730 = vpop.f32.mrb[0].mxu0
      %3731 = vmatprep.mubr.f32.mxu0 0.0
      %3732 = vmatmul.mubr.f32.gmra.mrb[0].mxu0 %v3630
      %v3733 = vpop.f32.mrb[0].mxu0
      %v3734 = vadd.f32 0.0, %v3733
      %v3735 = vpop.f32.mrb[0].mxu0
      %3736 = vmatprep.mubr.f32.mxu0 0.0
      %3737 = vmatmul.mubr.f32.gmra.mrb[0].mxu0 %v3631
      %v3738 = vpop.f32.mrb[0].mxu0
      %v3739 = vadd.f32 0.0, %v3738
      %v3740 = vpop.f32.mrb[0].mxu0
      %3741 = vmatprep.mubr.f32.mxu0 0.0
      %3742 = vmatmul.mubr.f32.gmra.mrb[0].mxu0 %v3632
      %v3743 = vpop.f32.mrb[0].mxu0
      %v3744 = vadd.f32 0.0, %v3743
      %v3745 = vpop.f32.mrb[0].mxu0
      %3746 = vmatprep.mubr.f32.mxu0 0.0
      %3747 = vmatmul.mubr.f32.gmra.mrb[0].mxu0 %v3633
      %v3748 = vpop.f32.mrb[0].mxu0
      %v3749 = vadd.f32 0.0, %v3748
      %v3750 = vpop.f32.mrb[0].mxu0
      %3751 = vmatprep.mubr.f32.mxu0 0.0
      %3752 = vmatmul.mubr.f32.gmra.mrb[0].mxu0 %v3634
      %v3753 = vpop.f32.mrb[0].mxu0
      %v3754 = vadd.f32 0.0, %v3753
      %v3755 = vpop.f32.mrb[0].mxu0
      %3756 = vdwg.mxu0
      %v3757 = vadd.f32 %v3619, %v3719
      %v3758 = vadd.f32 %v3620, %v3724
      %v3759 = vadd.f32 %v3621, %v3729
      %v3760 = vadd.f32 %v3622, %v3734
      %v3761 = vadd.f32 %v3623, %v3739
      %v3762 = vadd.f32 %v3624, %v3744
      %v3763 = vadd.f32 %v3625, %v3749
      %v3764 = vadd.f32 %v3626, %v3754
      %v3765 = vld [vmem:[%s2452] sm:$0xff]
      %v3766 = vld [vmem:[%s2452 + $0x10] sm:$0xff]
      %v3767 = vld [vmem:[%s2452 + $0x20] sm:$0xff]
      %v3768 = vld [vmem:[%s2452 + $0x30] sm:$0xff]
      %v3769 = vld [vmem:[%s2452 + $0x40] sm:$0xff]
      %v3770 = vld [vmem:[%s2452 + $0x50] sm:$0xff]
      %v3771 = vld [vmem:[%s2452 + $0x60] sm:$0xff]
      %v3772 = vld [vmem:[%s2452 + $0x70] sm:$0xff]
      %s3773 = scalar_lea.vmem %s5, 768
      %v3774 = vld [vmem:[%s3773] sm:$0xff]
      %v3775 = vld [vmem:[%s3773 + $0x8] sm:$0xff]
      %v3776 = vld [vmem:[%s3773 + $0x10] sm:$0xff]
      %v3777 = vld [vmem:[%s3773 + $0x18] sm:$0xff]
      %v3778 = vld [vmem:[%s3773 + $0x20] sm:$0xff]
      %v3779 = vld [vmem:[%s3773 + $0x28] sm:$0xff]
      %v3780 = vld [vmem:[%s3773 + $0x30] sm:$0xff]
      %v3781 = vld [vmem:[%s3773 + $0x38] sm:$0xff]
      %v3782 = vld [vmem:[%s3773 + $0x40] sm:$0xff]
      %v3783 = vld [vmem:[%s3773 + $0x48] sm:$0xff]
      %v3784 = vld [vmem:[%s3773 + $0x50] sm:$0xff]
      %v3785 = vld [vmem:[%s3773 + $0x58] sm:$0xff]
      %v3786 = vld [vmem:[%s3773 + $0x60] sm:$0xff]
      %v3787 = vld [vmem:[%s3773 + $0x68] sm:$0xff]
      %v3788 = vld [vmem:[%s3773 + $0x70] sm:$0xff]
      %v3789 = vld [vmem:[%s3773 + $0x78] sm:$0xff]
      %3790 = vmatprep.subr.mxu0 0.0
      %3791 = vmatpush1.msra.mxu0 %v3774
      %3792 = vmatprep.subr.mxu0 0.0
      %3793 = vmatpush1.msra.mxu0 %v3775
      %3794 = vmatprep.subr.mxu0 0.0
      %3795 = vmatpush1.msra.mxu0 %v3776
      %3796 = vmatprep.subr.mxu0 0.0
      %3797 = vmatpush1.msra.mxu0 %v3777
      %3798 = vmatprep.subr.mxu0 0.0
      %3799 = vmatpush1.msra.mxu0 %v3778
      %3800 = vmatprep.subr.mxu0 0.0
      %3801 = vmatpush1.msra.mxu0 %v3779
      %3802 = vmatprep.subr.mxu0 0.0
      %3803 = vmatpush1.msra.mxu0 %v3780
      %3804 = vmatprep.subr.mxu0 0.0
      %3805 = vmatpush1.msra.mxu0 %v3781
      %3806 = vmatprep.subr.mxu0 0.0
      %3807 = vmatpush1.msra.mxu0 %v3782
      %3808 = vmatprep.subr.mxu0 0.0
      %3809 = vmatpush1.msra.mxu0 %v3783
      %3810 = vmatprep.subr.mxu0 0.0
      %3811 = vmatpush1.msra.mxu0 %v3784
      %3812 = vmatprep.subr.mxu0 0.0
      %3813 = vmatpush1.msra.mxu0 %v3785
      %3814 = vmatprep.subr.mxu0 0.0
      %3815 = vmatpush1.msra.mxu0 %v3786
      %3816 = vmatprep.subr.mxu0 0.0
      %3817 = vmatpush1.msra.mxu0 %v3787
      %3818 = vmatprep.subr.mxu0 0.0
      %3819 = vmatpush1.msra.mxu0 %v3788
      %3820 = vmatprep.subr.mxu0 0.0
      %3821 = vmatpush1.msra.mxu0 %v3789
      %3822 = vmatprep.subr.mxu0 0.0
      %3823 = vmatpush1.msra.mxu0 0.0
      %3824 = vmatprep.subr.mxu0 0.0
      %3825 = vmatpush1.msra.mxu0 0.0
      %3826 = vmatprep.subr.mxu0 0.0
      %3827 = vmatpush1.msra.mxu0 0.0
      %3828 = vmatprep.subr.mxu0 0.0
      %3829 = vmatpush1.msra.mxu0 0.0
      %3830 = vmatprep.subr.mxu0 0.0
      %3831 = vmatpush1.msra.mxu0 0.0
      %3832 = vmatprep.subr.mxu0 0.0
      %3833 = vmatpush1.msra.mxu0 0.0
      %3834 = vmatprep.subr.mxu0 0.0
      %3835 = vmatpush1.msra.mxu0 0.0
      %3836 = vmatprep.subr.mxu0 0.0
      %3837 = vmatpush1.msra.mxu0 0.0
      %3838 = vmatprep.subr.mxu0 0.0
      %3839 = vmatpush1.msra.mxu0 0.0
      %3840 = vmatprep.subr.mxu0 0.0
      %3841 = vmatpush1.msra.mxu0 0.0
      %3842 = vmatprep.subr.mxu0 0.0
      %3843 = vmatpush1.msra.mxu0 0.0
      %3844 = vmatprep.subr.mxu0 0.0
      %3845 = vmatpush1.msra.mxu0 0.0
      %3846 = vmatprep.subr.mxu0 0.0
      %3847 = vmatpush1.msra.mxu0 0.0
      %3848 = vmatprep.subr.mxu0 0.0
      %3849 = vmatpush1.msra.mxu0 0.0
      %3850 = vmatprep.subr.mxu0 0.0
      %3851 = vmatpush1.msra.mxu0 0.0
      %3852 = vmatprep.subr.mxu0 0.0
      %3853 = vmatpush1.msra.mxu0 0.0
      %3854 = vmatprep.mubr.f32.mxu0 0.0
      %3855 = vmatmul.mubr.f32.gmra.mrb[0].mxu0 %v3765
      %v3856 = vpop.f32.mrb[0].mxu0
      %v3857 = vadd.f32 0.0, %v3856
      %v3858 = vpop.f32.mrb[0].mxu0
      %3859 = vmatprep.mubr.f32.mxu0 0.0
      %3860 = vmatmul.mubr.f32.gmra.mrb[0].mxu0 %v3766
      %v3861 = vpop.f32.mrb[0].mxu0
      %v3862 = vadd.f32 0.0, %v3861
      %v3863 = vpop.f32.mrb[0].mxu0
      %3864 = vmatprep.mubr.f32.mxu0 0.0
      %3865 = vmatmul.mubr.f32.gmra.mrb[0].mxu0 %v3767
      %v3866 = vpop.f32.mrb[0].mxu0
      %v3867 = vadd.f32 0.0, %v3866
      %v3868 = vpop.f32.mrb[0].mxu0
      %3869 = vmatprep.mubr.f32.mxu0 0.0
      %3870 = vmatmul.mubr.f32.gmra.mrb[0].mxu0 %v3768
      %v3871 = vpop.f32.mrb[0].mxu0
      %v3872 = vadd.f32 0.0, %v3871
      %v3873 = vpop.f32.mrb[0].mxu0
      %3874 = vmatprep.mubr.f32.mxu0 0.0
      %3875 = vmatmul.mubr.f32.gmra.mrb[0].mxu0 %v3769
      %v3876 = vpop.f32.mrb[0].mxu0
      %v3877 = vadd.f32 0.0, %v3876
      %v3878 = vpop.f32.mrb[0].mxu0
      %3879 = vmatprep.mubr.f32.mxu0 0.0
      %3880 = vmatmul.mubr.f32.gmra.mrb[0].mxu0 %v3770
      %v3881 = vpop.f32.mrb[0].mxu0
      %v3882 = vadd.f32 0.0, %v3881
      %v3883 = vpop.f32.mrb[0].mxu0
      %3884 = vmatprep.mubr.f32.mxu0 0.0
      %3885 = vmatmul.mubr.f32.gmra.mrb[0].mxu0 %v3771
      %v3886 = vpop.f32.mrb[0].mxu0
      %v3887 = vadd.f32 0.0, %v3886
      %v3888 = vpop.f32.mrb[0].mxu0
      %3889 = vmatprep.mubr.f32.mxu0 0.0
      %3890 = vmatmul.mubr.f32.gmra.mrb[0].mxu0 %v3772
      %v3891 = vpop.f32.mrb[0].mxu0
      %v3892 = vadd.f32 0.0, %v3891
      %v3893 = vpop.f32.mrb[0].mxu0
      %3894 = vdwg.mxu0
      %v3895 = vadd.f32 %v3757, %v3857
      %v3896 = vadd.f32 %v3758, %v3862
      %v3897 = vadd.f32 %v3759, %v3867
      %v3898 = vadd.f32 %v3760, %v3872
      %v3899 = vadd.f32 %v3761, %v3877
      %v3900 = vadd.f32 %v3762, %v3882
      %v3901 = vadd.f32 %v3763, %v3887
      %v3902 = vadd.f32 %v3764, %v3892
      %v3903 = vld [vmem:[%s2452 + $0x1] sm:$0xff]
      %v3904 = vld [vmem:[%s2452 + $0x11] sm:$0xff]
      %v3905 = vld [vmem:[%s2452 + $0x21] sm:$0xff]
      %v3906 = vld [vmem:[%s2452 + $0x31] sm:$0xff]
      %v3907 = vld [vmem:[%s2452 + $0x41] sm:$0xff]
      %v3908 = vld [vmem:[%s2452 + $0x51] sm:$0xff]
      %v3909 = vld [vmem:[%s2452 + $0x61] sm:$0xff]
      %v3910 = vld [vmem:[%s2452 + $0x71] sm:$0xff]
      %s3911 = scalar_lea.vmem %s5, 896
      %v3912 = vld [vmem:[%s3911] sm:$0xff]
      %v3913 = vld [vmem:[%s3911 + $0x8] sm:$0xff]
      %v3914 = vld [vmem:[%s3911 + $0x10] sm:$0xff]
      %v3915 = vld [vmem:[%s3911 + $0x18] sm:$0xff]
      %v3916 = vld [vmem:[%s3911 + $0x20] sm:$0xff]
      %v3917 = vld [vmem:[%s3911 + $0x28] sm:$0xff]
      %v3918 = vld [vmem:[%s3911 + $0x30] sm:$0xff]
      %v3919 = vld [vmem:[%s3911 + $0x38] sm:$0xff]
      %v3920 = vld [vmem:[%s3911 + $0x40] sm:$0xff]
      %v3921 = vld [vmem:[%s3911 + $0x48] sm:$0xff]
      %v3922 = vld [vmem:[%s3911 + $0x50] sm:$0xff]
      %v3923 = vld [vmem:[%s3911 + $0x58] sm:$0xff]
      %v3924 = vld [vmem:[%s3911 + $0x60] sm:$0xff]
      %v3925 = vld [vmem:[%s3911 + $0x68] sm:$0xff]
      %v3926 = vld [vmem:[%s3911 + $0x70] sm:$0xff]
      %v3927 = vld [vmem:[%s3911 + $0x78] sm:$0xff]
      %3928 = vmatprep.subr.mxu0 0.0
      %3929 = vmatpush1.msra.mxu0 %v3912
      %3930 = vmatprep.subr.mxu0 0.0
      %3931 = vmatpush1.msra.mxu0 %v3913
      %3932 = vmatprep.subr.mxu0 0.0
      %3933 = vmatpush1.msra.mxu0 %v3914
      %3934 = vmatprep.subr.mxu0 0.0
      %3935 = vmatpush1.msra.mxu0 %v3915
      %3936 = vmatprep.subr.mxu0 0.0
      %3937 = vmatpush1.msra.mxu0 %v3916
      %3938 = vmatprep.subr.mxu0 0.0
      %3939 = vmatpush1.msra.mxu0 %v3917
      %3940 = vmatprep.subr.mxu0 0.0
      %3941 = vmatpush1.msra.mxu0 %v3918
      %3942 = vmatprep.subr.mxu0 0.0
      %3943 = vmatpush1.msra.mxu0 %v3919
      %3944 = vmatprep.subr.mxu0 0.0
      %3945 = vmatpush1.msra.mxu0 %v3920
      %3946 = vmatprep.subr.mxu0 0.0
      %3947 = vmatpush1.msra.mxu0 %v3921
      %3948 = vmatprep.subr.mxu0 0.0
      %3949 = vmatpush1.msra.mxu0 %v3922
      %3950 = vmatprep.subr.mxu0 0.0
      %3951 = vmatpush1.msra.mxu0 %v3923
      %3952 = vmatprep.subr.mxu0 0.0
      %3953 = vmatpush1.msra.mxu0 %v3924
      %3954 = vmatprep.subr.mxu0 0.0
      %3955 = vmatpush1.msra.mxu0 %v3925
      %3956 = vmatprep.subr.mxu0 0.0
      %3957 = vmatpush1.msra.mxu0 %v3926
      %3958 = vmatprep.subr.mxu0 0.0
      %3959 = vmatpush1.msra.mxu0 %v3927
      %3960 = vmatprep.subr.mxu0 0.0
      %3961 = vmatpush1.msra.mxu0 0.0
      %3962 = vmatprep.subr.mxu0 0.0
      %3963 = vmatpush1.msra.mxu0 0.0
      %3964 = vmatprep.subr.mxu0 0.0
      %3965 = vmatpush1.msra.mxu0 0.0
      %3966 = vmatprep.subr.mxu0 0.0
      %3967 = vmatpush1.msra.mxu0 0.0
      %3968 = vmatprep.subr.mxu0 0.0
      %3969 = vmatpush1.msra.mxu0 0.0
      %3970 = vmatprep.subr.mxu0 0.0
      %3971 = vmatpush1.msra.mxu0 0.0
      %3972 = vmatprep.subr.mxu0 0.0
      %3973 = vmatpush1.msra.mxu0 0.0
      %3974 = vmatprep.subr.mxu0 0.0
      %3975 = vmatpush1.msra.mxu0 0.0
      %3976 = vmatprep.subr.mxu0 0.0
      %3977 = vmatpush1.msra.mxu0 0.0
      %3978 = vmatprep.subr.mxu0 0.0
      %3979 = vmatpush1.msra.mxu0 0.0
      %3980 = vmatprep.subr.mxu0 0.0
      %3981 = vmatpush1.msra.mxu0 0.0
      %3982 = vmatprep.subr.mxu0 0.0
      %3983 = vmatpush1.msra.mxu0 0.0
      %3984 = vmatprep.subr.mxu0 0.0
      %3985 = vmatpush1.msra.mxu0 0.0
      %3986 = vmatprep.subr.mxu0 0.0
      %3987 = vmatpush1.msra.mxu0 0.0
      %3988 = vmatprep.subr.mxu0 0.0
      %3989 = vmatpush1.msra.mxu0 0.0
      %3990 = vmatprep.subr.mxu0 0.0
      %3991 = vmatpush1.msra.mxu0 0.0
      %3992 = vmatprep.mubr.f32.mxu0 0.0
      %3993 = vmatmul.mubr.f32.gmra.mrb[0].mxu0 %v3903
      %v3994 = vpop.f32.mrb[0].mxu0
      %v3995 = vadd.f32 0.0, %v3994
      %v3996 = vpop.f32.mrb[0].mxu0
      %3997 = vmatprep.mubr.f32.mxu0 0.0
      %3998 = vmatmul.mubr.f32.gmra.mrb[0].mxu0 %v3904
      %v3999 = vpop.f32.mrb[0].mxu0
      %v4000 = vadd.f32 0.0, %v3999
      %v4001 = vpop.f32.mrb[0].mxu0
      %4002 = vmatprep.mubr.f32.mxu0 0.0
      %4003 = vmatmul.mubr.f32.gmra.mrb[0].mxu0 %v3905
      %v4004 = vpop.f32.mrb[0].mxu0
      %v4005 = vadd.f32 0.0, %v4004
      %v4006 = vpop.f32.mrb[0].mxu0
      %4007 = vmatprep.mubr.f32.mxu0 0.0
      %4008 = vmatmul.mubr.f32.gmra.mrb[0].mxu0 %v3906
      %v4009 = vpop.f32.mrb[0].mxu0
      %v4010 = vadd.f32 0.0, %v4009
      %v4011 = vpop.f32.mrb[0].mxu0
      %4012 = vmatprep.mubr.f32.mxu0 0.0
      %4013 = vmatmul.mubr.f32.gmra.mrb[0].mxu0 %v3907
      %v4014 = vpop.f32.mrb[0].mxu0
      %v4015 = vadd.f32 0.0, %v4014
      %v4016 = vpop.f32.mrb[0].mxu0
      %4017 = vmatprep.mubr.f32.mxu0 0.0
      %4018 = vmatmul.mubr.f32.gmra.mrb[0].mxu0 %v3908
      %v4019 = vpop.f32.mrb[0].mxu0
      %v4020 = vadd.f32 0.0, %v4019
      %v4021 = vpop.f32.mrb[0].mxu0
      %4022 = vmatprep.mubr.f32.mxu0 0.0
      %4023 = vmatmul.mubr.f32.gmra.mrb[0].mxu0 %v3909
      %v4024 = vpop.f32.mrb[0].mxu0
      %v4025 = vadd.f32 0.0, %v4024
      %v4026 = vpop.f32.mrb[0].mxu0
      %4027 = vmatprep.mubr.f32.mxu0 0.0
      %4028 = vmatmul.mubr.f32.gmra.mrb[0].mxu0 %v3910
      %v4029 = vpop.f32.mrb[0].mxu0
      %v4030 = vadd.f32 0.0, %v4029
      %v4031 = vpop.f32.mrb[0].mxu0
      %4032 = vdwg.mxu0
      %v4033 = vadd.f32 %v3895, %v3995
      %v4034 = vadd.f32 %v3896, %v4000
      %v4035 = vadd.f32 %v3897, %v4005
      %v4036 = vadd.f32 %v3898, %v4010
      %v4037 = vadd.f32 %v3899, %v4015
      %v4038 = vadd.f32 %v3900, %v4020
      %v4039 = vadd.f32 %v3901, %v4025
      %v4040 = vadd.f32 %v3902, %v4030
      %v4041 = vld [vmem:[%s2452 + $0x2] sm:$0xff]
      %v4042 = vld [vmem:[%s2452 + $0x12] sm:$0xff]
      %v4043 = vld [vmem:[%s2452 + $0x22] sm:$0xff]
      %v4044 = vld [vmem:[%s2452 + $0x32] sm:$0xff]
      %v4045 = vld [vmem:[%s2452 + $0x42] sm:$0xff]
      %v4046 = vld [vmem:[%s2452 + $0x52] sm:$0xff]
      %v4047 = vld [vmem:[%s2452 + $0x62] sm:$0xff]
      %v4048 = vld [vmem:[%s2452 + $0x72] sm:$0xff]
      %s4049 = scalar_lea.vmem %s5, 1024
      %v4050 = vld [vmem:[%s4049] sm:$0xff]
      %v4051 = vld [vmem:[%s4049 + $0x8] sm:$0xff]
      %v4052 = vld [vmem:[%s4049 + $0x10] sm:$0xff]
      %v4053 = vld [vmem:[%s4049 + $0x18] sm:$0xff]
      %v4054 = vld [vmem:[%s4049 + $0x20] sm:$0xff]
      %v4055 = vld [vmem:[%s4049 + $0x28] sm:$0xff]
      %v4056 = vld [vmem:[%s4049 + $0x30] sm:$0xff]
      %v4057 = vld [vmem:[%s4049 + $0x38] sm:$0xff]
      %v4058 = vld [vmem:[%s4049 + $0x40] sm:$0xff]
      %v4059 = vld [vmem:[%s4049 + $0x48] sm:$0xff]
      %v4060 = vld [vmem:[%s4049 + $0x50] sm:$0xff]
      %v4061 = vld [vmem:[%s4049 + $0x58] sm:$0xff]
      %v4062 = vld [vmem:[%s4049 + $0x60] sm:$0xff]
      %v4063 = vld [vmem:[%s4049 + $0x68] sm:$0xff]
      %v4064 = vld [vmem:[%s4049 + $0x70] sm:$0xff]
      %v4065 = vld [vmem:[%s4049 + $0x78] sm:$0xff]
      %4066 = vmatprep.subr.mxu0 0.0
      %4067 = vmatpush1.msra.mxu0 %v4050
      %4068 = vmatprep.subr.mxu0 0.0
      %4069 = vmatpush1.msra.mxu0 %v4051
      %4070 = vmatprep.subr.mxu0 0.0
      %4071 = vmatpush1.msra.mxu0 %v4052
      %4072 = vmatprep.subr.mxu0 0.0
      %4073 = vmatpush1.msra.mxu0 %v4053
      %4074 = vmatprep.subr.mxu0 0.0
      %4075 = vmatpush1.msra.mxu0 %v4054
      %4076 = vmatprep.subr.mxu0 0.0
      %4077 = vmatpush1.msra.mxu0 %v4055
      %4078 = vmatprep.subr.mxu0 0.0
      %4079 = vmatpush1.msra.mxu0 %v4056
      %4080 = vmatprep.subr.mxu0 0.0
      %4081 = vmatpush1.msra.mxu0 %v4057
      %4082 = vmatprep.subr.mxu0 0.0
      %4083 = vmatpush1.msra.mxu0 %v4058
      %4084 = vmatprep.subr.mxu0 0.0
      %4085 = vmatpush1.msra.mxu0 %v4059
      %4086 = vmatprep.subr.mxu0 0.0
      %4087 = vmatpush1.msra.mxu0 %v4060
      %4088 = vmatprep.subr.mxu0 0.0
      %4089 = vmatpush1.msra.mxu0 %v4061
      %4090 = vmatprep.subr.mxu0 0.0
      %4091 = vmatpush1.msra.mxu0 %v4062
      %4092 = vmatprep.subr.mxu0 0.0
      %4093 = vmatpush1.msra.mxu0 %v4063
      %4094 = vmatprep.subr.mxu0 0.0
      %4095 = vmatpush1.msra.mxu0 %v4064
      %4096 = vmatprep.subr.mxu0 0.0
      %4097 = vmatpush1.msra.mxu0 %v4065
      %4098 = vmatprep.subr.mxu0 0.0
      %4099 = vmatpush1.msra.mxu0 0.0
      %4100 = vmatprep.subr.mxu0 0.0
      %4101 = vmatpush1.msra.mxu0 0.0
      %4102 = vmatprep.subr.mxu0 0.0
      %4103 = vmatpush1.msra.mxu0 0.0
      %4104 = vmatprep.subr.mxu0 0.0
      %4105 = vmatpush1.msra.mxu0 0.0
      %4106 = vmatprep.subr.mxu0 0.0
      %4107 = vmatpush1.msra.mxu0 0.0
      %4108 = vmatprep.subr.mxu0 0.0
      %4109 = vmatpush1.msra.mxu0 0.0
      %4110 = vmatprep.subr.mxu0 0.0
      %4111 = vmatpush1.msra.mxu0 0.0
      %4112 = vmatprep.subr.mxu0 0.0
      %4113 = vmatpush1.msra.mxu0 0.0
      %4114 = vmatprep.subr.mxu0 0.0
      %4115 = vmatpush1.msra.mxu0 0.0
      %4116 = vmatprep.subr.mxu0 0.0
      %4117 = vmatpush1.msra.mxu0 0.0
      %4118 = vmatprep.subr.mxu0 0.0
      %4119 = vmatpush1.msra.mxu0 0.0
      %4120 = vmatprep.subr.mxu0 0.0
      %4121 = vmatpush1.msra.mxu0 0.0
      %4122 = vmatprep.subr.mxu0 0.0
      %4123 = vmatpush1.msra.mxu0 0.0
      %4124 = vmatprep.subr.mxu0 0.0
      %4125 = vmatpush1.msra.mxu0 0.0
      %4126 = vmatprep.subr.mxu0 0.0
      %4127 = vmatpush1.msra.mxu0 0.0
      %4128 = vmatprep.subr.mxu0 0.0
      %4129 = vmatpush1.msra.mxu0 0.0
      %4130 = vmatprep.mubr.f32.mxu0 0.0
      %4131 = vmatmul.mubr.f32.gmra.mrb[0].mxu0 %v4041
      %v4132 = vpop.f32.mrb[0].mxu0
      %v4133 = vadd.f32 0.0, %v4132
      %v4134 = vpop.f32.mrb[0].mxu0
      %4135 = vmatprep.mubr.f32.mxu0 0.0
      %4136 = vmatmul.mubr.f32.gmra.mrb[0].mxu0 %v4042
      %v4137 = vpop.f32.mrb[0].mxu0
      %v4138 = vadd.f32 0.0, %v4137
      %v4139 = vpop.f32.mrb[0].mxu0
      %4140 = vmatprep.mubr.f32.mxu0 0.0
      %4141 = vmatmul.mubr.f32.gmra.mrb[0].mxu0 %v4043
      %v4142 = vpop.f32.mrb[0].mxu0
      %v4143 = vadd.f32 0.0, %v4142
      %v4144 = vpop.f32.mrb[0].mxu0
      %4145 = vmatprep.mubr.f32.mxu0 0.0
      %4146 = vmatmul.mubr.f32.gmra.mrb[0].mxu0 %v4044
      %v4147 = vpop.f32.mrb[0].mxu0
      %v4148 = vadd.f32 0.0, %v4147
      %v4149 = vpop.f32.mrb[0].mxu0
      %4150 = vmatprep.mubr.f32.mxu0 0.0
      %4151 = vmatmul.mubr.f32.gmra.mrb[0].mxu0 %v4045
      %v4152 = vpop.f32.mrb[0].mxu0
      %v4153 = vadd.f32 0.0, %v4152
      %v4154 = vpop.f32.mrb[0].mxu0
      %4155 = vmatprep.mubr.f32.mxu0 0.0
      %4156 = vmatmul.mubr.f32.gmra.mrb[0].mxu0 %v4046
      %v4157 = vpop.f32.mrb[0].mxu0
      %v4158 = vadd.f32 0.0, %v4157
      %v4159 = vpop.f32.mrb[0].mxu0
      %4160 = vmatprep.mubr.f32.mxu0 0.0
      %4161 = vmatmul.mubr.f32.gmra.mrb[0].mxu0 %v4047
      %v4162 = vpop.f32.mrb[0].mxu0
      %v4163 = vadd.f32 0.0, %v4162
      %v4164 = vpop.f32.mrb[0].mxu0
      %4165 = vmatprep.mubr.f32.mxu0 0.0
      %4166 = vmatmul.mubr.f32.gmra.mrb[0].mxu0 %v4048
      %v4167 = vpop.f32.mrb[0].mxu0
      %v4168 = vadd.f32 0.0, %v4167
      %v4169 = vpop.f32.mrb[0].mxu0
      %4170 = vdwg.mxu0
      %v4171 = vadd.f32 %v4033, %v4133
      %v4172 = vadd.f32 %v4034, %v4138
      %v4173 = vadd.f32 %v4035, %v4143
      %v4174 = vadd.f32 %v4036, %v4148
      %v4175 = vadd.f32 %v4037, %v4153
      %v4176 = vadd.f32 %v4038, %v4158
      %v4177 = vadd.f32 %v4039, %v4163
      %v4178 = vadd.f32 %v4040, %v4168
      %v4179 = vadd.f32 %v2882, %v4171
      %v4180 = vadd.f32 %v2883, %v4172
      %v4181 = vadd.f32 %v2884, %v4173
      %v4182 = vadd.f32 %v2885, %v4174
      %v4183 = vadd.f32 %v2886, %v4175
      %v4184 = vadd.f32 %v2887, %v4176
      %v4185 = vadd.f32 %v2888, %v4177
      %v4186 = vadd.f32 %v2889, %v4178
      %v4187 = vld [vmem:[%s6] sm:$0x1]
      %v4189 = vlaneseq
      %v4190 = vshrl.u32 %v4189, 7
      %v4191 = vsub.s32 0, %v4190
      %v4192 = vrot.slane %v4187, %v4191
      %v4194 = vadd.f32 %v4179, %v4192
      %v4195 = vadd.f32 %v4180, %v4192
      %v4196 = vadd.f32 %v4181, %v4192
      %v4197 = vadd.f32 %v4182, %v4192
      %v4198 = vadd.f32 %v4183, %v4192
      %v4199 = vadd.f32 %v4184, %v4192
      %v4200 = vadd.f32 %v4185, %v4192
      %v4201 = vadd.f32 %v4186, %v4192
      %4202 = vst [vmem:[%s318] sm:$0xff] %v4194
      %4203 = vst [vmem:[%s318 + $0x8] sm:$0xff] %v4195
      %4204 = vst [vmem:[%s318 + $0x10] sm:$0xff] %v4196
      %4205 = vst [vmem:[%s318 + $0x18] sm:$0xff] %v4197
      %4206 = vst [vmem:[%s318 + $0x20] sm:$0xff] %v4198
      %4207 = vst [vmem:[%s318 + $0x28] sm:$0xff] %v4199
      %4208 = vst [vmem:[%s318 + $0x30] sm:$0xff] %v4200
      %4209 = vst [vmem:[%s318 + $0x38] sm:$0xff] %v4201
      %p4210 = scmp.lt.s32.totalorder %s20, 1
      %s4211 = scalar_select %p4210, %s20, 1
      %s4212 = smul.addr %s4211, 8
      %s4213 = smul.addr %s4212, 8
      %s4214 = scalar_lea.vmem %s7, %s4213
      %p4215 = scmp.lt.s32.totalorder %s20, 1
      %s4216 = scalar_select %p4215, %s20, 1
      %s4217 = smul.addr %s4216, 8
      %s4218 = smul.addr %s4217, 8
      %s4219 = scalar_lea.vmem %s8, %s4218
      // Predicated region
      $region49: #{down_block_forward.1} parent=47 // pred_check
        %p4220 = pneg %p190
      $region50: #{down_block_forward.1} parent=47 // pred_check_branch
        %4222 = sbr.rel (%p4220) target = $region52
      $region51: #{down_block_forward.1} parent=47 // pred_region
        _
      $region52: #{down_block_forward.1} parent=47 // pred_fallthru
        _
      // Predicated region
      $region53: #{down_block_forward.1} parent=47 // pred_check
        %p4223 = pneg %p216
      $region54: #{down_block_forward.1} parent=47 // pred_check_branch
        %4225 = sbr.rel (%p4223) target = $region56
      $region55: #{down_block_forward.1} parent=47 // pred_region
        _
      $region56: #{down_block_forward.1} parent=47 // pred_fallthru
        _
    $region48: #{down_block_forward.1} parent=5 // pred_fallthru
      _
    %p4226 = scmp.le.s32.totalorder 2, %s15
    // Predicated region
    $region57: #{down_block_forward.1} parent=5 // pred_check
      %p4227 = pneg %p4226
    $region58: #{down_block_forward.1} parent=5 // pred_check_branch
      %4229 = sbr.rel (%p4227) target = $region60
    $region59: #{down_block_forward.1} parent=5 // pred_region
      %s4230 = ssub.s32 %s15, 2
      // Predicated region
      $region61: #{down_block_forward.1} parent=59 // pred_check
        %p4231 = pneg %p196
      $region62: #{down_block_forward.1} parent=59 // pred_check_branch
        %4233 = sbr.rel (%p4231) target = $region64
      $region63: #{down_block_forward.1} parent=59 // pred_region
        %p4234 = scmp.lt.s32.totalorder %s21, 1
        %s4235 = scalar_select %p4234, %s21, 1
        %s4236 = smul.addr %s4235, 8
        %s4237 = smul.addr %s4236, 8
        %s4238 = scalar_lea.vmem %s7, %s4237
      $region64: #{down_block_forward.1} parent=59 // pred_fallthru
        _
      // Predicated region
      $region65: #{down_block_forward.1} parent=59 // pred_check
        %p4239 = pneg %p222
      $region66: #{down_block_forward.1} parent=59 // pred_check_branch
        %4241 = sbr.rel (%p4239) target = $region68
      $region67: #{down_block_forward.1} parent=59 // pred_region
        %p4242 = scmp.lt.s32.totalorder %s21, 1
        %s4243 = scalar_select %p4242, %s21, 1
        %s4244 = smul.addr %s4243, 8
        %s4245 = smul.addr %s4244, 8
        %s4246 = scalar_lea.vmem %s8, %s4245
      $region68: #{down_block_forward.1} parent=59 // pred_fallthru
        _
    $region60: #{down_block_forward.1} parent=5 // pred_fallthru
      _
  $region6: #{down_block_forward.1} parent=0 // loop_footer
    %s19 = sadd.s32 1, %s15
  $region7: #{down_block_forward.1} parent=0 // loop_footer_branch
    %14 = sbr.rel target = $region3
  $region8: #{down_block_forward.1} parent=0 // loop_exit
    _

</llo_original>
